<compile_context>
chip_gen: v7x
topology: tpu7x:2x2x1
jax: 0.10.0
libtpu: 0.0.40
codegen_flags: <defaults>
</compile_context>

<pallas_src>
import math
from functools import partial

import jax
import jax.numpy as jnp
from jax import lax
from jax.experimental import pallas as pl
from jax.experimental.pallas import tpu as pltpu

LN_EPS = 1e-5  # PyTorch nn.LayerNorm default


def _layernorm(v, gamma, beta):
    mu = jnp.mean(v, axis=-1, keepdims=True)
    var = jnp.mean((v - mu) ** 2, axis=-1, keepdims=True)
    return (v - mu) * lax.rsqrt(var + LN_EPS) * gamma + beta


def _gelu_exact(v):
    # nn.GELU default: exact erf-based GELU
    return 0.5 * v * (1.0 + lax.erf(v / math.sqrt(2.0)))


def block_kernel(x_ref, emb_ref,
                 g1_ref, be1_ref,
                 wqkv_ref,          # (C, 3C)  bf16  [Wq | Wk | Wv]
                 wo_ref, bo_ref,    # (C, C) bf16, (1, C) f32
                 g2_ref, be2_ref,
                 w1_ref, bm1_ref,   # (C, H) bf16, (1, H) f32
                 w2_ref, bm2_ref,   # (H, C) bf16, (1, C) f32
                 out_ref, *, num_heads):
    BT, N, C = x_ref.shape
    R = BT * N
    hd = C // num_heads
    scale = hd ** (-0.5)

    # ---- load & flatten rows (leading-dim reshape only; lane dim unchanged) ----
    x = x_ref[...].astype(jnp.float32).reshape(R, C)      # (R, C)
    emb = emb_ref[...].astype(jnp.float32).reshape(R, C)  # (R, C)

    # ---- norm1 + positional/type embedding ----
    xn1 = _layernorm(x, g1_ref[...], be1_ref[...])
    xe = (xn1 + emb).astype(jnp.bfloat16)                 # single bf16 cast

    # ---- fused QKV projection: one big MXU op, f32 accumulation ----
    qkv = jnp.dot(xe, wqkv_ref[...],
                  preferred_element_type=jnp.float32)     # (R, 3C) f32
    qkv = qkv.astype(jnp.bfloat16).reshape(BT, N, 3 * C)  # one cast, leading split

    # ---- multi-head self attention, batched over the batch tile per head ----
    # Head contexts are lane-concatenated (PyTorch head order) so the output
    # projection is a single K=C matmul instead of nh K=hd accumulations.
    # TODO(synk): for production head counts (nh=12, hd=64) convert this static
    # loop into a lax.fori_loop over 128-lane-aligned head *pairs* (and batch
    # the pair einsums) so live ranges stay bounded and slab extraction is a
    # zero-cost view.
    ctx_heads = []
    for h in range(num_heads):                            # static unroll, small nh
        q_h = qkv[:, :, h * hd:(h + 1) * hd]                          # (BT,N,hd)
        k_h = qkv[:, :, C + h * hd:C + (h + 1) * hd]
        v_h = qkv[:, :, 2 * C + h * hd:2 * C + (h + 1) * hd]

        logits = jnp.einsum('bqd,bkd->bqk', q_h, k_h,
                            preferred_element_type=jnp.float32) * scale  # (BT,N,N)
        logits = logits - jnp.max(logits, axis=-1, keepdims=True)
        p = jnp.exp(logits)
        denom = jnp.sum(p, axis=-1, keepdims=True)
        p = p * pl.reciprocal(denom, approx=True)          # EUP, not VALU divide

        ctx_h = jnp.einsum('bqk,bkd->bqd', p.astype(jnp.bfloat16), v_h,
                           preferred_element_type=jnp.float32)           # (BT,N,hd)
        ctx_heads.append(ctx_h.astype(jnp.bfloat16))

    ctx = jnp.concatenate(ctx_heads, axis=-1).reshape(R, C)              # (R, C) bf16

    # ---- single deep output projection (K = C) ----
    o = jnp.dot(ctx, wo_ref[...], preferred_element_type=jnp.float32) + bo_ref[...]
    x1 = x + o                                            # first residual (f32, live)

    # ---- MLP on norm2(x1) ----
    xn2 = _layernorm(x1, g2_ref[...], be2_ref[...]).astype(jnp.bfloat16)
    hmid = jnp.dot(xn2, w1_ref[...],
                   preferred_element_type=jnp.float32) + bm1_ref[...]
    hmid = _gelu_exact(hmid).astype(jnp.bfloat16)
    m = jnp.dot(hmid, w2_ref[...],
                preferred_element_type=jnp.float32) + bm2_ref[...]

    # single fused store of the final result
    out_ref[...] = (x1 + m).reshape(BT, N, C).astype(out_ref.dtype)


def _vmem_capacity_bytes():
    """Physical per-core VMEM; falls back to the smallest generation (v7x)."""
    try:
        return int(pltpu.get_tpu_info().vmem_capacity_bytes)
    except Exception:
        return 64 * 1024 * 1024


def _plan_tiling(B, N, C, H):
    """Pick (batch_tile, vmem_limit_bytes), generation-aware.

    Footprint includes the single-buffered bf16 weight blocks, the 2x
    double-buffered x/emb/out pipeline buffers, and the live f32 activations
    inside the kernel.  BT is additionally capped to B//2 (when B >= 2) so the
    grid has >= 2 steps and both v7x TensorCores can be used.
    """
    cap = _vmem_capacity_bytes()
    vmem_limit = min(int(cap * 3) // 4, 112 * 1024 * 1024)  # headroom for compiler scratch

    weight_bytes = 2 * (3 * C * C + C * C + C * H + H * C) + 4 * (6 * C + 2 * H)

    def footprint(bt):
        rows = bt * N
        io = 3 * 2 * bt * N * C * 4              # x, emb, out (f32), double-buffered
        act = 4 * rows * (3 * C + 6 * C + 2 * H)  # qkv + residuals/ctx/mlp f32 live values
        attn = 4 * bt * N * N * 3                 # logits + probs (+ slack), one head at a time
        return weight_bytes + io + act + attn

    bt = B if B < 2 else max(1, B // 2)           # >= 2 grid steps for v7x megacore
    while bt > 1 and (B % bt != 0 or footprint(bt) > vmem_limit):
        bt -= 1
    return bt, vmem_limit


def block_forward(x, pos_and_type_embed, params, *, num_heads, batch_tile=None):
    B, N, C = x.shape
    H = params["w1"].shape[1]

    # --- wrapper-side weight restructuring (one-time, outside the kernel) ---
    wqkv = jnp.concatenate(
        [params["wq"], params["wk"], params["wv"]], axis=1).astype(jnp.bfloat16)
    wo = params["wo"].astype(jnp.bfloat16)
    w1 = params["w1"].astype(jnp.bfloat16)
    w2 = params["w2"].astype(jnp.bfloat16)

    bt_auto, vmem_limit = _plan_tiling(B, N, C, H)
    BT = batch_tile if batch_tile is not None else bt_auto
    assert B % BT == 0, f"batch tile {BT} must divide batch {B}"
    grid = (B // BT,)

    # TODO(synk): for production ViT shapes pad C to a multiple of 128 lanes and
    # N to a multiple of 8/128 (masking padded keys with -inf once in the
    # wrapper) so stores are lane-dense and attention tiles are unmasked.

    kern = partial(block_kernel, num_heads=num_heads)
    out_shape = jax.ShapeDtypeStruct((B, N, C), x.dtype)
    args = (x, pos_and_type_embed,
            params["g1"], params["be1"],
            wqkv, wo, params["bo"],
            params["g2"], params["be2"],
            w1, params["bm1"],
            w2, params["bm2"])

    def build(single_buffer_weights):
        def rowspec():
            return pl.BlockSpec((BT, N, C), lambda b: (b, 0, 0))

        def const(shape):
            nd = len(shape)
            idx = lambda b, _n=nd: (0,) * _n
            if single_buffer_weights:
                # constant-index weights: no re-DMA, 1 buffer halves weight VMEM
                return pl.BlockSpec(shape, idx, pipeline_mode=pl.Buffered(1))
            return pl.BlockSpec(shape, idx)

        in_specs = [
            rowspec(),                      # x
            rowspec(),                      # pos/type embedding
            const((1, C)), const((1, C)),   # norm1 gamma/beta
            const((C, 3 * C)),              # fused Wqkv
            const((C, C)),                  # out-proj weight (single K=C matmul)
            const((1, C)),                  # out-proj bias
            const((1, C)), const((1, C)),   # norm2 gamma/beta
            const((C, H)), const((1, H)),   # mlp fc1 W, b
            const((H, C)), const((1, C)),   # mlp fc2 W, b
        ]
        return pl.pallas_call(
            kern,
            grid=grid,
            in_specs=in_specs,
            out_specs=pl.BlockSpec((BT, N, C), lambda b: (b, 0, 0)),
            out_shape=out_shape,
            compiler_params=pltpu.CompilerParams(
                dimension_semantics=("parallel",),
                vmem_limit_bytes=vmem_limit),
        )

    try:
        # Preferred path: single-buffered constant weights.
        return jax.block_until_ready(build(True)(*args))
    except Exception:
        # Robust fallback if pipeline_mode=pl.Buffered(1) is unsupported.
        return build(False)(*args)


def block_reference(x, emb, params, *, num_heads):
    """Pure-JAX f32 reference mirroring the PyTorch forward (eval mode)."""
    B, N, C = x.shape
    hd = C // num_heads
    xn1 = _layernorm(x, params["g1"], params["be1"])
    xe = xn1 + emb
    q = xe @ params["wq"]
    k = xe @ params["wk"]
    v = xe @ params["wv"]
    qh = q.reshape(B, N, num_heads, hd).transpose(0, 2, 1, 3)
    kh = k.reshape(B, N, num_heads, hd).transpose(0, 2, 1, 3)
    vh = v.reshape(B, N, num_heads, hd).transpose(0, 2, 1, 3)
    attn = jnp.einsum("bhqd,bhkd->bhqk", qh, kh) * (hd ** -0.5)
    attn = jax.nn.softmax(attn, axis=-1)
    o = jnp.einsum("bhqk,bhkd->bhqd", attn, vh).transpose(0, 2, 1, 3).reshape(B, N, C)
    o = o @ params["wo"] + params["bo"]
    x1 = x + o
    xn2 = _layernorm(x1, params["g2"], params["be2"])
    m = jax.nn.gelu(xn2 @ params["w1"] + params["bm1"], approximate=False)
    m = m @ params["w2"] + params["bm2"]
    return x1 + m


def make_params(key, dim, hidden_dim):
    ks = jax.random.split(key, 8)
    s = 0.05
    return {
        # LayerNorm params (PyTorch init: ones / zeros)
        "g1": jnp.ones((1, dim), jnp.float32),
        "be1": jnp.zeros((1, dim), jnp.float32),
        "g2": jnp.ones((1, dim), jnp.float32),
        "be2": jnp.zeros((1, dim), jnp.float32),
        # attention projections (qkv_bias=False -> no q/k/v bias)
        "wq": s * jax.random.normal(ks[0], (dim, dim), jnp.float32),
        "wk": s * jax.random.normal(ks[1], (dim, dim), jnp.float32),
        "wv": s * jax.random.normal(ks[2], (dim, dim), jnp.float32),
        "wo": s * jax.random.normal(ks[3], (dim, dim), jnp.float32),
        "bo": s * jax.random.normal(ks[4], (1, dim), jnp.float32),
        # MLP (mlp_ratio=1.0 -> hidden_dim == dim)
        "w1": s * jax.random.normal(ks[5], (dim, hidden_dim), jnp.float32),
        "bm1": s * jax.random.normal(ks[6], (1, hidden_dim), jnp.float32),
        "w2": s * jax.random.normal(ks[7], (hidden_dim, dim), jnp.float32),
        "bm2": jnp.zeros((1, dim), jnp.float32),
    }


if __name__ == "__main__":
    B, N, C = 2, 8, 32
    num_heads = 4
    mlp_ratio = 1.0
    hidden = int(C * mlp_ratio)

    key = jax.random.PRNGKey(0)
    kx, kemb, kp = jax.random.split(key, 3)
    x = jax.random.normal(kx, (B, N, C), jnp.float32)
    pos_and_type_embed = 0.1 * jax.random.normal(kemb, (B, N, C), jnp.float32)
    params = make_params(kp, C, hidden)

    out = block_forward(x, pos_and_type_embed, params, num_heads=num_heads)
    out = jax.block_until_ready(out)

    ref = block_reference(x, pos_and_type_embed, params, num_heads=num_heads)
    assert out.shape == (B, N, C)
    # bf16 MXU operands + approx reciprocal in softmax => looser tolerance than f32
    err = float(jnp.max(jnp.abs(out - ref)))
    assert err < 2e-2, f"max abs err {err}"

    print("KERNEL_OK")
</pallas_src>

<mosaic_0001>
module attributes {stable_mosaic.version = 11 : i64} {
  func.func @block_kernel(%arg0: i32, %arg1: memref<1x8x32xf32, #tpu.memory_space<vmem>>, %arg2: memref<1x8x32xf32, #tpu.memory_space<vmem>>, %arg3: memref<1x32xf32, #tpu.memory_space<vmem>>, %arg4: memref<1x32xf32, #tpu.memory_space<vmem>>, %arg5: memref<32x96xbf16, #tpu.memory_space<vmem>>, %arg6: memref<32x32xbf16, #tpu.memory_space<vmem>>, %arg7: memref<1x32xf32, #tpu.memory_space<vmem>>, %arg8: memref<1x32xf32, #tpu.memory_space<vmem>>, %arg9: memref<1x32xf32, #tpu.memory_space<vmem>>, %arg10: memref<32x32xbf16, #tpu.memory_space<vmem>>, %arg11: memref<1x32xf32, #tpu.memory_space<vmem>>, %arg12: memref<32x32xbf16, #tpu.memory_space<vmem>>, %arg13: memref<1x32xf32, #tpu.memory_space<vmem>>, %arg14: memref<1x8x32xf32, #tpu.memory_space<vmem>>) attributes {dimension_semantics = [#tpu.dimension_semantics<parallel>], iteration_bounds = array<i64: 2>, scalar_prefetch = 0 : i64, scratch_operands = 0 : i64, tpu.core_type = #tpu.core_type<tc>, window_params = [{transform_indices = @transform_0, window_bounds = array<i64: 1, 8, 32>}, {transform_indices = @transform_1, window_bounds = array<i64: 1, 8, 32>}, {pipeline_mode = #tpu.pipeline_mode<synchronous>, transform_indices = @transform_2, window_bounds = array<i64: 1, 32>}, {pipeline_mode = #tpu.pipeline_mode<synchronous>, transform_indices = @transform_3, window_bounds = array<i64: 1, 32>}, {pipeline_mode = #tpu.pipeline_mode<synchronous>, transform_indices = @transform_4, window_bounds = array<i64: 32, 96>}, {pipeline_mode = #tpu.pipeline_mode<synchronous>, transform_indices = @transform_5, window_bounds = array<i64: 32, 32>}, {pipeline_mode = #tpu.pipeline_mode<synchronous>, transform_indices = @transform_6, window_bounds = array<i64: 1, 32>}, {pipeline_mode = #tpu.pipeline_mode<synchronous>, transform_indices = @transform_7, window_bounds = array<i64: 1, 32>}, {pipeline_mode = #tpu.pipeline_mode<synchronous>, transform_indices = @transform_8, window_bounds = array<i64: 1, 32>}, {pipeline_mode = #tpu.pipeline_mode<synchronous>, transform_indices = @transform_9, window_bounds = array<i64: 32, 32>}, {pipeline_mode = #tpu.pipeline_mode<synchronous>, transform_indices = @transform_10, window_bounds = array<i64: 1, 32>}, {pipeline_mode = #tpu.pipeline_mode<synchronous>, transform_indices = @transform_11, window_bounds = array<i64: 32, 32>}, {pipeline_mode = #tpu.pipeline_mode<synchronous>, transform_indices = @transform_12, window_bounds = array<i64: 1, 32>}, {transform_indices = @transform_13, window_bounds = array<i64: 1, 8, 32>}]} {
    %c0 = arith.constant 0 : index
    %c0_0 = arith.constant 0 : index
    %c0_1 = arith.constant 0 : index
    %0 = vector.load %arg1[%c0, %c0_0, %c0_1] : memref<1x8x32xf32, #tpu.memory_space<vmem>>, vector<1x8x32xf32>
    %1 = vector.shape_cast %0 : vector<1x8x32xf32> to vector<8x32xf32>
    %c0_2 = arith.constant 0 : index
    %c0_3 = arith.constant 0 : index
    %c0_4 = arith.constant 0 : index
    %2 = vector.load %arg2[%c0_2, %c0_3, %c0_4] : memref<1x8x32xf32, #tpu.memory_space<vmem>>, vector<1x8x32xf32>
    %3 = vector.shape_cast %2 : vector<1x8x32xf32> to vector<8x32xf32>
    %c0_5 = arith.constant 0 : index
    %c0_6 = arith.constant 0 : index
    %4 = vector.load %arg3[%c0_5, %c0_6] : memref<1x32xf32, #tpu.memory_space<vmem>>, vector<1x32xf32>
    %c0_7 = arith.constant 0 : index
    %c0_8 = arith.constant 0 : index
    %5 = vector.load %arg4[%c0_7, %c0_8] : memref<1x32xf32, #tpu.memory_space<vmem>>, vector<1x32xf32>
    %cst = arith.constant dense<0.000000e+00> : vector<8xf32>
    %6 = vector.multi_reduction <add>, %1, %cst [1] : vector<8x32xf32> to vector<8xf32>
    %7 = vector.shape_cast %6 : vector<8xf32> to vector<8x1xf32>
    %cst_9 = arith.constant 3.200000e+01 : f32
    %8 = vector.broadcast %cst_9 : f32 to vector<8x1xf32>
    %9 = arith.divf %7, %8 : vector<8x1xf32>
    %10 = vector.broadcast %9 : vector<8x1xf32> to vector<8x32xf32>
    %11 = arith.subf %1, %10 : vector<8x32xf32>
    %12 = arith.mulf %11, %11 : vector<8x32xf32>
    %cst_10 = arith.constant dense<0.000000e+00> : vector<8xf32>
    %13 = vector.multi_reduction <add>, %12, %cst_10 [1] : vector<8x32xf32> to vector<8xf32>
    %14 = vector.shape_cast %13 : vector<8xf32> to vector<8x1xf32>
    %cst_11 = arith.constant 3.200000e+01 : f32
    %15 = vector.broadcast %cst_11 : f32 to vector<8x1xf32>
    %16 = arith.divf %14, %15 : vector<8x1xf32>
    %17 = vector.broadcast %9 : vector<8x1xf32> to vector<8x32xf32>
    %18 = arith.subf %1, %17 : vector<8x32xf32>
    %cst_12 = arith.constant 9.99999974E-6 : f32
    %19 = vector.broadcast %cst_12 : f32 to vector<8x1xf32>
    %20 = arith.addf %16, %19 : vector<8x1xf32>
    %21 = math.rsqrt %20 : vector<8x1xf32>
    %22 = vector.broadcast %21 : vector<8x1xf32> to vector<8x32xf32>
    %23 = arith.mulf %18, %22 : vector<8x32xf32>
    %24 = vector.broadcast %4 : vector<1x32xf32> to vector<8x32xf32>
    %25 = arith.mulf %23, %24 : vector<8x32xf32>
    %26 = vector.broadcast %5 : vector<1x32xf32> to vector<8x32xf32>
    %27 = arith.addf %25, %26 : vector<8x32xf32>
    %28 = arith.addf %27, %3 : vector<8x32xf32>
    %29 = arith.truncf %28 : vector<8x32xf32> to vector<8x32xbf16>
    %c0_13 = arith.constant 0 : index
    %c0_14 = arith.constant 0 : index
    %30 = vector.load %arg5[%c0_13, %c0_14] : memref<32x96xbf16, #tpu.memory_space<vmem>>, vector<32x96xbf16>
    %cst_15 = arith.constant dense<0.000000e+00> : vector<8x96xf32>
    %31 = tpu.matmul %29, %30, %cst_15 {dimension_numbers = #tpu.dot_dimension_numbers<[1], [0], [0], [1], [0, 0, 1, 1], [], []>} : vector<8x32xbf16>, vector<32x96xbf16>, vector<8x96xf32> -> vector<8x96xf32>
    %32 = arith.truncf %31 : vector<8x96xf32> to vector<8x96xbf16>
    %33 = vector.shape_cast %32 : vector<8x96xbf16> to vector<1x8x96xbf16>
    %34 = vector.extract_strided_slice %33 {offsets = [0, 0, 0], sizes = [1, 8, 8], strides = [1, 1, 1]} : vector<1x8x96xbf16> to vector<1x8x8xbf16>
    %35 = vector.extract_strided_slice %33 {offsets = [0, 0, 32], sizes = [1, 8, 8], strides = [1, 1, 1]} : vector<1x8x96xbf16> to vector<1x8x8xbf16>
    %36 = vector.extract_strided_slice %33 {offsets = [0, 0, 64], sizes = [1, 8, 8], strides = [1, 1, 1]} : vector<1x8x96xbf16> to vector<1x8x8xbf16>
    "tpu.trace_start"() <{level = 10 : i32, message = "bqd,bkd->bqk"}> : () -> ()
    %cst_16 = arith.constant dense<0.000000e+00> : vector<1x8x8xf32>
    %37 = tpu.matmul %34, %35, %cst_16 {dimension_numbers = #tpu.dot_dimension_numbers<[2], [2], [1], [1], [0, 0, 0, 1, 1, 1], [0], [0]>} : vector<1x8x8xbf16>, vector<1x8x8xbf16>, vector<1x8x8xf32> -> vector<1x8x8xf32>
    "tpu.trace_stop"() : () -> ()
    %cst_17 = arith.constant 0.353553385 : f32
    %38 = vector.broadcast %cst_17 : f32 to vector<1x8x8xf32>
    %39 = arith.mulf %37, %38 : vector<1x8x8xf32>
    %cst_18 = arith.constant dense<0xFF800000> : vector<1x8xf32>
    %40 = vector.multi_reduction <maximumf>, %39, %cst_18 [2] : vector<1x8x8xf32> to vector<1x8xf32>
    %41 = vector.shape_cast %40 : vector<1x8xf32> to vector<1x8x1xf32>
    %42 = vector.broadcast %41 : vector<1x8x1xf32> to vector<1x8x8xf32>
    %43 = arith.subf %39, %42 : vector<1x8x8xf32>
    %44 = math.exp %43 : vector<1x8x8xf32>
    %cst_19 = arith.constant dense<0.000000e+00> : vector<1x8xf32>
    %45 = vector.multi_reduction <add>, %44, %cst_19 [2] : vector<1x8x8xf32> to vector<1x8xf32>
    %46 = vector.shape_cast %45 : vector<1x8xf32> to vector<1x8x1xf32>
    %47 = tpu.reciprocal %46 {approx = true} : vector<1x8x1xf32> -> vector<1x8x1xf32>
    %48 = vector.broadcast %47 : vector<1x8x1xf32> to vector<1x8x8xf32>
    %49 = arith.mulf %44, %48 : vector<1x8x8xf32>
    %50 = arith.truncf %49 : vector<1x8x8xf32> to vector<1x8x8xbf16>
    "tpu.trace_start"() <{level = 10 : i32, message = "bqk,bkd->bqd"}> : () -> ()
    %cst_20 = arith.constant dense<0.000000e+00> : vector<1x8x8xf32>
    %51 = tpu.matmul %50, %36, %cst_20 {dimension_numbers = #tpu.dot_dimension_numbers<[2], [1], [1], [2], [0, 0, 0, 1, 1, 2], [0], [0]>} : vector<1x8x8xbf16>, vector<1x8x8xbf16>, vector<1x8x8xf32> -> vector<1x8x8xf32>
    "tpu.trace_stop"() : () -> ()
    %52 = arith.truncf %51 : vector<1x8x8xf32> to vector<1x8x8xbf16>
    %53 = vector.extract_strided_slice %33 {offsets = [0, 0, 8], sizes = [1, 8, 8], strides = [1, 1, 1]} : vector<1x8x96xbf16> to vector<1x8x8xbf16>
    %54 = vector.extract_strided_slice %33 {offsets = [0, 0, 40], sizes = [1, 8, 8], strides = [1, 1, 1]} : vector<1x8x96xbf16> to vector<1x8x8xbf16>
    %55 = vector.extract_strided_slice %33 {offsets = [0, 0, 72], sizes = [1, 8, 8], strides = [1, 1, 1]} : vector<1x8x96xbf16> to vector<1x8x8xbf16>
    "tpu.trace_start"() <{level = 10 : i32, message = "bqd,bkd->bqk"}> : () -> ()
    %cst_21 = arith.constant dense<0.000000e+00> : vector<1x8x8xf32>
    %56 = tpu.matmul %53, %54, %cst_21 {dimension_numbers = #tpu.dot_dimension_numbers<[2], [2], [1], [1], [0, 0, 0, 1, 1, 1], [0], [0]>} : vector<1x8x8xbf16>, vector<1x8x8xbf16>, vector<1x8x8xf32> -> vector<1x8x8xf32>
    "tpu.trace_stop"() : () -> ()
    %cst_22 = arith.constant 0.353553385 : f32
    %57 = vector.broadcast %cst_22 : f32 to vector<1x8x8xf32>
    %58 = arith.mulf %56, %57 : vector<1x8x8xf32>
    %cst_23 = arith.constant dense<0xFF800000> : vector<1x8xf32>
    %59 = vector.multi_reduction <maximumf>, %58, %cst_23 [2] : vector<1x8x8xf32> to vector<1x8xf32>
    %60 = vector.shape_cast %59 : vector<1x8xf32> to vector<1x8x1xf32>
    %61 = vector.broadcast %60 : vector<1x8x1xf32> to vector<1x8x8xf32>
    %62 = arith.subf %58, %61 : vector<1x8x8xf32>
    %63 = math.exp %62 : vector<1x8x8xf32>
    %cst_24 = arith.constant dense<0.000000e+00> : vector<1x8xf32>
    %64 = vector.multi_reduction <add>, %63, %cst_24 [2] : vector<1x8x8xf32> to vector<1x8xf32>
    %65 = vector.shape_cast %64 : vector<1x8xf32> to vector<1x8x1xf32>
    %66 = tpu.reciprocal %65 {approx = true} : vector<1x8x1xf32> -> vector<1x8x1xf32>
    %67 = vector.broadcast %66 : vector<1x8x1xf32> to vector<1x8x8xf32>
    %68 = arith.mulf %63, %67 : vector<1x8x8xf32>
    %69 = arith.truncf %68 : vector<1x8x8xf32> to vector<1x8x8xbf16>
    "tpu.trace_start"() <{level = 10 : i32, message = "bqk,bkd->bqd"}> : () -> ()
    %cst_25 = arith.constant dense<0.000000e+00> : vector<1x8x8xf32>
    %70 = tpu.matmul %69, %55, %cst_25 {dimension_numbers = #tpu.dot_dimension_numbers<[2], [1], [1], [2], [0, 0, 0, 1, 1, 2], [0], [0]>} : vector<1x8x8xbf16>, vector<1x8x8xbf16>, vector<1x8x8xf32> -> vector<1x8x8xf32>
    "tpu.trace_stop"() : () -> ()
    %71 = arith.truncf %70 : vector<1x8x8xf32> to vector<1x8x8xbf16>
    %72 = vector.extract_strided_slice %33 {offsets = [0, 0, 16], sizes = [1, 8, 8], strides = [1, 1, 1]} : vector<1x8x96xbf16> to vector<1x8x8xbf16>
    %73 = vector.extract_strided_slice %33 {offsets = [0, 0, 48], sizes = [1, 8, 8], strides = [1, 1, 1]} : vector<1x8x96xbf16> to vector<1x8x8xbf16>
    %74 = vector.extract_strided_slice %33 {offsets = [0, 0, 80], sizes = [1, 8, 8], strides = [1, 1, 1]} : vector<1x8x96xbf16> to vector<1x8x8xbf16>
    "tpu.trace_start"() <{level = 10 : i32, message = "bqd,bkd->bqk"}> : () -> ()
    %cst_26 = arith.constant dense<0.000000e+00> : vector<1x8x8xf32>
    %75 = tpu.matmul %72, %73, %cst_26 {dimension_numbers = #tpu.dot_dimension_numbers<[2], [2], [1], [1], [0, 0, 0, 1, 1, 1], [0], [0]>} : vector<1x8x8xbf16>, vector<1x8x8xbf16>, vector<1x8x8xf32> -> vector<1x8x8xf32>
    "tpu.trace_stop"() : () -> ()
    %cst_27 = arith.constant 0.353553385 : f32
    %76 = vector.broadcast %cst_27 : f32 to vector<1x8x8xf32>
    %77 = arith.mulf %75, %76 : vector<1x8x8xf32>
    %cst_28 = arith.constant dense<0xFF800000> : vector<1x8xf32>
    %78 = vector.multi_reduction <maximumf>, %77, %cst_28 [2] : vector<1x8x8xf32> to vector<1x8xf32>
    %79 = vector.shape_cast %78 : vector<1x8xf32> to vector<1x8x1xf32>
    %80 = vector.broadcast %79 : vector<1x8x1xf32> to vector<1x8x8xf32>
    %81 = arith.subf %77, %80 : vector<1x8x8xf32>
    %82 = math.exp %81 : vector<1x8x8xf32>
    %cst_29 = arith.constant dense<0.000000e+00> : vector<1x8xf32>
    %83 = vector.multi_reduction <add>, %82, %cst_29 [2] : vector<1x8x8xf32> to vector<1x8xf32>
    %84 = vector.shape_cast %83 : vector<1x8xf32> to vector<1x8x1xf32>
    %85 = tpu.reciprocal %84 {approx = true} : vector<1x8x1xf32> -> vector<1x8x1xf32>
    %86 = vector.broadcast %85 : vector<1x8x1xf32> to vector<1x8x8xf32>
    %87 = arith.mulf %82, %86 : vector<1x8x8xf32>
    %88 = arith.truncf %87 : vector<1x8x8xf32> to vector<1x8x8xbf16>
    "tpu.trace_start"() <{level = 10 : i32, message = "bqk,bkd->bqd"}> : () -> ()
    %cst_30 = arith.constant dense<0.000000e+00> : vector<1x8x8xf32>
    %89 = tpu.matmul %88, %74, %cst_30 {dimension_numbers = #tpu.dot_dimension_numbers<[2], [1], [1], [2], [0, 0, 0, 1, 1, 2], [0], [0]>} : vector<1x8x8xbf16>, vector<1x8x8xbf16>, vector<1x8x8xf32> -> vector<1x8x8xf32>
    "tpu.trace_stop"() : () -> ()
    %90 = arith.truncf %89 : vector<1x8x8xf32> to vector<1x8x8xbf16>
    %91 = vector.extract_strided_slice %33 {offsets = [0, 0, 24], sizes = [1, 8, 8], strides = [1, 1, 1]} : vector<1x8x96xbf16> to vector<1x8x8xbf16>
    %92 = vector.extract_strided_slice %33 {offsets = [0, 0, 56], sizes = [1, 8, 8], strides = [1, 1, 1]} : vector<1x8x96xbf16> to vector<1x8x8xbf16>
    %93 = vector.extract_strided_slice %33 {offsets = [0, 0, 88], sizes = [1, 8, 8], strides = [1, 1, 1]} : vector<1x8x96xbf16> to vector<1x8x8xbf16>
    "tpu.trace_start"() <{level = 10 : i32, message = "bqd,bkd->bqk"}> : () -> ()
    %cst_31 = arith.constant dense<0.000000e+00> : vector<1x8x8xf32>
    %94 = tpu.matmul %91, %92, %cst_31 {dimension_numbers = #tpu.dot_dimension_numbers<[2], [2], [1], [1], [0, 0, 0, 1, 1, 1], [0], [0]>} : vector<1x8x8xbf16>, vector<1x8x8xbf16>, vector<1x8x8xf32> -> vector<1x8x8xf32>
    "tpu.trace_stop"() : () -> ()
    %cst_32 = arith.constant 0.353553385 : f32
    %95 = vector.broadcast %cst_32 : f32 to vector<1x8x8xf32>
    %96 = arith.mulf %94, %95 : vector<1x8x8xf32>
    %cst_33 = arith.constant dense<0xFF800000> : vector<1x8xf32>
    %97 = vector.multi_reduction <maximumf>, %96, %cst_33 [2] : vector<1x8x8xf32> to vector<1x8xf32>
    %98 = vector.shape_cast %97 : vector<1x8xf32> to vector<1x8x1xf32>
    %99 = vector.broadcast %98 : vector<1x8x1xf32> to vector<1x8x8xf32>
    %100 = arith.subf %96, %99 : vector<1x8x8xf32>
    %101 = math.exp %100 : vector<1x8x8xf32>
    %cst_34 = arith.constant dense<0.000000e+00> : vector<1x8xf32>
    %102 = vector.multi_reduction <add>, %101, %cst_34 [2] : vector<1x8x8xf32> to vector<1x8xf32>
    %103 = vector.shape_cast %102 : vector<1x8xf32> to vector<1x8x1xf32>
    %104 = tpu.reciprocal %103 {approx = true} : vector<1x8x1xf32> -> vector<1x8x1xf32>
    %105 = vector.broadcast %104 : vector<1x8x1xf32> to vector<1x8x8xf32>
    %106 = arith.mulf %101, %105 : vector<1x8x8xf32>
    %107 = arith.truncf %106 : vector<1x8x8xf32> to vector<1x8x8xbf16>
    "tpu.trace_start"() <{level = 10 : i32, message = "bqk,bkd->bqd"}> : () -> ()
    %cst_35 = arith.constant dense<0.000000e+00> : vector<1x8x8xf32>
    %108 = tpu.matmul %107, %93, %cst_35 {dimension_numbers = #tpu.dot_dimension_numbers<[2], [1], [1], [2], [0, 0, 0, 1, 1, 2], [0], [0]>} : vector<1x8x8xbf16>, vector<1x8x8xbf16>, vector<1x8x8xf32> -> vector<1x8x8xf32>
    "tpu.trace_stop"() : () -> ()
    %109 = arith.truncf %108 : vector<1x8x8xf32> to vector<1x8x8xbf16>
    %110 = tpu.concatenate %52, %71, %90, %109 in 2 : vector<1x8x8xbf16>, vector<1x8x8xbf16>, vector<1x8x8xbf16>, vector<1x8x8xbf16> -> vector<1x8x32xbf16>
    %111 = vector.shape_cast %110 : vector<1x8x32xbf16> to vector<8x32xbf16>
    %c0_36 = arith.constant 0 : index
    %c0_37 = arith.constant 0 : index
    %112 = vector.load %arg6[%c0_36, %c0_37] : memref<32x32xbf16, #tpu.memory_space<vmem>>, vector<32x32xbf16>
    %cst_38 = arith.constant dense<0.000000e+00> : vector<8x32xf32>
    %113 = tpu.matmul %111, %112, %cst_38 {dimension_numbers = #tpu.dot_dimension_numbers<[1], [0], [0], [1], [0, 0, 1, 1], [], []>} : vector<8x32xbf16>, vector<32x32xbf16>, vector<8x32xf32> -> vector<8x32xf32>
    %c0_39 = arith.constant 0 : index
    %c0_40 = arith.constant 0 : index
    %114 = vector.load %arg7[%c0_39, %c0_40] : memref<1x32xf32, #tpu.memory_space<vmem>>, vector<1x32xf32>
    %115 = vector.broadcast %114 : vector<1x32xf32> to vector<8x32xf32>
    %116 = arith.addf %113, %115 : vector<8x32xf32>
    %117 = arith.addf %1, %116 : vector<8x32xf32>
    %c0_41 = arith.constant 0 : index
    %c0_42 = arith.constant 0 : index
    %118 = vector.load %arg8[%c0_41, %c0_42] : memref<1x32xf32, #tpu.memory_space<vmem>>, vector<1x32xf32>
    %c0_43 = arith.constant 0 : index
    %c0_44 = arith.constant 0 : index
    %119 = vector.load %arg9[%c0_43, %c0_44] : memref<1x32xf32, #tpu.memory_space<vmem>>, vector<1x32xf32>
    %cst_45 = arith.constant dense<0.000000e+00> : vector<8xf32>
    %120 = vector.multi_reduction <add>, %117, %cst_45 [1] : vector<8x32xf32> to vector<8xf32>
    %121 = vector.shape_cast %120 : vector<8xf32> to vector<8x1xf32>
    %cst_46 = arith.constant 3.200000e+01 : f32
    %122 = vector.broadcast %cst_46 : f32 to vector<8x1xf32>
    %123 = arith.divf %121, %122 : vector<8x1xf32>
    %124 = vector.broadcast %123 : vector<8x1xf32> to vector<8x32xf32>
    %125 = arith.subf %117, %124 : vector<8x32xf32>
    %126 = arith.mulf %125, %125 : vector<8x32xf32>
    %cst_47 = arith.constant dense<0.000000e+00> : vector<8xf32>
    %127 = vector.multi_reduction <add>, %126, %cst_47 [1] : vector<8x32xf32> to vector<8xf32>
    %128 = vector.shape_cast %127 : vector<8xf32> to vector<8x1xf32>
    %cst_48 = arith.constant 3.200000e+01 : f32
    %129 = vector.broadcast %cst_48 : f32 to vector<8x1xf32>
    %130 = arith.divf %128, %129 : vector<8x1xf32>
    %131 = vector.broadcast %123 : vector<8x1xf32> to vector<8x32xf32>
    %132 = arith.subf %117, %131 : vector<8x32xf32>
    %cst_49 = arith.constant 9.99999974E-6 : f32
    %133 = vector.broadcast %cst_49 : f32 to vector<8x1xf32>
    %134 = arith.addf %130, %133 : vector<8x1xf32>
    %135 = math.rsqrt %134 : vector<8x1xf32>
    %136 = vector.broadcast %135 : vector<8x1xf32> to vector<8x32xf32>
    %137 = arith.mulf %132, %136 : vector<8x32xf32>
    %138 = vector.broadcast %118 : vector<1x32xf32> to vector<8x32xf32>
    %139 = arith.mulf %137, %138 : vector<8x32xf32>
    %140 = vector.broadcast %119 : vector<1x32xf32> to vector<8x32xf32>
    %141 = arith.addf %139, %140 : vector<8x32xf32>
    %142 = arith.truncf %141 : vector<8x32xf32> to vector<8x32xbf16>
    %c0_50 = arith.constant 0 : index
    %c0_51 = arith.constant 0 : index
    %143 = vector.load %arg10[%c0_50, %c0_51] : memref<32x32xbf16, #tpu.memory_space<vmem>>, vector<32x32xbf16>
    %cst_52 = arith.constant dense<0.000000e+00> : vector<8x32xf32>
    %144 = tpu.matmul %142, %143, %cst_52 {dimension_numbers = #tpu.dot_dimension_numbers<[1], [0], [0], [1], [0, 0, 1, 1], [], []>} : vector<8x32xbf16>, vector<32x32xbf16>, vector<8x32xf32> -> vector<8x32xf32>
    %c0_53 = arith.constant 0 : index
    %c0_54 = arith.constant 0 : index
    %145 = vector.load %arg11[%c0_53, %c0_54] : memref<1x32xf32, #tpu.memory_space<vmem>>, vector<1x32xf32>
    %146 = vector.broadcast %145 : vector<1x32xf32> to vector<8x32xf32>
    %147 = arith.addf %144, %146 : vector<8x32xf32>
    %cst_55 = arith.constant 5.000000e-01 : f32
    %148 = vector.broadcast %cst_55 : f32 to vector<8x32xf32>
    %149 = arith.mulf %148, %147 : vector<8x32xf32>
    %cst_56 = arith.constant 1.41421354 : f32
    %150 = vector.broadcast %cst_56 : f32 to vector<8x32xf32>
    %151 = arith.divf %147, %150 : vector<8x32xf32>
    %152 = math.erf %151 : vector<8x32xf32>
    %cst_57 = arith.constant 1.000000e+00 : f32
    %153 = vector.broadcast %cst_57 : f32 to vector<8x32xf32>
    %154 = arith.addf %153, %152 : vector<8x32xf32>
    %155 = arith.mulf %149, %154 : vector<8x32xf32>
    %156 = arith.truncf %155 : vector<8x32xf32> to vector<8x32xbf16>
    %c0_58 = arith.constant 0 : index
    %c0_59 = arith.constant 0 : index
    %157 = vector.load %arg12[%c0_58, %c0_59] : memref<32x32xbf16, #tpu.memory_space<vmem>>, vector<32x32xbf16>
    %cst_60 = arith.constant dense<0.000000e+00> : vector<8x32xf32>
    %158 = tpu.matmul %156, %157, %cst_60 {dimension_numbers = #tpu.dot_dimension_numbers<[1], [0], [0], [1], [0, 0, 1, 1], [], []>} : vector<8x32xbf16>, vector<32x32xbf16>, vector<8x32xf32> -> vector<8x32xf32>
    %c0_61 = arith.constant 0 : index
    %c0_62 = arith.constant 0 : index
    %159 = vector.load %arg13[%c0_61, %c0_62] : memref<1x32xf32, #tpu.memory_space<vmem>>, vector<1x32xf32>
    %160 = vector.broadcast %159 : vector<1x32xf32> to vector<8x32xf32>
    %161 = arith.addf %158, %160 : vector<8x32xf32>
    %162 = arith.addf %117, %161 : vector<8x32xf32>
    %163 = vector.shape_cast %162 : vector<8x32xf32> to vector<1x8x32xf32>
    %c0_63 = arith.constant 0 : index
    %c0_64 = arith.constant 0 : index
    %c0_65 = arith.constant 0 : index
    %164 = vector.load %arg14[%c0_63, %c0_64, %c0_65] : memref<1x8x32xf32, #tpu.memory_space<vmem>>, vector<1x8x32xf32>
    tpu.vector_store %arg14[%c0_63, %c0_64, %c0_65], %163 {strides = array<i32>} : memref<1x8x32xf32, #tpu.memory_space<vmem>>, vector<1x8x32xf32>,
    return
  }
  func.func @transform_0(%arg0: i32) -> (i32, i32, i32) {
    %c0_i32 = arith.constant 0 : i32
    %c0_i32_0 = arith.constant 0 : i32
    %c0_i32_1 = arith.constant 0 : i32
    return %arg0, %c0_i32, %c0_i32_0 : i32, i32, i32
  }
  func.func @transform_1(%arg0: i32) -> (i32, i32, i32) {
    %c0_i32 = arith.constant 0 : i32
    %c0_i32_0 = arith.constant 0 : i32
    %c0_i32_1 = arith.constant 0 : i32
    return %arg0, %c0_i32, %c0_i32_0 : i32, i32, i32
  }
  func.func @transform_2(%arg0: i32) -> (i32, i32) {
    %c0_i32 = arith.constant 0 : i32
    %c0_i32_0 = arith.constant 0 : i32
    %c0_i32_1 = arith.constant 0 : i32
    return %c0_i32, %c0_i32_0 : i32, i32
  }
  func.func @transform_3(%arg0: i32) -> (i32, i32) {
    %c0_i32 = arith.constant 0 : i32
    %c0_i32_0 = arith.constant 0 : i32
    %c0_i32_1 = arith.constant 0 : i32
    return %c0_i32, %c0_i32_0 : i32, i32
  }
  func.func @transform_4(%arg0: i32) -> (i32, i32) {
    %c0_i32 = arith.constant 0 : i32
    %c0_i32_0 = arith.constant 0 : i32
    %c0_i32_1 = arith.constant 0 : i32
    return %c0_i32, %c0_i32_0 : i32, i32
  }
  func.func @transform_5(%arg0: i32) -> (i32, i32) {
    %c0_i32 = arith.constant 0 : i32
    %c0_i32_0 = arith.constant 0 : i32
    %c0_i32_1 = arith.constant 0 : i32
    return %c0_i32, %c0_i32_0 : i32, i32
  }
  func.func @transform_6(%arg0: i32) -> (i32, i32) {
    %c0_i32 = arith.constant 0 : i32
    %c0_i32_0 = arith.constant 0 : i32
    %c0_i32_1 = arith.constant 0 : i32
    return %c0_i32, %c0_i32_0 : i32, i32
  }
  func.func @transform_7(%arg0: i32) -> (i32, i32) {
    %c0_i32 = arith.constant 0 : i32
    %c0_i32_0 = arith.constant 0 : i32
    %c0_i32_1 = arith.constant 0 : i32
    return %c0_i32, %c0_i32_0 : i32, i32
  }
  func.func @transform_8(%arg0: i32) -> (i32, i32) {
    %c0_i32 = arith.constant 0 : i32
    %c0_i32_0 = arith.constant 0 : i32
    %c0_i32_1 = arith.constant 0 : i32
    return %c0_i32, %c0_i32_0 : i32, i32
  }
  func.func @transform_9(%arg0: i32) -> (i32, i32) {
    %c0_i32 = arith.constant 0 : i32
    %c0_i32_0 = arith.constant 0 : i32
    %c0_i32_1 = arith.constant 0 : i32
    return %c0_i32, %c0_i32_0 : i32, i32
  }
  func.func @transform_10(%arg0: i32) -> (i32, i32) {
    %c0_i32 = arith.constant 0 : i32
    %c0_i32_0 = arith.constant 0 : i32
    %c0_i32_1 = arith.constant 0 : i32
    return %c0_i32, %c0_i32_0 : i32, i32
  }
  func.func @transform_11(%arg0: i32) -> (i32, i32) {
    %c0_i32 = arith.constant 0 : i32
    %c0_i32_0 = arith.constant 0 : i32
    %c0_i32_1 = arith.constant 0 : i32
    return %c0_i32, %c0_i32_0 : i32, i32
  }
  func.func @transform_12(%arg0: i32) -> (i32, i32) {
    %c0_i32 = arith.constant 0 : i32
    %c0_i32_0 = arith.constant 0 : i32
    %c0_i32_1 = arith.constant 0 : i32
    return %c0_i32, %c0_i32_0 : i32, i32
  }
  func.func @transform_13(%arg0: i32) -> (i32, i32, i32) {
    %c0_i32 = arith.constant 0 : i32
    %c0_i32_0 = arith.constant 0 : i32
    %c0_i32_1 = arith.constant 0 : i32
    return %arg0, %c0_i32, %c0_i32_0 : i32, i32, i32
  }
}

module attributes {stable_mosaic.version = 11 : i64} {
  func.func @block_kernel(%arg0: i32, %arg1: memref<1x8x32xf32, #tpu.memory_space<vmem>>, %arg2: memref<1x8x32xf32, #tpu.memory_space<vmem>>, %arg3: memref<1x32xf32, #tpu.memory_space<vmem>>, %arg4: memref<1x32xf32, #tpu.memory_space<vmem>>, %arg5: memref<32x96xbf16, #tpu.memory_space<vmem>>, %arg6: memref<32x32xbf16, #tpu.memory_space<vmem>>, %arg7: memref<1x32xf32, #tpu.memory_space<vmem>>, %arg8: memref<1x32xf32, #tpu.memory_space<vmem>>, %arg9: memref<1x32xf32, #tpu.memory_space<vmem>>, %arg10: memref<32x32xbf16, #tpu.memory_space<vmem>>, %arg11: memref<1x32xf32, #tpu.memory_space<vmem>>, %arg12: memref<32x32xbf16, #tpu.memory_space<vmem>>, %arg13: memref<1x32xf32, #tpu.memory_space<vmem>>, %arg14: memref<1x8x32xf32, #tpu.memory_space<vmem>>) attributes {dimension_semantics = [#tpu.dimension_semantics<parallel>], iteration_bounds = array<i64: 2>, scalar_prefetch = 0 : i64, scratch_operands = 0 : i64, tpu.core_type = #tpu.core_type<tc>, window_params = [{transform_indices = @transform_0, window_bounds = array<i64: 1, 8, 32>}, {transform_indices = @transform_1, window_bounds = array<i64: 1, 8, 32>}, {pipeline_mode = #tpu.pipeline_mode<synchronous>, transform_indices = @transform_2, window_bounds = array<i64: 1, 32>}, {pipeline_mode = #tpu.pipeline_mode<synchronous>, transform_indices = @transform_3, window_bounds = array<i64: 1, 32>}, {pipeline_mode = #tpu.pipeline_mode<synchronous>, transform_indices = @transform_4, window_bounds = array<i64: 32, 96>}, {pipeline_mode = #tpu.pipeline_mode<synchronous>, transform_indices = @transform_5, window_bounds = array<i64: 32, 32>}, {pipeline_mode = #tpu.pipeline_mode<synchronous>, transform_indices = @transform_6, window_bounds = array<i64: 1, 32>}, {pipeline_mode = #tpu.pipeline_mode<synchronous>, transform_indices = @transform_7, window_bounds = array<i64: 1, 32>}, {pipeline_mode = #tpu.pipeline_mode<synchronous>, transform_indices = @transform_8, window_bounds = array<i64: 1, 32>}, {pipeline_mode = #tpu.pipeline_mode<synchronous>, transform_indices = @transform_9, window_bounds = array<i64: 32, 32>}, {pipeline_mode = #tpu.pipeline_mode<synchronous>, transform_indices = @transform_10, window_bounds = array<i64: 1, 32>}, {pipeline_mode = #tpu.pipeline_mode<synchronous>, transform_indices = @transform_11, window_bounds = array<i64: 32, 32>}, {pipeline_mode = #tpu.pipeline_mode<synchronous>, transform_indices = @transform_12, window_bounds = array<i64: 1, 32>}, {transform_indices = @transform_13, window_bounds = array<i64: 1, 8, 32>}]} {
    %c0 = arith.constant 0 : index
    %c0_0 = arith.constant 0 : index
    %c0_1 = arith.constant 0 : index
    %0 = vector.load %arg1[%c0, %c0_0, %c0_1] : memref<1x8x32xf32, #tpu.memory_space<vmem>>, vector<1x8x32xf32>
    %1 = vector.shape_cast %0 : vector<1x8x32xf32> to vector<8x32xf32>
    %c0_2 = arith.constant 0 : index
    %c0_3 = arith.constant 0 : index
    %c0_4 = arith.constant 0 : index
    %2 = vector.load %arg2[%c0_2, %c0_3, %c0_4] : memref<1x8x32xf32, #tpu.memory_space<vmem>>, vector<1x8x32xf32>
    %3 = vector.shape_cast %2 : vector<1x8x32xf32> to vector<8x32xf32>
    %c0_5 = arith.constant 0 : index
    %c0_6 = arith.constant 0 : index
    %4 = vector.load %arg3[%c0_5, %c0_6] : memref<1x32xf32, #tpu.memory_space<vmem>>, vector<1x32xf32>
    %c0_7 = arith.constant 0 : index
    %c0_8 = arith.constant 0 : index
    %5 = vector.load %arg4[%c0_7, %c0_8] : memref<1x32xf32, #tpu.memory_space<vmem>>, vector<1x32xf32>
    %cst = arith.constant dense<0.000000e+00> : vector<8xf32>
    %6 = vector.multi_reduction <add>, %1, %cst [1] : vector<8x32xf32> to vector<8xf32>
    %7 = vector.shape_cast %6 : vector<8xf32> to vector<8x1xf32>
    %cst_9 = arith.constant 3.200000e+01 : f32
    %8 = vector.broadcast %cst_9 : f32 to vector<8x1xf32>
    %9 = arith.divf %7, %8 : vector<8x1xf32>
    %10 = vector.broadcast %9 : vector<8x1xf32> to vector<8x32xf32>
    %11 = arith.subf %1, %10 : vector<8x32xf32>
    %12 = arith.mulf %11, %11 : vector<8x32xf32>
    %cst_10 = arith.constant dense<0.000000e+00> : vector<8xf32>
    %13 = vector.multi_reduction <add>, %12, %cst_10 [1] : vector<8x32xf32> to vector<8xf32>
    %14 = vector.shape_cast %13 : vector<8xf32> to vector<8x1xf32>
    %cst_11 = arith.constant 3.200000e+01 : f32
    %15 = vector.broadcast %cst_11 : f32 to vector<8x1xf32>
    %16 = arith.divf %14, %15 : vector<8x1xf32>
    %17 = vector.broadcast %9 : vector<8x1xf32> to vector<8x32xf32>
    %18 = arith.subf %1, %17 : vector<8x32xf32>
    %cst_12 = arith.constant 9.99999974E-6 : f32
    %19 = vector.broadcast %cst_12 : f32 to vector<8x1xf32>
    %20 = arith.addf %16, %19 : vector<8x1xf32>
    %21 = math.rsqrt %20 : vector<8x1xf32>
    %22 = vector.broadcast %21 : vector<8x1xf32> to vector<8x32xf32>
    %23 = arith.mulf %18, %22 : vector<8x32xf32>
    %24 = vector.broadcast %4 : vector<1x32xf32> to vector<8x32xf32>
    %25 = arith.mulf %23, %24 : vector<8x32xf32>
    %26 = vector.broadcast %5 : vector<1x32xf32> to vector<8x32xf32>
    %27 = arith.addf %25, %26 : vector<8x32xf32>
    %28 = arith.addf %27, %3 : vector<8x32xf32>
    %29 = arith.truncf %28 : vector<8x32xf32> to vector<8x32xbf16>
    %c0_13 = arith.constant 0 : index
    %c0_14 = arith.constant 0 : index
    %30 = vector.load %arg5[%c0_13, %c0_14] : memref<32x96xbf16, #tpu.memory_space<vmem>>, vector<32x96xbf16>
    %cst_15 = arith.constant dense<0.000000e+00> : vector<8x96xf32>
    %31 = tpu.matmul %29, %30, %cst_15 {dimension_numbers = #tpu.dot_dimension_numbers<[1], [0], [0], [1], [0, 0, 1, 1], [], []>} : vector<8x32xbf16>, vector<32x96xbf16>, vector<8x96xf32> -> vector<8x96xf32>
    %32 = arith.truncf %31 : vector<8x96xf32> to vector<8x96xbf16>
    %33 = vector.shape_cast %32 : vector<8x96xbf16> to vector<1x8x96xbf16>
    %34 = vector.extract_strided_slice %33 {offsets = [0, 0, 0], sizes = [1, 8, 8], strides = [1, 1, 1]} : vector<1x8x96xbf16> to vector<1x8x8xbf16>
    %35 = vector.extract_strided_slice %33 {offsets = [0, 0, 32], sizes = [1, 8, 8], strides = [1, 1, 1]} : vector<1x8x96xbf16> to vector<1x8x8xbf16>
    %36 = vector.extract_strided_slice %33 {offsets = [0, 0, 64], sizes = [1, 8, 8], strides = [1, 1, 1]} : vector<1x8x96xbf16> to vector<1x8x8xbf16>
    "tpu.trace_start"() <{level = 10 : i32, message = "bqd,bkd->bqk"}> : () -> ()
    %cst_16 = arith.constant dense<0.000000e+00> : vector<1x8x8xf32>
    %37 = tpu.matmul %34, %35, %cst_16 {dimension_numbers = #tpu.dot_dimension_numbers<[2], [2], [1], [1], [0, 0, 0, 1, 1, 1], [0], [0]>} : vector<1x8x8xbf16>, vector<1x8x8xbf16>, vector<1x8x8xf32> -> vector<1x8x8xf32>
    "tpu.trace_stop"() : () -> ()
    %cst_17 = arith.constant 0.353553385 : f32
    %38 = vector.broadcast %cst_17 : f32 to vector<1x8x8xf32>
    %39 = arith.mulf %37, %38 : vector<1x8x8xf32>
    %cst_18 = arith.constant dense<0xFF800000> : vector<1x8xf32>
    %40 = vector.multi_reduction <maximumf>, %39, %cst_18 [2] : vector<1x8x8xf32> to vector<1x8xf32>
    %41 = vector.shape_cast %40 : vector<1x8xf32> to vector<1x8x1xf32>
    %42 = vector.broadcast %41 : vector<1x8x1xf32> to vector<1x8x8xf32>
    %43 = arith.subf %39, %42 : vector<1x8x8xf32>
    %44 = math.exp %43 : vector<1x8x8xf32>
    %cst_19 = arith.constant dense<0.000000e+00> : vector<1x8xf32>
    %45 = vector.multi_reduction <add>, %44, %cst_19 [2] : vector<1x8x8xf32> to vector<1x8xf32>
    %46 = vector.shape_cast %45 : vector<1x8xf32> to vector<1x8x1xf32>
    %47 = tpu.reciprocal %46 {approx = true} : vector<1x8x1xf32> -> vector<1x8x1xf32>
    %48 = vector.broadcast %47 : vector<1x8x1xf32> to vector<1x8x8xf32>
    %49 = arith.mulf %44, %48 : vector<1x8x8xf32>
    %50 = arith.truncf %49 : vector<1x8x8xf32> to vector<1x8x8xbf16>
    "tpu.trace_start"() <{level = 10 : i32, message = "bqk,bkd->bqd"}> : () -> ()
    %cst_20 = arith.constant dense<0.000000e+00> : vector<1x8x8xf32>
    %51 = tpu.matmul %50, %36, %cst_20 {dimension_numbers = #tpu.dot_dimension_numbers<[2], [1], [1], [2], [0, 0, 0, 1, 1, 2], [0], [0]>} : vector<1x8x8xbf16>, vector<1x8x8xbf16>, vector<1x8x8xf32> -> vector<1x8x8xf32>
    "tpu.trace_stop"() : () -> ()
    %52 = arith.truncf %51 : vector<1x8x8xf32> to vector<1x8x8xbf16>
    %53 = vector.extract_strided_slice %33 {offsets = [0, 0, 8], sizes = [1, 8, 8], strides = [1, 1, 1]} : vector<1x8x96xbf16> to vector<1x8x8xbf16>
    %54 = vector.extract_strided_slice %33 {offsets = [0, 0, 40], sizes = [1, 8, 8], strides = [1, 1, 1]} : vector<1x8x96xbf16> to vector<1x8x8xbf16>
    %55 = vector.extract_strided_slice %33 {offsets = [0, 0, 72], sizes = [1, 8, 8], strides = [1, 1, 1]} : vector<1x8x96xbf16> to vector<1x8x8xbf16>
    "tpu.trace_start"() <{level = 10 : i32, message = "bqd,bkd->bqk"}> : () -> ()
    %cst_21 = arith.constant dense<0.000000e+00> : vector<1x8x8xf32>
    %56 = tpu.matmul %53, %54, %cst_21 {dimension_numbers = #tpu.dot_dimension_numbers<[2], [2], [1], [1], [0, 0, 0, 1, 1, 1], [0], [0]>} : vector<1x8x8xbf16>, vector<1x8x8xbf16>, vector<1x8x8xf32> -> vector<1x8x8xf32>
    "tpu.trace_stop"() : () -> ()
    %cst_22 = arith.constant 0.353553385 : f32
    %57 = vector.broadcast %cst_22 : f32 to vector<1x8x8xf32>
    %58 = arith.mulf %56, %57 : vector<1x8x8xf32>
    %cst_23 = arith.constant dense<0xFF800000> : vector<1x8xf32>
    %59 = vector.multi_reduction <maximumf>, %58, %cst_23 [2] : vector<1x8x8xf32> to vector<1x8xf32>
    %60 = vector.shape_cast %59 : vector<1x8xf32> to vector<1x8x1xf32>
    %61 = vector.broadcast %60 : vector<1x8x1xf32> to vector<1x8x8xf32>
    %62 = arith.subf %58, %61 : vector<1x8x8xf32>
    %63 = math.exp %62 : vector<1x8x8xf32>
    %cst_24 = arith.constant dense<0.000000e+00> : vector<1x8xf32>
    %64 = vector.multi_reduction <add>, %63, %cst_24 [2] : vector<1x8x8xf32> to vector<1x8xf32>
    %65 = vector.shape_cast %64 : vector<1x8xf32> to vector<1x8x1xf32>
    %66 = tpu.reciprocal %65 {approx = true} : vector<1x8x1xf32> -> vector<1x8x1xf32>
    %67 = vector.broadcast %66 : vector<1x8x1xf32> to vector<1x8x8xf32>
    %68 = arith.mulf %63, %67 : vector<1x8x8xf32>
    %69 = arith.truncf %68 : vector<1x8x8xf32> to vector<1x8x8xbf16>
    "tpu.trace_start"() <{level = 10 : i32, message = "bqk,bkd->bqd"}> : () -> ()
    %cst_25 = arith.constant dense<0.000000e+00> : vector<1x8x8xf32>
    %70 = tpu.matmul %69, %55, %cst_25 {dimension_numbers = #tpu.dot_dimension_numbers<[2], [1], [1], [2], [0, 0, 0, 1, 1, 2], [0], [0]>} : vector<1x8x8xbf16>, vector<1x8x8xbf16>, vector<1x8x8xf32> -> vector<1x8x8xf32>
    "tpu.trace_stop"() : () -> ()
    %71 = arith.truncf %70 : vector<1x8x8xf32> to vector<1x8x8xbf16>
    %72 = vector.extract_strided_slice %33 {offsets = [0, 0, 16], sizes = [1, 8, 8], strides = [1, 1, 1]} : vector<1x8x96xbf16> to vector<1x8x8xbf16>
    %73 = vector.extract_strided_slice %33 {offsets = [0, 0, 48], sizes = [1, 8, 8], strides = [1, 1, 1]} : vector<1x8x96xbf16> to vector<1x8x8xbf16>
    %74 = vector.extract_strided_slice %33 {offsets = [0, 0, 80], sizes = [1, 8, 8], strides = [1, 1, 1]} : vector<1x8x96xbf16> to vector<1x8x8xbf16>
    "tpu.trace_start"() <{level = 10 : i32, message = "bqd,bkd->bqk"}> : () -> ()
    %cst_26 = arith.constant dense<0.000000e+00> : vector<1x8x8xf32>
    %75 = tpu.matmul %72, %73, %cst_26 {dimension_numbers = #tpu.dot_dimension_numbers<[2], [2], [1], [1], [0, 0, 0, 1, 1, 1], [0], [0]>} : vector<1x8x8xbf16>, vector<1x8x8xbf16>, vector<1x8x8xf32> -> vector<1x8x8xf32>
    "tpu.trace_stop"() : () -> ()
    %cst_27 = arith.constant 0.353553385 : f32
    %76 = vector.broadcast %cst_27 : f32 to vector<1x8x8xf32>
    %77 = arith.mulf %75, %76 : vector<1x8x8xf32>
    %cst_28 = arith.constant dense<0xFF800000> : vector<1x8xf32>
    %78 = vector.multi_reduction <maximumf>, %77, %cst_28 [2] : vector<1x8x8xf32> to vector<1x8xf32>
    %79 = vector.shape_cast %78 : vector<1x8xf32> to vector<1x8x1xf32>
    %80 = vector.broadcast %79 : vector<1x8x1xf32> to vector<1x8x8xf32>
    %81 = arith.subf %77, %80 : vector<1x8x8xf32>
    %82 = math.exp %81 : vector<1x8x8xf32>
    %cst_29 = arith.constant dense<0.000000e+00> : vector<1x8xf32>
    %83 = vector.multi_reduction <add>, %82, %cst_29 [2] : vector<1x8x8xf32> to vector<1x8xf32>
    %84 = vector.shape_cast %83 : vector<1x8xf32> to vector<1x8x1xf32>
    %85 = tpu.reciprocal %84 {approx = true} : vector<1x8x1xf32> -> vector<1x8x1xf32>
    %86 = vector.broadcast %85 : vector<1x8x1xf32> to vector<1x8x8xf32>
    %87 = arith.mulf %82, %86 : vector<1x8x8xf32>
    %88 = arith.truncf %87 : vector<1x8x8xf32> to vector<1x8x8xbf16>
    "tpu.trace_start"() <{level = 10 : i32, message = "bqk,bkd->bqd"}> : () -> ()
    %cst_30 = arith.constant dense<0.000000e+00> : vector<1x8x8xf32>
    %89 = tpu.matmul %88, %74, %cst_30 {dimension_numbers = #tpu.dot_dimension_numbers<[2], [1], [1], [2], [0, 0, 0, 1, 1, 2], [0], [0]>} : vector<1x8x8xbf16>, vector<1x8x8xbf16>, vector<1x8x8xf32> -> vector<1x8x8xf32>
    "tpu.trace_stop"() : () -> ()
    %90 = arith.truncf %89 : vector<1x8x8xf32> to vector<1x8x8xbf16>
    %91 = vector.extract_strided_slice %33 {offsets = [0, 0, 24], sizes = [1, 8, 8], strides = [1, 1, 1]} : vector<1x8x96xbf16> to vector<1x8x8xbf16>
    %92 = vector.extract_strided_slice %33 {offsets = [0, 0, 56], sizes = [1, 8, 8], strides = [1, 1, 1]} : vector<1x8x96xbf16> to vector<1x8x8xbf16>
    %93 = vector.extract_strided_slice %33 {offsets = [0, 0, 88], sizes = [1, 8, 8], strides = [1, 1, 1]} : vector<1x8x96xbf16> to vector<1x8x8xbf16>
    "tpu.trace_start"() <{level = 10 : i32, message = "bqd,bkd->bqk"}> : () -> ()
    %cst_31 = arith.constant dense<0.000000e+00> : vector<1x8x8xf32>
    %94 = tpu.matmul %91, %92, %cst_31 {dimension_numbers = #tpu.dot_dimension_numbers<[2], [2], [1], [1], [0, 0, 0, 1, 1, 1], [0], [0]>} : vector<1x8x8xbf16>, vector<1x8x8xbf16>, vector<1x8x8xf32> -> vector<1x8x8xf32>
    "tpu.trace_stop"() : () -> ()
    %cst_32 = arith.constant 0.353553385 : f32
    %95 = vector.broadcast %cst_32 : f32 to vector<1x8x8xf32>
    %96 = arith.mulf %94, %95 : vector<1x8x8xf32>
    %cst_33 = arith.constant dense<0xFF800000> : vector<1x8xf32>
    %97 = vector.multi_reduction <maximumf>, %96, %cst_33 [2] : vector<1x8x8xf32> to vector<1x8xf32>
    %98 = vector.shape_cast %97 : vector<1x8xf32> to vector<1x8x1xf32>
    %99 = vector.broadcast %98 : vector<1x8x1xf32> to vector<1x8x8xf32>
    %100 = arith.subf %96, %99 : vector<1x8x8xf32>
    %101 = math.exp %100 : vector<1x8x8xf32>
    %cst_34 = arith.constant dense<0.000000e+00> : vector<1x8xf32>
    %102 = vector.multi_reduction <add>, %101, %cst_34 [2] : vector<1x8x8xf32> to vector<1x8xf32>
    %103 = vector.shape_cast %102 : vector<1x8xf32> to vector<1x8x1xf32>
    %104 = tpu.reciprocal %103 {approx = true} : vector<1x8x1xf32> -> vector<1x8x1xf32>
    %105 = vector.broadcast %104 : vector<1x8x1xf32> to vector<1x8x8xf32>
    %106 = arith.mulf %101, %105 : vector<1x8x8xf32>
    %107 = arith.truncf %106 : vector<1x8x8xf32> to vector<1x8x8xbf16>
    "tpu.trace_start"() <{level = 10 : i32, message = "bqk,bkd->bqd"}> : () -> ()
    %cst_35 = arith.constant dense<0.000000e+00> : vector<1x8x8xf32>
    %108 = tpu.matmul %107, %93, %cst_35 {dimension_numbers = #tpu.dot_dimension_numbers<[2], [1], [1], [2], [0, 0, 0, 1, 1, 2], [0], [0]>} : vector<1x8x8xbf16>, vector<1x8x8xbf16>, vector<1x8x8xf32> -> vector<1x8x8xf32>
    "tpu.trace_stop"() : () -> ()
    %109 = arith.truncf %108 : vector<1x8x8xf32> to vector<1x8x8xbf16>
    %110 = tpu.concatenate %52, %71, %90, %109 in 2 : vector<1x8x8xbf16>, vector<1x8x8xbf16>, vector<1x8x8xbf16>, vector<1x8x8xbf16> -> vector<1x8x32xbf16>
    %111 = vector.shape_cast %110 : vector<1x8x32xbf16> to vector<8x32xbf16>
    %c0_36 = arith.constant 0 : index
    %c0_37 = arith.constant 0 : index
    %112 = vector.load %arg6[%c0_36, %c0_37] : memref<32x32xbf16, #tpu.memory_space<vmem>>, vector<32x32xbf16>
    %cst_38 = arith.constant dense<0.000000e+00> : vector<8x32xf32>
    %113 = tpu.matmul %111, %112, %cst_38 {dimension_numbers = #tpu.dot_dimension_numbers<[1], [0], [0], [1], [0, 0, 1, 1], [], []>} : vector<8x32xbf16>, vector<32x32xbf16>, vector<8x32xf32> -> vector<8x32xf32>
    %c0_39 = arith.constant 0 : index
    %c0_40 = arith.constant 0 : index
    %114 = vector.load %arg7[%c0_39, %c0_40] : memref<1x32xf32, #tpu.memory_space<vmem>>, vector<1x32xf32>
    %115 = vector.broadcast %114 : vector<1x32xf32> to vector<8x32xf32>
    %116 = arith.addf %113, %115 : vector<8x32xf32>
    %117 = arith.addf %1, %116 : vector<8x32xf32>
    %c0_41 = arith.constant 0 : index
    %c0_42 = arith.constant 0 : index
    %118 = vector.load %arg8[%c0_41, %c0_42] : memref<1x32xf32, #tpu.memory_space<vmem>>, vector<1x32xf32>
    %c0_43 = arith.constant 0 : index
    %c0_44 = arith.constant 0 : index
    %119 = vector.load %arg9[%c0_43, %c0_44] : memref<1x32xf32, #tpu.memory_space<vmem>>, vector<1x32xf32>
    %cst_45 = arith.constant dense<0.000000e+00> : vector<8xf32>
    %120 = vector.multi_reduction <add>, %117, %cst_45 [1] : vector<8x32xf32> to vector<8xf32>
    %121 = vector.shape_cast %120 : vector<8xf32> to vector<8x1xf32>
    %cst_46 = arith.constant 3.200000e+01 : f32
    %122 = vector.broadcast %cst_46 : f32 to vector<8x1xf32>
    %123 = arith.divf %121, %122 : vector<8x1xf32>
    %124 = vector.broadcast %123 : vector<8x1xf32> to vector<8x32xf32>
    %125 = arith.subf %117, %124 : vector<8x32xf32>
    %126 = arith.mulf %125, %125 : vector<8x32xf32>
    %cst_47 = arith.constant dense<0.000000e+00> : vector<8xf32>
    %127 = vector.multi_reduction <add>, %126, %cst_47 [1] : vector<8x32xf32> to vector<8xf32>
    %128 = vector.shape_cast %127 : vector<8xf32> to vector<8x1xf32>
    %cst_48 = arith.constant 3.200000e+01 : f32
    %129 = vector.broadcast %cst_48 : f32 to vector<8x1xf32>
    %130 = arith.divf %128, %129 : vector<8x1xf32>
    %131 = vector.broadcast %123 : vector<8x1xf32> to vector<8x32xf32>
    %132 = arith.subf %117, %131 : vector<8x32xf32>
    %cst_49 = arith.constant 9.99999974E-6 : f32
    %133 = vector.broadcast %cst_49 : f32 to vector<8x1xf32>
    %134 = arith.addf %130, %133 : vector<8x1xf32>
    %135 = math.rsqrt %134 : vector<8x1xf32>
    %136 = vector.broadcast %135 : vector<8x1xf32> to vector<8x32xf32>
    %137 = arith.mulf %132, %136 : vector<8x32xf32>
    %138 = vector.broadcast %118 : vector<1x32xf32> to vector<8x32xf32>
    %139 = arith.mulf %137, %138 : vector<8x32xf32>
    %140 = vector.broadcast %119 : vector<1x32xf32> to vector<8x32xf32>
    %141 = arith.addf %139, %140 : vector<8x32xf32>
    %142 = arith.truncf %141 : vector<8x32xf32> to vector<8x32xbf16>
    %c0_50 = arith.constant 0 : index
    %c0_51 = arith.constant 0 : index
    %143 = vector.load %arg10[%c0_50, %c0_51] : memref<32x32xbf16, #tpu.memory_space<vmem>>, vector<32x32xbf16>
    %cst_52 = arith.constant dense<0.000000e+00> : vector<8x32xf32>
    %144 = tpu.matmul %142, %143, %cst_52 {dimension_numbers = #tpu.dot_dimension_numbers<[1], [0], [0], [1], [0, 0, 1, 1], [], []>} : vector<8x32xbf16>, vector<32x32xbf16>, vector<8x32xf32> -> vector<8x32xf32>
    %c0_53 = arith.constant 0 : index
    %c0_54 = arith.constant 0 : index
    %145 = vector.load %arg11[%c0_53, %c0_54] : memref<1x32xf32, #tpu.memory_space<vmem>>, vector<1x32xf32>
    %146 = vector.broadcast %145 : vector<1x32xf32> to vector<8x32xf32>
    %147 = arith.addf %144, %146 : vector<8x32xf32>
    %cst_55 = arith.constant 5.000000e-01 : f32
    %148 = vector.broadcast %cst_55 : f32 to vector<8x32xf32>
    %149 = arith.mulf %148, %147 : vector<8x32xf32>
    %cst_56 = arith.constant 1.41421354 : f32
    %150 = vector.broadcast %cst_56 : f32 to vector<8x32xf32>
    %151 = arith.divf %147, %150 : vector<8x32xf32>
    %152 = math.erf %151 : vector<8x32xf32>
    %cst_57 = arith.constant 1.000000e+00 : f32
    %153 = vector.broadcast %cst_57 : f32 to vector<8x32xf32>
    %154 = arith.addf %153, %152 : vector<8x32xf32>
    %155 = arith.mulf %149, %154 : vector<8x32xf32>
    %156 = arith.truncf %155 : vector<8x32xf32> to vector<8x32xbf16>
    %c0_58 = arith.constant 0 : index
    %c0_59 = arith.constant 0 : index
    %157 = vector.load %arg12[%c0_58, %c0_59] : memref<32x32xbf16, #tpu.memory_space<vmem>>, vector<32x32xbf16>
    %cst_60 = arith.constant dense<0.000000e+00> : vector<8x32xf32>
    %158 = tpu.matmul %156, %157, %cst_60 {dimension_numbers = #tpu.dot_dimension_numbers<[1], [0], [0], [1], [0, 0, 1, 1], [], []>} : vector<8x32xbf16>, vector<32x32xbf16>, vector<8x32xf32> -> vector<8x32xf32>
    %c0_61 = arith.constant 0 : index
    %c0_62 = arith.constant 0 : index
    %159 = vector.load %arg13[%c0_61, %c0_62] : memref<1x32xf32, #tpu.memory_space<vmem>>, vector<1x32xf32>
    %160 = vector.broadcast %159 : vector<1x32xf32> to vector<8x32xf32>
    %161 = arith.addf %158, %160 : vector<8x32xf32>
    %162 = arith.addf %117, %161 : vector<8x32xf32>
    %163 = vector.shape_cast %162 : vector<8x32xf32> to vector<1x8x32xf32>
    %c0_63 = arith.constant 0 : index
    %c0_64 = arith.constant 0 : index
    %c0_65 = arith.constant 0 : index
    %164 = vector.load %arg14[%c0_63, %c0_64, %c0_65] : memref<1x8x32xf32, #tpu.memory_space<vmem>>, vector<1x8x32xf32>
    tpu.vector_store %arg14[%c0_63, %c0_64, %c0_65], %163 {strides = array<i32>} : memref<1x8x32xf32, #tpu.memory_space<vmem>>, vector<1x8x32xf32>,
    return
  }
  func.func @transform_0(%arg0: i32) -> (i32, i32, i32) {
    %c0_i32 = arith.constant 0 : i32
    %c0_i32_0 = arith.constant 0 : i32
    %c0_i32_1 = arith.constant 0 : i32
    return %arg0, %c0_i32, %c0_i32_0 : i32, i32, i32
  }
  func.func @transform_1(%arg0: i32) -> (i32, i32, i32) {
    %c0_i32 = arith.constant 0 : i32
    %c0_i32_0 = arith.constant 0 : i32
    %c0_i32_1 = arith.constant 0 : i32
    return %arg0, %c0_i32, %c0_i32_0 : i32, i32, i32
  }
  func.func @transform_2(%arg0: i32) -> (i32, i32) {
    %c0_i32 = arith.constant 0 : i32
    %c0_i32_0 = arith.constant 0 : i32
    %c0_i32_1 = arith.constant 0 : i32
    return %c0_i32, %c0_i32_0 : i32, i32
  }
  func.func @transform_3(%arg0: i32) -> (i32, i32) {
    %c0_i32 = arith.constant 0 : i32
    %c0_i32_0 = arith.constant 0 : i32
    %c0_i32_1 = arith.constant 0 : i32
    return %c0_i32, %c0_i32_0 : i32, i32
  }
  func.func @transform_4(%arg0: i32) -> (i32, i32) {
    %c0_i32 = arith.constant 0 : i32
    %c0_i32_0 = arith.constant 0 : i32
    %c0_i32_1 = arith.constant 0 : i32
    return %c0_i32, %c0_i32_0 : i32, i32
  }
  func.func @transform_5(%arg0: i32) -> (i32, i32) {
    %c0_i32 = arith.constant 0 : i32
    %c0_i32_0 = arith.constant 0 : i32
    %c0_i32_1 = arith.constant 0 : i32
    return %c0_i32, %c0_i32_0 : i32, i32
  }
  func.func @transform_6(%arg0: i32) -> (i32, i32) {
    %c0_i32 = arith.constant 0 : i32
    %c0_i32_0 = arith.constant 0 : i32
    %c0_i32_1 = arith.constant 0 : i32
    return %c0_i32, %c0_i32_0 : i32, i32
  }
  func.func @transform_7(%arg0: i32) -> (i32, i32) {
    %c0_i32 = arith.constant 0 : i32
    %c0_i32_0 = arith.constant 0 : i32
    %c0_i32_1 = arith.constant 0 : i32
    return %c0_i32, %c0_i32_0 : i32, i32
  }
  func.func @transform_8(%arg0: i32) -> (i32, i32) {
    %c0_i32 = arith.constant 0 : i32
    %c0_i32_0 = arith.constant 0 : i32
    %c0_i32_1 = arith.constant 0 : i32
    return %c0_i32, %c0_i32_0 : i32, i32
  }
  func.func @transform_9(%arg0: i32) -> (i32, i32) {
    %c0_i32 = arith.constant 0 : i32
    %c0_i32_0 = arith.constant 0 : i32
    %c0_i32_1 = arith.constant 0 : i32
    return %c0_i32, %c0_i32_0 : i32, i32
  }
  func.func @transform_10(%arg0: i32) -> (i32, i32) {
    %c0_i32 = arith.constant 0 : i32
    %c0_i32_0 = arith.constant 0 : i32
    %c0_i32_1 = arith.constant 0 : i32
    return %c0_i32, %c0_i32_0 : i32, i32
  }
  func.func @transform_11(%arg0: i32) -> (i32, i32) {
    %c0_i32 = arith.constant 0 : i32
    %c0_i32_0 = arith.constant 0 : i32
    %c0_i32_1 = arith.constant 0 : i32
    return %c0_i32, %c0_i32_0 : i32, i32
  }
  func.func @transform_12(%arg0: i32) -> (i32, i32) {
    %c0_i32 = arith.constant 0 : i32
    %c0_i32_0 = arith.constant 0 : i32
    %c0_i32_1 = arith.constant 0 : i32
    return %c0_i32, %c0_i32_0 : i32, i32
  }
  func.func @transform_13(%arg0: i32) -> (i32, i32, i32) {
    %c0_i32 = arith.constant 0 : i32
    %c0_i32_0 = arith.constant 0 : i32
    %c0_i32_1 = arith.constant 0 : i32
    return %arg0, %c0_i32, %c0_i32_0 : i32, i32, i32
  }
}

</mosaic_0001>

<llo_original>
// kernel: tpu_custom_call.1
$region0: #{tpu_custom_call.1}
  #allocation0 [shape = 'u32[]', space=smem, size = 0x4, offset = 0x4, fixed_abs, tag = 'smem constant byte address 0x4 - core index']
  #allocation1 [shape = 'u32[144,128]{1,0:T(1,128)}', space=vmem, size = 0x12000, scoped, tag = 'internal scratch']
  %s0 = inlined_call_operand.hbm [shape: f32[2,8,32], index: 0, kind: input, shape index: {}]
  %s1 = inlined_call_operand.hbm [shape: f32[2,8,32], index: 1, kind: input, shape index: {}]
  %s2 = inlined_call_operand.vmem [shape: f32[1,32], index: 2, kind: input, shape index: {}]
  %s3 = inlined_call_operand.vmem [shape: f32[1,32], index: 3, kind: input, shape index: {}]
  %s4 = inlined_call_operand.hbm [shape: bf16[32,96], index: 4, kind: input, shape index: {}]
  %s5 = inlined_call_operand.vmem [shape: bf16[32,32], index: 5, kind: input, shape index: {}]
  %s6 = inlined_call_operand.hbm [shape: f32[1,32], index: 6, kind: input, shape index: {}]
  %s7 = inlined_call_operand.hbm [shape: f32[1,32], index: 7, kind: input, shape index: {}]
  %s8 = inlined_call_operand.hbm [shape: f32[1,32], index: 8, kind: input, shape index: {}]
  %s9 = inlined_call_operand.vmem [shape: bf16[32,32], index: 9, kind: input, shape index: {}]
  %s10 = inlined_call_operand.vmem [shape: f32[1,32], index: 10, kind: input, shape index: {}]
  %s11 = inlined_call_operand.hbm [shape: bf16[32,32], index: 11, kind: input, shape index: {}]
  %s12 = inlined_call_operand.vmem [shape: f32[1,32], index: 12, kind: input, shape index: {}]
  %s13 = inlined_call_operand.hbm [shape: f32[2,8,32], index: 13, kind: output, shape index: {}]
  %s14 = sld [smem:[#allocation0]]
  $region113: #{tpu_custom_call.1} parent=0
    _
  %s16 = ssub.s32 1, %s14
  %s17 = scalar_select 0, %s16, %s14
  $region1: #{tpu_custom_call.1} parent=0
    #allocation2 [shape = 'u8[8192]{0}', space=vmem, size = 0x2000, scoped, tag = 'input window, operand 0']
    #allocation3 [shape = 's32[2]{0}', space=sflag, size = 0x8, scoped, tag = 'scoped memory for tpu_custom_call.1']
    #allocation4 [shape = 's32[2]{0}', space=sflag, size = 0x8, scoped, tag = 'scoped memory for tpu_custom_call.1']
    #allocation5 [shape = 'u8[8192]{0}', space=vmem, size = 0x2000, scoped, tag = 'input window, operand 1']
    #allocation6 [shape = 's32[2]{0}', space=sflag, size = 0x8, scoped, tag = 'scoped memory for tpu_custom_call.1']
    #allocation7 [shape = 'u8[8192]{0}', space=vmem, size = 0x2000, scoped, tag = 'input window, operand 4, single buffered']
    #allocation8 [shape = 'u8[512]{0}', space=vmem, size = 0x400, scoped, tag = 'input window, operand 6, single buffered']
    #allocation9 [shape = 's32[1]{0}', space=sflag, size = 0x4, scoped, tag = 'scoped memory for tpu_custom_call.1']
    #allocation10 [shape = 'u8[512]{0}', space=vmem, size = 0x400, scoped, tag = 'input window, operand 7, single buffered']
    #allocation11 [shape = 'u8[512]{0}', space=vmem, size = 0x400, scoped, tag = 'input window, operand 8, single buffered']
    #allocation12 [shape = 's32[1]{0}', space=sflag, size = 0x4, scoped, tag = 'scoped memory for tpu_custom_call.1']
    #allocation13 [shape = 'u8[8192]{0}', space=vmem, size = 0x2000, scoped, tag = 'input window, operand 11, single buffered']
    #allocation14 [shape = 'u8[8192]{0}', space=vmem, size = 0x2000, scoped, tag = 'output window, operand 0']
    %18 = vsyncpa [#allocation3], 0
    %s19 = scalar_lea.sflag [#allocation3], 1
    %20 = vsyncpa %s19, 0
    %21 = vsyncpa [#allocation6], 0
    %s22 = scalar_lea.sflag [#allocation6], 1
    %23 = vsyncpa %s22, 0
    %24 = vsyncpa [#allocation9], 0
    %25 = vsyncpa [#allocation12], 0
    %26 = vsyncpa [#allocation4], 0
    %s27 = scalar_lea.sflag [#allocation4], 1
    %28 = vsyncpa %s27, 0
    loop: start=0, step=1, limit=4
    $region2: #{tpu_custom_call.1} parent=1 // loop_pre_header
      _
    $region3: #{tpu_custom_call.1} parent=1 // loop_header
      %s30 = sphi 0, %s34
      %p31 = scmp.ge.s32.totalorder %s30, 4
      %s40 = sphi 0, %s42
      %s43 = sphi 0, %s40
      %s44 = sphi 0, %s43
      %s60 = sphi 0, %s44
      %s66 = sphi 0, %s68
      %s69 = sphi 0, %s66
      %s70 = sphi 0, %s69
      %s86 = sphi 0, %s70
      %s90 = sphi 0, %s90
      %s92 = sphi 0, %s90
      %s93 = sphi 0, %s92
      %s107 = sphi 0, %s93
      %s111 = sphi 0, %s111
      %s113 = sphi 0, %s111
      %s114 = sphi 0, %s113
      %s128 = sphi 0, %s114
      %s132 = sphi 0, %s132
      %s134 = sphi 0, %s132
      %s135 = sphi 0, %s134
      %s149 = sphi 0, %s135
      %s153 = sphi 0, %s153
      %s155 = sphi 0, %s153
      %s156 = sphi 0, %s155
      %s170 = sphi 0, %s156
      %s174 = sphi 0, %s174
      %s176 = sphi 0, %s174
      %s177 = sphi 0, %s176
      %s191 = sphi 0, %s177
      %s195 = sphi 0, %s195
      %s197 = sphi 0, %s195
      %s198 = sphi 0, %s197
      %s212 = sphi 0, %s198
      %s216 = sphi 0, %s216
      %s218 = sphi 0, %s216
      %s219 = sphi 0, %s218
      %s233 = sphi 0, %s219
      %s237 = sphi 0, %s237
      %s239 = sphi 0, %s237
      %s240 = sphi 0, %s239
      %s254 = sphi 0, %s240
      %s258 = sphi 0, %s258
      %s260 = sphi 0, %s258
      %s261 = sphi 0, %s260
      %s275 = sphi 0, %s261
      %s279 = sphi 0, %s279
      %s281 = sphi 0, %s279
      %s282 = sphi 0, %s281
      %s296 = sphi 0, %s282
      %s300 = sphi 0, %s300
      %s302 = sphi 0, %s300
      %s303 = sphi 0, %s302
      %s317 = sphi 0, %s303
      %s323 = sphi 0, %s325
      %s326 = sphi 0, %s323
      %s327 = sphi 0, %s326
      %s343 = sphi 0, %s327
    $region4: #{tpu_custom_call.1} parent=1 // loop_header_branch
      %33 = sbr.rel (%p31) target = $region8
    $region5: #{tpu_custom_call.1} parent=1 // loop_body
      %s35 = ssub.s32 %s30, 1
      %s36 = ssub.s32 %s30, 2
      %s37 = sadd.s32 %s30, 1
      %s38 = ssub.s32 %s30, %s37
      %p39 = scmp.eq.s32.totalorder %s38, 0
      %s41 = sadd.s32 %s40, 1
      %s42 = scalar_select %p39, %s40, %s41
      %p45 = pneg %p39
      %p46 = scmp.eq.s32.totalorder %s30, 1
      %p47 = por %p45, %p46
      %p48 = scmp.ne.s32.totalorder %s40, %s43
      %p49 = scmp.eq.s32.totalorder %s30, 0
      %p50 = por %p48, %p49
      %p51 = scmp.ne.s32.totalorder %s40, %s43
      %p52 = scmp.eq.s32.totalorder %s35, 1
      %p53 = por %p51, %p52
      %p54 = scmp.ne.s32.totalorder %s43, %s44
      %p55 = scmp.eq.s32.totalorder %s35, 0
      %p56 = por %p54, %p55
      %p57 = scmp.ne.s32.totalorder %s43, %s44
      %p58 = scmp.eq.s32.totalorder %s36, 1
      %p59 = por %p57, %p58
      %p61 = scmp.ne.s32.totalorder %s44, %s60
      %p62 = scmp.eq.s32.totalorder %s36, 0
      %p63 = por %p61, %p62
      %s64 = ssub.s32 %s30, %s37
      %p65 = scmp.eq.s32.totalorder %s64, 0
      %s67 = sadd.s32 %s66, 1
      %s68 = scalar_select %p65, %s66, %s67
      %p71 = pneg %p65
      %p72 = scmp.eq.s32.totalorder %s30, 1
      %p73 = por %p71, %p72
      %p74 = scmp.ne.s32.totalorder %s66, %s69
      %p75 = scmp.eq.s32.totalorder %s30, 0
      %p76 = por %p74, %p75
      %p77 = scmp.ne.s32.totalorder %s66, %s69
      %p78 = scmp.eq.s32.totalorder %s35, 1
      %p79 = por %p77, %p78
      %p80 = scmp.ne.s32.totalorder %s69, %s70
      %p81 = scmp.eq.s32.totalorder %s35, 0
      %p82 = por %p80, %p81
      %p83 = scmp.ne.s32.totalorder %s69, %s70
      %p84 = scmp.eq.s32.totalorder %s36, 1
      %p85 = por %p83, %p84
      %p87 = scmp.ne.s32.totalorder %s70, %s86
      %p88 = scmp.eq.s32.totalorder %s36, 0
      %p89 = por %p87, %p88
      %s91 = sadd.s32 %s90, 1
      %p94 = scmp.eq.s32.totalorder %s30, 1
      %p95 = scmp.ne.s32.totalorder %s90, %s92
      %p96 = scmp.eq.s32.totalorder %s30, 0
      %p97 = por %p95, %p96
      %p98 = scmp.ne.s32.totalorder %s90, %s92
      %p99 = scmp.eq.s32.totalorder %s35, 1
      %p100 = por %p98, %p99
      %p101 = scmp.ne.s32.totalorder %s92, %s93
      %p102 = scmp.eq.s32.totalorder %s35, 0
      %p103 = por %p101, %p102
      %p104 = scmp.ne.s32.totalorder %s92, %s93
      %p105 = scmp.eq.s32.totalorder %s36, 1
      %p106 = por %p104, %p105
      %p108 = scmp.ne.s32.totalorder %s93, %s107
      %p109 = scmp.eq.s32.totalorder %s36, 0
      %p110 = por %p108, %p109
      %s112 = sadd.s32 %s111, 1
      %p115 = scmp.eq.s32.totalorder %s30, 1
      %p116 = scmp.ne.s32.totalorder %s111, %s113
      %p117 = scmp.eq.s32.totalorder %s30, 0
      %p118 = por %p116, %p117
      %p119 = scmp.ne.s32.totalorder %s111, %s113
      %p120 = scmp.eq.s32.totalorder %s35, 1
      %p121 = por %p119, %p120
      %p122 = scmp.ne.s32.totalorder %s113, %s114
      %p123 = scmp.eq.s32.totalorder %s35, 0
      %p124 = por %p122, %p123
      %p125 = scmp.ne.s32.totalorder %s113, %s114
      %p126 = scmp.eq.s32.totalorder %s36, 1
      %p127 = por %p125, %p126
      %p129 = scmp.ne.s32.totalorder %s114, %s128
      %p130 = scmp.eq.s32.totalorder %s36, 0
      %p131 = por %p129, %p130
      %s133 = sadd.s32 %s132, 1
      %p136 = scmp.eq.s32.totalorder %s30, 1
      %p137 = scmp.ne.s32.totalorder %s132, %s134
      %p138 = scmp.eq.s32.totalorder %s30, 0
      %p139 = por %p137, %p138
      %p140 = scmp.ne.s32.totalorder %s132, %s134
      %p141 = scmp.eq.s32.totalorder %s35, 1
      %p142 = por %p140, %p141
      %p143 = scmp.ne.s32.totalorder %s134, %s135
      %p144 = scmp.eq.s32.totalorder %s35, 0
      %p145 = por %p143, %p144
      %p146 = scmp.ne.s32.totalorder %s134, %s135
      %p147 = scmp.eq.s32.totalorder %s36, 1
      %p148 = por %p146, %p147
      %p150 = scmp.ne.s32.totalorder %s135, %s149
      %p151 = scmp.eq.s32.totalorder %s36, 0
      %p152 = por %p150, %p151
      %s154 = sadd.s32 %s153, 1
      %p157 = scmp.eq.s32.totalorder %s30, 1
      %p158 = scmp.ne.s32.totalorder %s153, %s155
      %p159 = scmp.eq.s32.totalorder %s30, 0
      %p160 = por %p158, %p159
      %p161 = scmp.ne.s32.totalorder %s153, %s155
      %p162 = scmp.eq.s32.totalorder %s35, 1
      %p163 = por %p161, %p162
      %p164 = scmp.ne.s32.totalorder %s155, %s156
      %p165 = scmp.eq.s32.totalorder %s35, 0
      %p166 = por %p164, %p165
      %p167 = scmp.ne.s32.totalorder %s155, %s156
      %p168 = scmp.eq.s32.totalorder %s36, 1
      %p169 = por %p167, %p168
      %p171 = scmp.ne.s32.totalorder %s156, %s170
      %p172 = scmp.eq.s32.totalorder %s36, 0
      %p173 = por %p171, %p172
      %s175 = sadd.s32 %s174, 1
      %p178 = scmp.eq.s32.totalorder %s30, 1
      %p179 = scmp.ne.s32.totalorder %s174, %s176
      %p180 = scmp.eq.s32.totalorder %s30, 0
      %p181 = por %p179, %p180
      %p182 = scmp.ne.s32.totalorder %s174, %s176
      %p183 = scmp.eq.s32.totalorder %s35, 1
      %p184 = por %p182, %p183
      %p185 = scmp.ne.s32.totalorder %s176, %s177
      %p186 = scmp.eq.s32.totalorder %s35, 0
      %p187 = por %p185, %p186
      %p188 = scmp.ne.s32.totalorder %s176, %s177
      %p189 = scmp.eq.s32.totalorder %s36, 1
      %p190 = por %p188, %p189
      %p192 = scmp.ne.s32.totalorder %s177, %s191
      %p193 = scmp.eq.s32.totalorder %s36, 0
      %p194 = por %p192, %p193
      %s196 = sadd.s32 %s195, 1
      %p199 = scmp.eq.s32.totalorder %s30, 1
      %p200 = scmp.ne.s32.totalorder %s195, %s197
      %p201 = scmp.eq.s32.totalorder %s30, 0
      %p202 = por %p200, %p201
      %p203 = scmp.ne.s32.totalorder %s195, %s197
      %p204 = scmp.eq.s32.totalorder %s35, 1
      %p205 = por %p203, %p204
      %p206 = scmp.ne.s32.totalorder %s197, %s198
      %p207 = scmp.eq.s32.totalorder %s35, 0
      %p208 = por %p206, %p207
      %p209 = scmp.ne.s32.totalorder %s197, %s198
      %p210 = scmp.eq.s32.totalorder %s36, 1
      %p211 = por %p209, %p210
      %p213 = scmp.ne.s32.totalorder %s198, %s212
      %p214 = scmp.eq.s32.totalorder %s36, 0
      %p215 = por %p213, %p214
      %s217 = sadd.s32 %s216, 1
      %p220 = scmp.eq.s32.totalorder %s30, 1
      %p221 = scmp.ne.s32.totalorder %s216, %s218
      %p222 = scmp.eq.s32.totalorder %s30, 0
      %p223 = por %p221, %p222
      %p224 = scmp.ne.s32.totalorder %s216, %s218
      %p225 = scmp.eq.s32.totalorder %s35, 1
      %p226 = por %p224, %p225
      %p227 = scmp.ne.s32.totalorder %s218, %s219
      %p228 = scmp.eq.s32.totalorder %s35, 0
      %p229 = por %p227, %p228
      %p230 = scmp.ne.s32.totalorder %s218, %s219
      %p231 = scmp.eq.s32.totalorder %s36, 1
      %p232 = por %p230, %p231
      %p234 = scmp.ne.s32.totalorder %s219, %s233
      %p235 = scmp.eq.s32.totalorder %s36, 0
      %p236 = por %p234, %p235
      %s238 = sadd.s32 %s237, 1
      %p241 = scmp.eq.s32.totalorder %s30, 1
      %p242 = scmp.ne.s32.totalorder %s237, %s239
      %p243 = scmp.eq.s32.totalorder %s30, 0
      %p244 = por %p242, %p243
      %p245 = scmp.ne.s32.totalorder %s237, %s239
      %p246 = scmp.eq.s32.totalorder %s35, 1
      %p247 = por %p245, %p246
      %p248 = scmp.ne.s32.totalorder %s239, %s240
      %p249 = scmp.eq.s32.totalorder %s35, 0
      %p250 = por %p248, %p249
      %p251 = scmp.ne.s32.totalorder %s239, %s240
      %p252 = scmp.eq.s32.totalorder %s36, 1
      %p253 = por %p251, %p252
      %p255 = scmp.ne.s32.totalorder %s240, %s254
      %p256 = scmp.eq.s32.totalorder %s36, 0
      %p257 = por %p255, %p256
      %s259 = sadd.s32 %s258, 1
      %p262 = scmp.eq.s32.totalorder %s30, 1
      %p263 = scmp.ne.s32.totalorder %s258, %s260
      %p264 = scmp.eq.s32.totalorder %s30, 0
      %p265 = por %p263, %p264
      %p266 = scmp.ne.s32.totalorder %s258, %s260
      %p267 = scmp.eq.s32.totalorder %s35, 1
      %p268 = por %p266, %p267
      %p269 = scmp.ne.s32.totalorder %s260, %s261
      %p270 = scmp.eq.s32.totalorder %s35, 0
      %p271 = por %p269, %p270
      %p272 = scmp.ne.s32.totalorder %s260, %s261
      %p273 = scmp.eq.s32.totalorder %s36, 1
      %p274 = por %p272, %p273
      %p276 = scmp.ne.s32.totalorder %s261, %s275
      %p277 = scmp.eq.s32.totalorder %s36, 0
      %p278 = por %p276, %p277
      %s280 = sadd.s32 %s279, 1
      %p283 = scmp.eq.s32.totalorder %s30, 1
      %p284 = scmp.ne.s32.totalorder %s279, %s281
      %p285 = scmp.eq.s32.totalorder %s30, 0
      %p286 = por %p284, %p285
      %p287 = scmp.ne.s32.totalorder %s279, %s281
      %p288 = scmp.eq.s32.totalorder %s35, 1
      %p289 = por %p287, %p288
      %p290 = scmp.ne.s32.totalorder %s281, %s282
      %p291 = scmp.eq.s32.totalorder %s35, 0
      %p292 = por %p290, %p291
      %p293 = scmp.ne.s32.totalorder %s281, %s282
      %p294 = scmp.eq.s32.totalorder %s36, 1
      %p295 = por %p293, %p294
      %p297 = scmp.ne.s32.totalorder %s282, %s296
      %p298 = scmp.eq.s32.totalorder %s36, 0
      %p299 = por %p297, %p298
      %s301 = sadd.s32 %s300, 1
      %p304 = scmp.eq.s32.totalorder %s30, 1
      %p305 = scmp.ne.s32.totalorder %s300, %s302
      %p306 = scmp.eq.s32.totalorder %s30, 0
      %p307 = por %p305, %p306
      %p308 = scmp.ne.s32.totalorder %s300, %s302
      %p309 = scmp.eq.s32.totalorder %s35, 1
      %p310 = por %p308, %p309
      %p311 = scmp.ne.s32.totalorder %s302, %s303
      %p312 = scmp.eq.s32.totalorder %s35, 0
      %p313 = por %p311, %p312
      %p314 = scmp.ne.s32.totalorder %s302, %s303
      %p315 = scmp.eq.s32.totalorder %s36, 1
      %p316 = por %p314, %p315
      %p318 = scmp.ne.s32.totalorder %s303, %s317
      %p319 = scmp.eq.s32.totalorder %s36, 0
      %p320 = por %p318, %p319
      %s321 = ssub.s32 %s30, %s37
      %p322 = scmp.eq.s32.totalorder %s321, 0
      %s324 = sadd.s32 %s323, 1
      %s325 = scalar_select %p322, %s323, %s324
      %p328 = pneg %p322
      %p329 = scmp.eq.s32.totalorder %s30, 1
      %p330 = por %p328, %p329
      %p331 = scmp.ne.s32.totalorder %s323, %s326
      %p332 = scmp.eq.s32.totalorder %s30, 0
      %p333 = por %p331, %p332
      %p334 = scmp.ne.s32.totalorder %s323, %s326
      %p335 = scmp.eq.s32.totalorder %s35, 1
      %p336 = por %p334, %p335
      %p337 = scmp.ne.s32.totalorder %s326, %s327
      %p338 = scmp.eq.s32.totalorder %s35, 0
      %p339 = por %p337, %p338
      %p340 = scmp.ne.s32.totalorder %s326, %s327
      %p341 = scmp.eq.s32.totalorder %s36, 1
      %p342 = por %p340, %p341
      %p344 = scmp.ne.s32.totalorder %s327, %s343
      %p345 = scmp.eq.s32.totalorder %s36, 0
      %p346 = por %p344, %p345
      %p347 = scmp.le.s32.totalorder 1, %s30
      %p348 = scmp.lt.s32.totalorder %s30, 3
      %p349 = pnand %p347, %p348
      %p350 = pneg %p349
      // Predicated region
      $region9: #{tpu_custom_call.1} parent=5 // pred_check
        _
      $region10: #{tpu_custom_call.1} parent=5 // pred_check_branch
        %352 = sbr.rel (%p349) target = $region12
      $region11: #{tpu_custom_call.1} parent=5 // pred_region
        %s353 = ssub.s32 %s30, 1
        // Predicated region
        $region13: #{tpu_custom_call.1} parent=11 // pred_check
          %p354 = pneg %p103
        $region14: #{tpu_custom_call.1} parent=11 // pred_check_branch
          %356 = sbr.rel (%p354) target = $region16
        $region15: #{tpu_custom_call.1} parent=11 // pred_region
          _
        $region16: #{tpu_custom_call.1} parent=11 // pred_fallthru
          _
        // Predicated region
        $region17: #{tpu_custom_call.1} parent=11 // pred_check
          %p357 = pneg %p124
        $region18: #{tpu_custom_call.1} parent=11 // pred_check_branch
          %359 = sbr.rel (%p357) target = $region20
        $region19: #{tpu_custom_call.1} parent=11 // pred_region
          _
        $region20: #{tpu_custom_call.1} parent=11 // pred_fallthru
          _
        // Predicated region
        $region21: #{tpu_custom_call.1} parent=11 // pred_check
          %p360 = pneg %p145
        $region22: #{tpu_custom_call.1} parent=11 // pred_check_branch
          %362 = sbr.rel (%p360) target = $region24
        $region23: #{tpu_custom_call.1} parent=11 // pred_region
          %s364 = ssub.s32 256, 256
          %365 = vsyncadd [#allocation6], %s364
          %s366 = sshll.u32 [#allocation7], 4
          %s367 = int_to_ptr.vmem [resolvable:$true] %s366
          %372 = dma.hbm_to_vmem [thread:$0]  %s4, 256, %s367, [#allocation6], 64, 64, 4
        $region24: #{tpu_custom_call.1} parent=11 // pred_fallthru
          _
        // Predicated region
        $region25: #{tpu_custom_call.1} parent=11 // pred_check
          %p373 = pneg %p166
        $region26: #{tpu_custom_call.1} parent=11 // pred_check_branch
          %375 = sbr.rel (%p373) target = $region28
        $region27: #{tpu_custom_call.1} parent=11 // pred_region
          _
        $region28: #{tpu_custom_call.1} parent=11 // pred_fallthru
          _
        // Predicated region
        $region29: #{tpu_custom_call.1} parent=11 // pred_check
          %p376 = pneg %p187
        $region30: #{tpu_custom_call.1} parent=11 // pred_check_branch
          %378 = sbr.rel (%p376) target = $region32
        $region31: #{tpu_custom_call.1} parent=11 // pred_region
          %s380 = ssub.s32 16, 16
          %381 = vsyncadd [#allocation9], %s380
          %s383 = sshll.u32 [#allocation8], 4
          %s384 = int_to_ptr.vmem [resolvable:$true] %s383
          %386 = dma.hbm_to_vmem [thread:$0]  %s6, 16, %s384, [#allocation9]
        $region32: #{tpu_custom_call.1} parent=11 // pred_fallthru
          _
        // Predicated region
        $region33: #{tpu_custom_call.1} parent=11 // pred_check
          %p387 = pneg %p208
        $region34: #{tpu_custom_call.1} parent=11 // pred_check_branch
          %389 = sbr.rel (%p387) target = $region36
        $region35: #{tpu_custom_call.1} parent=11 // pred_region
          %s391 = ssub.s32 16, 16
          %392 = vsyncadd [#allocation9], %s391
          %s394 = sshll.u32 [#allocation10], 4
          %s395 = int_to_ptr.vmem [resolvable:$true] %s394
          %397 = dma.hbm_to_vmem [thread:$0]  %s7, 16, %s395, [#allocation9]
        $region36: #{tpu_custom_call.1} parent=11 // pred_fallthru
          _
        // Predicated region
        $region37: #{tpu_custom_call.1} parent=11 // pred_check
          %p398 = pneg %p229
        $region38: #{tpu_custom_call.1} parent=11 // pred_check_branch
          %400 = sbr.rel (%p398) target = $region40
        $region39: #{tpu_custom_call.1} parent=11 // pred_region
          %s402 = ssub.s32 16, 16
          %403 = vsyncadd [#allocation12], %s402
          %s405 = sshll.u32 [#allocation11], 4
          %s406 = int_to_ptr.vmem [resolvable:$true] %s405
          %408 = dma.hbm_to_vmem [thread:$0]  %s8, 16, %s406, [#allocation12]
        $region40: #{tpu_custom_call.1} parent=11 // pred_fallthru
          _
        // Predicated region
        $region41: #{tpu_custom_call.1} parent=11 // pred_check
          %p409 = pneg %p250
        $region42: #{tpu_custom_call.1} parent=11 // pred_check_branch
          %411 = sbr.rel (%p409) target = $region44
        $region43: #{tpu_custom_call.1} parent=11 // pred_region
          _
        $region44: #{tpu_custom_call.1} parent=11 // pred_fallthru
          _
        // Predicated region
        $region45: #{tpu_custom_call.1} parent=11 // pred_check
          %p412 = pneg %p271
        $region46: #{tpu_custom_call.1} parent=11 // pred_check_branch
          %414 = sbr.rel (%p412) target = $region48
        $region47: #{tpu_custom_call.1} parent=11 // pred_region
          _
        $region48: #{tpu_custom_call.1} parent=11 // pred_fallthru
          _
        // Predicated region
        $region49: #{tpu_custom_call.1} parent=11 // pred_check
          %p415 = pneg %p292
        $region50: #{tpu_custom_call.1} parent=11 // pred_check_branch
          %417 = sbr.rel (%p415) target = $region52
        $region51: #{tpu_custom_call.1} parent=11 // pred_region
          %s419 = ssub.s32 256, 256
          %420 = vsyncadd [#allocation12], %s419
          %s421 = sshll.u32 [#allocation13], 4
          %s422 = int_to_ptr.vmem [resolvable:$true] %s421
          %427 = dma.hbm_to_vmem [thread:$0]  %s11, 256, %s422, [#allocation12], 64, 64, 4
        $region52: #{tpu_custom_call.1} parent=11 // pred_fallthru
          _
        // Predicated region
        $region53: #{tpu_custom_call.1} parent=11 // pred_check
          %p428 = pneg %p313
        $region54: #{tpu_custom_call.1} parent=11 // pred_check_branch
          %430 = sbr.rel (%p428) target = $region56
        $region55: #{tpu_custom_call.1} parent=11 // pred_region
          _
        $region56: #{tpu_custom_call.1} parent=11 // pred_fallthru
          _
      $region12: #{tpu_custom_call.1} parent=5 // pred_fallthru
        _
      %p431 = scmp.lt.s32.totalorder %s30, 2
      // Predicated region
      $region57: #{tpu_custom_call.1} parent=5 // pred_check
        %p432 = pneg %p431
      $region58: #{tpu_custom_call.1} parent=5 // pred_check_branch
        %434 = sbr.rel (%p432) target = $region60
      $region59: #{tpu_custom_call.1} parent=5 // pred_region
        // Predicated region
        $region61: #{tpu_custom_call.1} parent=59 // pred_check
          %p435 = pneg %p50
        $region62: #{tpu_custom_call.1} parent=59 // pred_check_branch
          %437 = sbr.rel (%p435) target = $region64
        $region63: #{tpu_custom_call.1} parent=59 // pred_region
          %s438 = sand.u32 %s40, 1
          %s439 = scalar_lea.sflag [#allocation3], %s438
          %s440 = sand.u32 %s40, 1
          %s441 = smul.addr %s440, 8
          %s442 = scalar_lea.vmem [#allocation2], %s441
          %s444 = ssub.s32 128, 128
          %445 = vsyncadd %s439, %s444
          %s446 = smul.addr %s30, 128
          %s447 = scalar_lea.hbm %s0, %s446
          %s449 = sshll.u32 %s442, 4
          %s450 = int_to_ptr.vmem [resolvable:$true] %s449
          %452 = dma.hbm_to_vmem [thread:$0]  %s447, 128, %s450, %s439
        $region64: #{tpu_custom_call.1} parent=59 // pred_fallthru
          _
        // Predicated region
        $region65: #{tpu_custom_call.1} parent=59 // pred_check
          %p453 = pneg %p76
        $region66: #{tpu_custom_call.1} parent=59 // pred_check_branch
          %455 = sbr.rel (%p453) target = $region68
        $region67: #{tpu_custom_call.1} parent=59 // pred_region
          %s456 = sand.u32 %s30, 1
          %s457 = scalar_lea.sflag [#allocation6], %s456
          %s458 = sand.u32 %s66, 1
          %s459 = smul.addr %s458, 8
          %s460 = scalar_lea.vmem [#allocation5], %s459
          %s462 = ssub.s32 128, 128
          %463 = vsyncadd %s457, %s462
          %s464 = smul.addr %s30, 128
          %s465 = scalar_lea.hbm %s1, %s464
          %s467 = sshll.u32 %s460, 4
          %s468 = int_to_ptr.vmem [resolvable:$true] %s467
          %470 = dma.hbm_to_vmem [thread:$0]  %s465, 128, %s468, %s457
        $region68: #{tpu_custom_call.1} parent=59 // pred_fallthru
          _
      $region60: #{tpu_custom_call.1} parent=5 // pred_fallthru
        _
      %p471 = scmp.le.s32.totalorder 1, %s30
      %p472 = scmp.lt.s32.totalorder %s30, 3
      %p473 = pnand %p471, %p472
      %p474 = pneg %p473
      // Predicated region
      $region69: #{tpu_custom_call.1} parent=5 // pred_check
        _
      $region70: #{tpu_custom_call.1} parent=5 // pred_check_branch
        %476 = sbr.rel (%p473) target = $region72
      $region71: #{tpu_custom_call.1} parent=5 // pred_region
        %s477 = ssub.s32 %s30, 1
        %s478 = sand.u32 %s43, 1
        %s479 = scalar_lea.sflag [#allocation3], %s478
        %s480 = sand.u32 %s43, 1
        %s481 = smul.addr %s480, 8
        %s482 = scalar_lea.vmem [#allocation2], %s481
        // Predicated region
        $region73: #{tpu_custom_call.1} parent=71 // pred_check
          %p483 = pneg %p56
        $region74: #{tpu_custom_call.1} parent=71 // pred_check_branch
          %485 = sbr.rel (%p483) target = $region76
        $region75: #{tpu_custom_call.1} parent=71 // pred_region
          %486 = dma.done %s479, 128
        $region76: #{tpu_custom_call.1} parent=71 // pred_fallthru
          _
        %s487 = sand.u32 %s35, 1
        %s488 = scalar_lea.sflag [#allocation6], %s487
        %s489 = sand.u32 %s69, 1
        %s490 = smul.addr %s489, 8
        %s491 = scalar_lea.vmem [#allocation5], %s490
        // Predicated region
        $region77: #{tpu_custom_call.1} parent=71 // pred_check
          %p492 = pneg %p82
        $region78: #{tpu_custom_call.1} parent=71 // pred_check_branch
          %494 = sbr.rel (%p492) target = $region80
        $region79: #{tpu_custom_call.1} parent=71 // pred_region
          %495 = dma.done %s488, 128
        $region80: #{tpu_custom_call.1} parent=71 // pred_fallthru
          _
        // Predicated region
        $region81: #{tpu_custom_call.1} parent=71 // pred_check
          %p496 = pneg %p145
        $region82: #{tpu_custom_call.1} parent=71 // pred_check_branch
          %498 = sbr.rel (%p496) target = $region84
        $region83: #{tpu_custom_call.1} parent=71 // pred_region
          %499 = dma.done [#allocation6], 256
        $region84: #{tpu_custom_call.1} parent=71 // pred_fallthru
          _
        // Predicated region
        $region85: #{tpu_custom_call.1} parent=71 // pred_check
          %p500 = pneg %p187
        $region86: #{tpu_custom_call.1} parent=71 // pred_check_branch
          %502 = sbr.rel (%p500) target = $region88
        $region87: #{tpu_custom_call.1} parent=71 // pred_region
          %503 = dma.done [#allocation9], 16
        $region88: #{tpu_custom_call.1} parent=71 // pred_fallthru
          _
        // Predicated region
        $region89: #{tpu_custom_call.1} parent=71 // pred_check
          %p504 = pneg %p208
        $region90: #{tpu_custom_call.1} parent=71 // pred_check_branch
          %506 = sbr.rel (%p504) target = $region92
        $region91: #{tpu_custom_call.1} parent=71 // pred_region
          %507 = dma.done [#allocation9], 16
        $region92: #{tpu_custom_call.1} parent=71 // pred_fallthru
          _
        // Predicated region
        $region93: #{tpu_custom_call.1} parent=71 // pred_check
          %p508 = pneg %p229
        $region94: #{tpu_custom_call.1} parent=71 // pred_check_branch
          %510 = sbr.rel (%p508) target = $region96
        $region95: #{tpu_custom_call.1} parent=71 // pred_region
          %511 = dma.done [#allocation12], 16
        $region96: #{tpu_custom_call.1} parent=71 // pred_fallthru
          _
        // Predicated region
        $region97: #{tpu_custom_call.1} parent=71 // pred_check
          %p512 = pneg %p292
        $region98: #{tpu_custom_call.1} parent=71 // pred_check_branch
          %514 = sbr.rel (%p512) target = $region100
        $region99: #{tpu_custom_call.1} parent=71 // pred_region
          %515 = dma.done [#allocation12], 256
        $region100: #{tpu_custom_call.1} parent=71 // pred_fallthru
          _
        %s516 = sand.u32 %s43, 1
        %s517 = scalar_lea.sflag [#allocation3], %s516
        %s518 = sand.u32 %s43, 1
        %s519 = smul.addr %s518, 8
        %s520 = scalar_lea.vmem [#allocation2], %s519
        %p521 = pneg %p56
        %p522 = pneg %p53
        %s523 = sand.u32 %s35, 1
        %s524 = scalar_lea.sflag [#allocation6], %s523
        %s525 = sand.u32 %s69, 1
        %s526 = smul.addr %s525, 8
        %s527 = scalar_lea.vmem [#allocation5], %s526
        %p528 = pneg %p82
        %p529 = pneg %p79
        %p530 = pneg %p103
        %p531 = pneg %p100
        %p532 = pneg %p124
        %p533 = pneg %p121
        %p534 = pneg %p145
        %p535 = pneg %p142
        %p536 = pneg %p166
        %p537 = pneg %p163
        %p538 = pneg %p187
        %p539 = pneg %p184
        %p540 = pneg %p208
        %p541 = pneg %p205
        %p542 = pneg %p229
        %p543 = pneg %p226
        %p544 = pneg %p250
        %p545 = pneg %p247
        %p546 = pneg %p271
        %p547 = pneg %p268
        %p548 = pneg %p292
        %p549 = pneg %p289
        %p550 = pneg %p313
        %p551 = pneg %p310
        %p552 = pneg %p339
        %p553 = pneg %p336
        %s554 = sand.u32 %s326, 1
        %s555 = scalar_lea.sflag [#allocation4], %s554
        %s556 = sand.u32 %s326, 1
        %s557 = smul.addr %s556, 8
        %s558 = scalar_lea.vmem [#allocation14], %s557
        %v560 = vld [vmem:[%s482] sm:$0xff]
        %v561 = vld [vmem:[%s491] sm:$0xff]
        %v562 = vld [vmem:[%s2] sm:$0x1]
        %v563 = vld [vmem:[%s3] sm:$0x1]
        %vm564 = vcmask 261120
        %v565 = vsel %vm564, %v560, 0.0
        %566 = vadd.xlane.f32.xlu0 %v565
        %v567 = vpop.xlane.xlu0 %566
        %v568 = vrcp.pop 32.0
        %v569 = vmul.f32 %v567, %v568
        %v570 = vsub.f32 %v560, %v569
        %v571 = vmul.f32 %v570, %v570
        %v572 = vsel %vm564, %v571, 0.0
        %573 = vadd.xlane.f32.xlu0 %v572
        %v574 = vpop.xlane.xlu0 %573
        %v575 = vmul.f32 %v574, %v568
        %v576 = vadd.f32 %v575, 1e-05
        %v577 = vrsqrt.pop %v576
        %v578 = vmul.f32 %v570, %v577
        %v580 = vlaneseq
        %v581 = vshrl.u32 %v580, 7
        %v582 = vsub.s32 0, %v581
        %v583 = vrot.slane %v562, %v582
        %v585 = vmul.f32 %v578, %v583
        %v587 = vlaneseq
        %v588 = vshrl.u32 %v587, 7
        %v589 = vsub.s32 0, %v588
        %v590 = vrot.slane %v563, %v589
        %v592 = vadd.f32 %v585, %v590
        %v593 = vadd.f32 %v592, %v561
        %v594 = vpack.c.bf16 %v593, %v593
        %v595 = vld [vmem:[#allocation7] sm:$0xf]
        %v596 = vld [vmem:[#allocation7 + $0x4] sm:$0xf]
        %v597 = vld [vmem:[#allocation7 + $0x8] sm:$0xf]
        %v598 = vld [vmem:[#allocation7 + $0xc] sm:$0xf]
        %v603 = vunpack.c.l.b16 %v595
        %v604 = vunpack.c.l.b16 %v596
        %v605 = vunpack.c.l.b16 %v597
        %v606 = vunpack.c.l.b16 %v598
        %v607 = vpack.c.b16 %v604, %v603
        %v608 = vpack.c.b16 %v606, %v605
        %v612 = vsel %vm564, %v594, 0
        %614 = vmatprep.subr.bf16.mxu0 0
        %615 = vmatpush1.bf16.msra.mxu0 %v607
        %616 = vmatprep.subr.bf16.mxu0 0
        %617 = vmatpush1.bf16.msra.mxu0 %v608
        %618 = vmatprep.subr.bf16.mxu0 0
        %619 = vmatpush1.bf16.msra.mxu0 0
        %620 = vmatprep.subr.bf16.mxu0 0
        %621 = vmatpush1.bf16.msra.mxu0 0
        %622 = vmatprep.subr.bf16.mxu0 0
        %623 = vmatpush1.bf16.msra.mxu0 0
        %624 = vmatprep.subr.bf16.mxu0 0
        %625 = vmatpush1.bf16.msra.mxu0 0
        %626 = vmatprep.subr.bf16.mxu0 0
        %627 = vmatpush1.bf16.msra.mxu0 0
        %628 = vmatprep.subr.bf16.mxu0 0
        %629 = vmatpush1.bf16.msra.mxu0 0
        %630 = vmatprep.subr.bf16.mxu0 0
        %631 = vmatpush1.bf16.msra.mxu0 0
        %632 = vmatprep.subr.bf16.mxu0 0
        %633 = vmatpush1.bf16.msra.mxu0 0
        %634 = vmatprep.subr.bf16.mxu0 0
        %635 = vmatpush1.bf16.msra.mxu0 0
        %636 = vmatprep.subr.bf16.mxu0 0
        %637 = vmatpush1.bf16.msra.mxu0 0
        %638 = vmatprep.subr.bf16.mxu0 0
        %639 = vmatpush1.bf16.msra.mxu0 0
        %640 = vmatprep.subr.bf16.mxu0 0
        %641 = vmatpush1.bf16.msra.mxu0 0
        %642 = vmatprep.subr.bf16.mxu0 0
        %643 = vmatpush1.bf16.msra.mxu0 0
        %644 = vmatprep.subr.bf16.mxu0 0
        %645 = vmatpush1.bf16.msra.mxu0 0
        %646 = vmatprep.mubr.bf16.mxu0 0
        %647 = vmatmul.mubr.bf16.gmra.mrb[0].mxu0 %v612
        %v648 = vpop.f32.mrb[0].mxu0
        %v649 = vadd.f32 0.0, %v648
        %v650 = vpop.f32.mrb[0].mxu0
        %v651 = vpop.f32.mrb[0].mxu0
        %v652 = vpop.f32.mrb[0].mxu0
        %653 = vdwg.mxu0
        %v654 = vpack.c.bf16 %v649, %v649
        %656 = vrot.lane.b32.xlu0 %v654, 96
        %v657 = vpop.permute.xlu0 %656
        %vm658 = vcmask 64512
        %v660 = vsel %vm658, %v654, 0
        %v663 = vsel %vm658, %v657, 0
        %665 = vmatprep.subr.bf16.mxu0 0
        %666 = vmatpush1.bf16.xpose.msra.mxu0 %v663
        %667 = vmatprep.subr.bf16.mxu0 0
        %668 = vmatpush1.bf16.xpose.msra.mxu0 0
        %669 = vmatprep.subr.bf16.mxu0 0
        %670 = vmatpush1.bf16.xpose.msra.mxu0 0
        %671 = vmatprep.subr.bf16.mxu0 0
        %672 = vmatpush1.bf16.xpose.msra.mxu0 0
        %673 = vmatprep.subr.bf16.mxu0 0
        %674 = vmatpush1.bf16.xpose.msra.mxu0 0
        %675 = vmatprep.subr.bf16.mxu0 0
        %676 = vmatpush1.bf16.xpose.msra.mxu0 0
        %677 = vmatprep.subr.bf16.mxu0 0
        %678 = vmatpush1.bf16.xpose.msra.mxu0 0
        %679 = vmatprep.subr.bf16.mxu0 0
        %680 = vmatpush1.bf16.xpose.msra.mxu0 0
        %681 = vmatprep.subr.bf16.mxu0 0
        %682 = vmatpush1.bf16.xpose.msra.mxu0 0
        %683 = vmatprep.subr.bf16.mxu0 0
        %684 = vmatpush1.bf16.xpose.msra.mxu0 0
        %685 = vmatprep.subr.bf16.mxu0 0
        %686 = vmatpush1.bf16.xpose.msra.mxu0 0
        %687 = vmatprep.subr.bf16.mxu0 0
        %688 = vmatpush1.bf16.xpose.msra.mxu0 0
        %689 = vmatprep.subr.bf16.mxu0 0
        %690 = vmatpush1.bf16.xpose.msra.mxu0 0
        %691 = vmatprep.subr.bf16.mxu0 0
        %692 = vmatpush1.bf16.xpose.msra.mxu0 0
        %693 = vmatprep.subr.bf16.mxu0 0
        %694 = vmatpush1.bf16.xpose.msra.mxu0 0
        %695 = vmatprep.subr.bf16.mxu0 0
        %696 = vmatpush1.bf16.xpose.msra.mxu0 0
        %697 = vmatprep.mubr.bf16.mxu0 0
        %698 = vmatmul.mubr.bf16.gmra.mrb[0].mxu0 %v660
        %v699 = vpop.f32.mrb[0].mxu0
        %v700 = vadd.f32 0.0, %v699
        %v701 = vpop.f32.mrb[0].mxu0
        %v702 = vpop.f32.mrb[0].mxu0
        %v703 = vpop.f32.mrb[0].mxu0
        %704 = vdwg.mxu0
        %v705 = vmul.f32 %v700, 0.35355338
        %v706 = vsel %vm658, %v705, -inf
        %707 = vmax.xlane.f32.xlu0 %v706
        %v708 = vpop.xlane.xlu0 %707
        %v709 = vsub.f32 %v705, %v708
        %v710 = vmul.f32 %v709, 1.442695
        %v711 = vpow.pop %v710
        %v712 = vsel %vm658, %v711, 0.0
        %713 = vadd.xlane.f32.xlu0 %v712
        %v714 = vpop.xlane.xlu0 %713
        %v715 = vrcp.pop %v714
        %v716 = vmul.f32 %v711, %v715
        %v717 = vpack.c.bf16 %v716, %v716
        %718 = vrot.lane.b32.xlu0 %v654, 64
        %v719 = vpop.permute.xlu0 %718
        %v721 = vsel %vm658, %v717, 0
        %vm723 = vcmask 1043456
        %v725 = vsel %vm723, %v719, 0
        %727 = vmatprep.subr.bf16.mxu0 0
        %728 = vmatpush1.bf16.msra.mxu0 %v725
        %729 = vmatprep.subr.bf16.mxu0 0
        %730 = vmatpush1.bf16.msra.mxu0 0
        %731 = vmatprep.subr.bf16.mxu0 0
        %732 = vmatpush1.bf16.msra.mxu0 0
        %733 = vmatprep.subr.bf16.mxu0 0
        %734 = vmatpush1.bf16.msra.mxu0 0
        %735 = vmatprep.subr.bf16.mxu0 0
        %736 = vmatpush1.bf16.msra.mxu0 0
        %737 = vmatprep.subr.bf16.mxu0 0
        %738 = vmatpush1.bf16.msra.mxu0 0
        %739 = vmatprep.subr.bf16.mxu0 0
        %740 = vmatpush1.bf16.msra.mxu0 0
        %741 = vmatprep.subr.bf16.mxu0 0
        %742 = vmatpush1.bf16.msra.mxu0 0
        %743 = vmatprep.subr.bf16.mxu0 0
        %744 = vmatpush1.bf16.msra.mxu0 0
        %745 = vmatprep.subr.bf16.mxu0 0
        %746 = vmatpush1.bf16.msra.mxu0 0
        %747 = vmatprep.subr.bf16.mxu0 0
        %748 = vmatpush1.bf16.msra.mxu0 0
        %749 = vmatprep.subr.bf16.mxu0 0
        %750 = vmatpush1.bf16.msra.mxu0 0
        %751 = vmatprep.subr.bf16.mxu0 0
        %752 = vmatpush1.bf16.msra.mxu0 0
        %753 = vmatprep.subr.bf16.mxu0 0
        %754 = vmatpush1.bf16.msra.mxu0 0
        %755 = vmatprep.subr.bf16.mxu0 0
        %756 = vmatpush1.bf16.msra.mxu0 0
        %757 = vmatprep.subr.bf16.mxu0 0
        %758 = vmatpush1.bf16.msra.mxu0 0
        %759 = vmatprep.mubr.bf16.mxu0 0
        %760 = vmatmul.mubr.bf16.gmra.mrb[0].mxu0 %v721
        %v761 = vpop.f32.mrb[0].mxu0
        %v762 = vadd.f32 0.0, %v761
        %v763 = vpop.f32.mrb[0].mxu0
        %v764 = vpop.f32.mrb[0].mxu0
        %v765 = vpop.f32.mrb[0].mxu0
        %766 = vdwg.mxu0
        %v767 = vpack.c.bf16 %v762, %v762
        %768 = vrot.lane.b32.xlu0 %v654, 120
        %v769 = vpop.permute.xlu0 %768
        %770 = vrot.lane.b32.xlu0 %v654, 88
        %v771 = vpop.permute.xlu0 %770
        %v773 = vsel %vm658, %v769, 0
        %v776 = vsel %vm658, %v771, 0
        %778 = vmatprep.subr.bf16.mxu0 0
        %779 = vmatpush1.bf16.xpose.msra.mxu0 %v776
        %780 = vmatprep.subr.bf16.mxu0 0
        %781 = vmatpush1.bf16.xpose.msra.mxu0 0
        %782 = vmatprep.subr.bf16.mxu0 0
        %783 = vmatpush1.bf16.xpose.msra.mxu0 0
        %784 = vmatprep.subr.bf16.mxu0 0
        %785 = vmatpush1.bf16.xpose.msra.mxu0 0
        %786 = vmatprep.subr.bf16.mxu0 0
        %787 = vmatpush1.bf16.xpose.msra.mxu0 0
        %788 = vmatprep.subr.bf16.mxu0 0
        %789 = vmatpush1.bf16.xpose.msra.mxu0 0
        %790 = vmatprep.subr.bf16.mxu0 0
        %791 = vmatpush1.bf16.xpose.msra.mxu0 0
        %792 = vmatprep.subr.bf16.mxu0 0
        %793 = vmatpush1.bf16.xpose.msra.mxu0 0
        %794 = vmatprep.subr.bf16.mxu0 0
        %795 = vmatpush1.bf16.xpose.msra.mxu0 0
        %796 = vmatprep.subr.bf16.mxu0 0
        %797 = vmatpush1.bf16.xpose.msra.mxu0 0
        %798 = vmatprep.subr.bf16.mxu0 0
        %799 = vmatpush1.bf16.xpose.msra.mxu0 0
        %800 = vmatprep.subr.bf16.mxu0 0
        %801 = vmatpush1.bf16.xpose.msra.mxu0 0
        %802 = vmatprep.subr.bf16.mxu0 0
        %803 = vmatpush1.bf16.xpose.msra.mxu0 0
        %804 = vmatprep.subr.bf16.mxu0 0
        %805 = vmatpush1.bf16.xpose.msra.mxu0 0
        %806 = vmatprep.subr.bf16.mxu0 0
        %807 = vmatpush1.bf16.xpose.msra.mxu0 0
        %808 = vmatprep.subr.bf16.mxu0 0
        %809 = vmatpush1.bf16.xpose.msra.mxu0 0
        %810 = vmatprep.mubr.bf16.mxu0 0
        %811 = vmatmul.mubr.bf16.gmra.mrb[0].mxu0 %v773
        %v812 = vpop.f32.mrb[0].mxu0
        %v813 = vadd.f32 0.0, %v812
        %v814 = vpop.f32.mrb[0].mxu0
        %v815 = vpop.f32.mrb[0].mxu0
        %v816 = vpop.f32.mrb[0].mxu0
        %817 = vdwg.mxu0
        %v818 = vmul.f32 %v813, 0.35355338
        %v819 = vsel %vm658, %v818, -inf
        %820 = vmax.xlane.f32.xlu0 %v819
        %v821 = vpop.xlane.xlu0 %820
        %v822 = vsub.f32 %v818, %v821
        %v823 = vmul.f32 %v822, 1.442695
        %v824 = vpow.pop %v823
        %v825 = vsel %vm658, %v824, 0.0
        %826 = vadd.xlane.f32.xlu0 %v825
        %v827 = vpop.xlane.xlu0 %826
        %v828 = vrcp.pop %v827
        %v829 = vmul.f32 %v824, %v828
        %v830 = vpack.c.bf16 %v829, %v829
        %831 = vrot.lane.b32.xlu0 %v654, 56
        %v832 = vpop.permute.xlu0 %831
        %v834 = vsel %vm658, %v830, 0
        %v837 = vsel %vm723, %v832, 0
        %839 = vmatprep.subr.bf16.mxu0 0
        %840 = vmatpush1.bf16.msra.mxu0 %v837
        %841 = vmatprep.subr.bf16.mxu0 0
        %842 = vmatpush1.bf16.msra.mxu0 0
        %843 = vmatprep.subr.bf16.mxu0 0
        %844 = vmatpush1.bf16.msra.mxu0 0
        %845 = vmatprep.subr.bf16.mxu0 0
        %846 = vmatpush1.bf16.msra.mxu0 0
        %847 = vmatprep.subr.bf16.mxu0 0
        %848 = vmatpush1.bf16.msra.mxu0 0
        %849 = vmatprep.subr.bf16.mxu0 0
        %850 = vmatpush1.bf16.msra.mxu0 0
        %851 = vmatprep.subr.bf16.mxu0 0
        %852 = vmatpush1.bf16.msra.mxu0 0
        %853 = vmatprep.subr.bf16.mxu0 0
        %854 = vmatpush1.bf16.msra.mxu0 0
        %855 = vmatprep.subr.bf16.mxu0 0
        %856 = vmatpush1.bf16.msra.mxu0 0
        %857 = vmatprep.subr.bf16.mxu0 0
        %858 = vmatpush1.bf16.msra.mxu0 0
        %859 = vmatprep.subr.bf16.mxu0 0
        %860 = vmatpush1.bf16.msra.mxu0 0
        %861 = vmatprep.subr.bf16.mxu0 0
        %862 = vmatpush1.bf16.msra.mxu0 0
        %863 = vmatprep.subr.bf16.mxu0 0
        %864 = vmatpush1.bf16.msra.mxu0 0
        %865 = vmatprep.subr.bf16.mxu0 0
        %866 = vmatpush1.bf16.msra.mxu0 0
        %867 = vmatprep.subr.bf16.mxu0 0
        %868 = vmatpush1.bf16.msra.mxu0 0
        %869 = vmatprep.subr.bf16.mxu0 0
        %870 = vmatpush1.bf16.msra.mxu0 0
        %871 = vmatprep.mubr.bf16.mxu0 0
        %872 = vmatmul.mubr.bf16.gmra.mrb[0].mxu0 %v834
        %v873 = vpop.f32.mrb[0].mxu0
        %v874 = vadd.f32 0.0, %v873
        %v875 = vpop.f32.mrb[0].mxu0
        %v876 = vpop.f32.mrb[0].mxu0
        %v877 = vpop.f32.mrb[0].mxu0
        %878 = vdwg.mxu0
        %v879 = vpack.c.bf16 %v874, %v874
        %880 = vrot.lane.b32.xlu0 %v654, 112
        %v881 = vpop.permute.xlu0 %880
        %882 = vrot.lane.b32.xlu0 %v654, 80
        %v883 = vpop.permute.xlu0 %882
        %v885 = vsel %vm658, %v881, 0
        %v888 = vsel %vm658, %v883, 0
        %890 = vmatprep.subr.bf16.mxu0 0
        %891 = vmatpush1.bf16.xpose.msra.mxu0 %v888
        %892 = vmatprep.subr.bf16.mxu0 0
        %893 = vmatpush1.bf16.xpose.msra.mxu0 0
        %894 = vmatprep.subr.bf16.mxu0 0
        %895 = vmatpush1.bf16.xpose.msra.mxu0 0
        %896 = vmatprep.subr.bf16.mxu0 0
        %897 = vmatpush1.bf16.xpose.msra.mxu0 0
        %898 = vmatprep.subr.bf16.mxu0 0
        %899 = vmatpush1.bf16.xpose.msra.mxu0 0
        %900 = vmatprep.subr.bf16.mxu0 0
        %901 = vmatpush1.bf16.xpose.msra.mxu0 0
        %902 = vmatprep.subr.bf16.mxu0 0
        %903 = vmatpush1.bf16.xpose.msra.mxu0 0
        %904 = vmatprep.subr.bf16.mxu0 0
        %905 = vmatpush1.bf16.xpose.msra.mxu0 0
        %906 = vmatprep.subr.bf16.mxu0 0
        %907 = vmatpush1.bf16.xpose.msra.mxu0 0
        %908 = vmatprep.subr.bf16.mxu0 0
        %909 = vmatpush1.bf16.xpose.msra.mxu0 0
        %910 = vmatprep.subr.bf16.mxu0 0
        %911 = vmatpush1.bf16.xpose.msra.mxu0 0
        %912 = vmatprep.subr.bf16.mxu0 0
        %913 = vmatpush1.bf16.xpose.msra.mxu0 0
        %914 = vmatprep.subr.bf16.mxu0 0
        %915 = vmatpush1.bf16.xpose.msra.mxu0 0
        %916 = vmatprep.subr.bf16.mxu0 0
        %917 = vmatpush1.bf16.xpose.msra.mxu0 0
        %918 = vmatprep.subr.bf16.mxu0 0
        %919 = vmatpush1.bf16.xpose.msra.mxu0 0
        %920 = vmatprep.subr.bf16.mxu0 0
        %921 = vmatpush1.bf16.xpose.msra.mxu0 0
        %922 = vmatprep.mubr.bf16.mxu0 0
        %923 = vmatmul.mubr.bf16.gmra.mrb[0].mxu0 %v885
        %v924 = vpop.f32.mrb[0].mxu0
        %v925 = vadd.f32 0.0, %v924
        %v926 = vpop.f32.mrb[0].mxu0
        %v927 = vpop.f32.mrb[0].mxu0
        %v928 = vpop.f32.mrb[0].mxu0
        %929 = vdwg.mxu0
        %v930 = vmul.f32 %v925, 0.35355338
        %v931 = vsel %vm658, %v930, -inf
        %932 = vmax.xlane.f32.xlu0 %v931
        %v933 = vpop.xlane.xlu0 %932
        %v934 = vsub.f32 %v930, %v933
        %v935 = vmul.f32 %v934, 1.442695
        %v936 = vpow.pop %v935
        %v937 = vsel %vm658, %v936, 0.0
        %938 = vadd.xlane.f32.xlu0 %v937
        %v939 = vpop.xlane.xlu0 %938
        %v940 = vrcp.pop %v939
        %v941 = vmul.f32 %v936, %v940
        %v942 = vpack.c.bf16 %v941, %v941
        %943 = vrot.lane.b32.xlu0 %v654, 48
        %v944 = vpop.permute.xlu0 %943
        %v946 = vsel %vm658, %v942, 0
        %v949 = vsel %vm723, %v944, 0
        %951 = vmatprep.subr.bf16.mxu0 0
        %952 = vmatpush1.bf16.msra.mxu0 %v949
        %953 = vmatprep.subr.bf16.mxu0 0
        %954 = vmatpush1.bf16.msra.mxu0 0
        %955 = vmatprep.subr.bf16.mxu0 0
        %956 = vmatpush1.bf16.msra.mxu0 0
        %957 = vmatprep.subr.bf16.mxu0 0
        %958 = vmatpush1.bf16.msra.mxu0 0
        %959 = vmatprep.subr.bf16.mxu0 0
        %960 = vmatpush1.bf16.msra.mxu0 0
        %961 = vmatprep.subr.bf16.mxu0 0
        %962 = vmatpush1.bf16.msra.mxu0 0
        %963 = vmatprep.subr.bf16.mxu0 0
        %964 = vmatpush1.bf16.msra.mxu0 0
        %965 = vmatprep.subr.bf16.mxu0 0
        %966 = vmatpush1.bf16.msra.mxu0 0
        %967 = vmatprep.subr.bf16.mxu0 0
        %968 = vmatpush1.bf16.msra.mxu0 0
        %969 = vmatprep.subr.bf16.mxu0 0
        %970 = vmatpush1.bf16.msra.mxu0 0
        %971 = vmatprep.subr.bf16.mxu0 0
        %972 = vmatpush1.bf16.msra.mxu0 0
        %973 = vmatprep.subr.bf16.mxu0 0
        %974 = vmatpush1.bf16.msra.mxu0 0
        %975 = vmatprep.subr.bf16.mxu0 0
        %976 = vmatpush1.bf16.msra.mxu0 0
        %977 = vmatprep.subr.bf16.mxu0 0
        %978 = vmatpush1.bf16.msra.mxu0 0
        %979 = vmatprep.subr.bf16.mxu0 0
        %980 = vmatpush1.bf16.msra.mxu0 0
        %981 = vmatprep.subr.bf16.mxu0 0
        %982 = vmatpush1.bf16.msra.mxu0 0
        %983 = vmatprep.mubr.bf16.mxu0 0
        %984 = vmatmul.mubr.bf16.gmra.mrb[0].mxu0 %v946
        %v985 = vpop.f32.mrb[0].mxu0
        %v986 = vadd.f32 0.0, %v985
        %v987 = vpop.f32.mrb[0].mxu0
        %v988 = vpop.f32.mrb[0].mxu0
        %v989 = vpop.f32.mrb[0].mxu0
        %990 = vdwg.mxu0
        %v991 = vpack.c.bf16 %v986, %v986
        %992 = vrot.lane.b32.xlu0 %v654, 104
        %v993 = vpop.permute.xlu0 %992
        %994 = vrot.lane.b32.xlu0 %v654, 72
        %v995 = vpop.permute.xlu0 %994
        %v997 = vsel %vm658, %v993, 0
        %v1000 = vsel %vm658, %v995, 0
        %1002 = vmatprep.subr.bf16.mxu0 0
        %1003 = vmatpush1.bf16.xpose.msra.mxu0 %v1000
        %1004 = vmatprep.subr.bf16.mxu0 0
        %1005 = vmatpush1.bf16.xpose.msra.mxu0 0
        %1006 = vmatprep.subr.bf16.mxu0 0
        %1007 = vmatpush1.bf16.xpose.msra.mxu0 0
        %1008 = vmatprep.subr.bf16.mxu0 0
        %1009 = vmatpush1.bf16.xpose.msra.mxu0 0
        %1010 = vmatprep.subr.bf16.mxu0 0
        %1011 = vmatpush1.bf16.xpose.msra.mxu0 0
        %1012 = vmatprep.subr.bf16.mxu0 0
        %1013 = vmatpush1.bf16.xpose.msra.mxu0 0
        %1014 = vmatprep.subr.bf16.mxu0 0
        %1015 = vmatpush1.bf16.xpose.msra.mxu0 0
        %1016 = vmatprep.subr.bf16.mxu0 0
        %1017 = vmatpush1.bf16.xpose.msra.mxu0 0
        %1018 = vmatprep.subr.bf16.mxu0 0
        %1019 = vmatpush1.bf16.xpose.msra.mxu0 0
        %1020 = vmatprep.subr.bf16.mxu0 0
        %1021 = vmatpush1.bf16.xpose.msra.mxu0 0
        %1022 = vmatprep.subr.bf16.mxu0 0
        %1023 = vmatpush1.bf16.xpose.msra.mxu0 0
        %1024 = vmatprep.subr.bf16.mxu0 0
        %1025 = vmatpush1.bf16.xpose.msra.mxu0 0
        %1026 = vmatprep.subr.bf16.mxu0 0
        %1027 = vmatpush1.bf16.xpose.msra.mxu0 0
        %1028 = vmatprep.subr.bf16.mxu0 0
        %1029 = vmatpush1.bf16.xpose.msra.mxu0 0
        %1030 = vmatprep.subr.bf16.mxu0 0
        %1031 = vmatpush1.bf16.xpose.msra.mxu0 0
        %1032 = vmatprep.subr.bf16.mxu0 0
        %1033 = vmatpush1.bf16.xpose.msra.mxu0 0
        %1034 = vmatprep.mubr.bf16.mxu0 0
        %1035 = vmatmul.mubr.bf16.gmra.mrb[0].mxu0 %v997
        %v1036 = vpop.f32.mrb[0].mxu0
        %v1037 = vadd.f32 0.0, %v1036
        %v1038 = vpop.f32.mrb[0].mxu0
        %v1039 = vpop.f32.mrb[0].mxu0
        %v1040 = vpop.f32.mrb[0].mxu0
        %1041 = vdwg.mxu0
        %v1042 = vmul.f32 %v1037, 0.35355338
        %v1043 = vsel %vm658, %v1042, -inf
        %1044 = vmax.xlane.f32.xlu0 %v1043
        %v1045 = vpop.xlane.xlu0 %1044
        %v1046 = vsub.f32 %v1042, %v1045
        %v1047 = vmul.f32 %v1046, 1.442695
        %v1048 = vpow.pop %v1047
        %v1049 = vsel %vm658, %v1048, 0.0
        %1050 = vadd.xlane.f32.xlu0 %v1049
        %v1051 = vpop.xlane.xlu0 %1050
        %v1052 = vrcp.pop %v1051
        %v1053 = vmul.f32 %v1048, %v1052
        %v1054 = vpack.c.bf16 %v1053, %v1053
        %1055 = vrot.lane.b32.xlu0 %v654, 40
        %v1056 = vpop.permute.xlu0 %1055
        %v1058 = vsel %vm658, %v1054, 0
        %v1061 = vsel %vm723, %v1056, 0
        %1063 = vmatprep.subr.bf16.mxu0 0
        %1064 = vmatpush1.bf16.msra.mxu0 %v1061
        %1065 = vmatprep.subr.bf16.mxu0 0
        %1066 = vmatpush1.bf16.msra.mxu0 0
        %1067 = vmatprep.subr.bf16.mxu0 0
        %1068 = vmatpush1.bf16.msra.mxu0 0
        %1069 = vmatprep.subr.bf16.mxu0 0
        %1070 = vmatpush1.bf16.msra.mxu0 0
        %1071 = vmatprep.subr.bf16.mxu0 0
        %1072 = vmatpush1.bf16.msra.mxu0 0
        %1073 = vmatprep.subr.bf16.mxu0 0
        %1074 = vmatpush1.bf16.msra.mxu0 0
        %1075 = vmatprep.subr.bf16.mxu0 0
        %1076 = vmatpush1.bf16.msra.mxu0 0
        %1077 = vmatprep.subr.bf16.mxu0 0
        %1078 = vmatpush1.bf16.msra.mxu0 0
        %1079 = vmatprep.subr.bf16.mxu0 0
        %1080 = vmatpush1.bf16.msra.mxu0 0
        %1081 = vmatprep.subr.bf16.mxu0 0
        %1082 = vmatpush1.bf16.msra.mxu0 0
        %1083 = vmatprep.subr.bf16.mxu0 0
        %1084 = vmatpush1.bf16.msra.mxu0 0
        %1085 = vmatprep.subr.bf16.mxu0 0
        %1086 = vmatpush1.bf16.msra.mxu0 0
        %1087 = vmatprep.subr.bf16.mxu0 0
        %1088 = vmatpush1.bf16.msra.mxu0 0
        %1089 = vmatprep.subr.bf16.mxu0 0
        %1090 = vmatpush1.bf16.msra.mxu0 0
        %1091 = vmatprep.subr.bf16.mxu0 0
        %1092 = vmatpush1.bf16.msra.mxu0 0
        %1093 = vmatprep.subr.bf16.mxu0 0
        %1094 = vmatpush1.bf16.msra.mxu0 0
        %1095 = vmatprep.mubr.bf16.mxu0 0
        %1096 = vmatmul.mubr.bf16.gmra.mrb[0].mxu0 %v1058
        %v1097 = vpop.f32.mrb[0].mxu0
        %v1098 = vadd.f32 0.0, %v1097
        %v1099 = vpop.f32.mrb[0].mxu0
        %v1100 = vpop.f32.mrb[0].mxu0
        %v1101 = vpop.f32.mrb[0].mxu0
        %1102 = vdwg.mxu0
        %v1103 = vpack.c.bf16 %v1098, %v1098
        %1105 = vrot.lane.b32.xlu0 %v879, 8
        %v1106 = vpop.permute.xlu0 %1105
        %1108 = vrot.lane.b32.xlu0 %v991, 16
        %v1109 = vpop.permute.xlu0 %1108
        %1111 = vrot.lane.b32.xlu0 %v1103, 24
        %v1112 = vpop.permute.xlu0 %1111
        %v1115 = vsel %vm658, %v767, %v1106
        %vm1116 = vcmask 130048
        %v1118 = vsel %vm1116, %v1115, %v1109
        %vm1119 = vcmask 195584
        %v1121 = vsel %vm1119, %v1118, %v1112
        %v1122 = vld [vmem:[%s5] sm:$0xf]
        %v1123 = vld [vmem:[%s5 + $0x4] sm:$0xf]
        %v1124 = vld [vmem:[%s5 + $0x8] sm:$0xf]
        %v1125 = vld [vmem:[%s5 + $0xc] sm:$0xf]
        %v1126 = vld [vmem:[#allocation8] sm:$0x1]
        %v1128 = vlaneseq
        %v1129 = vshrl.u32 %v1128, 7
        %v1130 = vsub.s32 0, %v1129
        %v1131 = vrot.slane %v1126, %v1130
        %v1137 = vunpack.c.l.b16 %v1122
        %v1138 = vunpack.c.l.b16 %v1123
        %v1139 = vunpack.c.l.b16 %v1124
        %v1140 = vunpack.c.l.b16 %v1125
        %v1141 = vpack.c.b16 %v1138, %v1137
        %v1142 = vpack.c.b16 %v1140, %v1139
        %v1145 = vsel %vm564, %v1121, 0
        %1147 = vmatprep.subr.bf16.mxu0 0
        %1148 = vmatpush1.bf16.msra.mxu0 %v1141
        %1149 = vmatprep.subr.bf16.mxu0 0
        %1150 = vmatpush1.bf16.msra.mxu0 %v1142
        %1151 = vmatprep.subr.bf16.mxu0 0
        %1152 = vmatpush1.bf16.msra.mxu0 0
        %1153 = vmatprep.subr.bf16.mxu0 0
        %1154 = vmatpush1.bf16.msra.mxu0 0
        %1155 = vmatprep.subr.bf16.mxu0 0
        %1156 = vmatpush1.bf16.msra.mxu0 0
        %1157 = vmatprep.subr.bf16.mxu0 0
        %1158 = vmatpush1.bf16.msra.mxu0 0
        %1159 = vmatprep.subr.bf16.mxu0 0
        %1160 = vmatpush1.bf16.msra.mxu0 0
        %1161 = vmatprep.subr.bf16.mxu0 0
        %1162 = vmatpush1.bf16.msra.mxu0 0
        %1163 = vmatprep.subr.bf16.mxu0 0
        %1164 = vmatpush1.bf16.msra.mxu0 0
        %1165 = vmatprep.subr.bf16.mxu0 0
        %1166 = vmatpush1.bf16.msra.mxu0 0
        %1167 = vmatprep.subr.bf16.mxu0 0
        %1168 = vmatpush1.bf16.msra.mxu0 0
        %1169 = vmatprep.subr.bf16.mxu0 0
        %1170 = vmatpush1.bf16.msra.mxu0 0
        %1171 = vmatprep.subr.bf16.mxu0 0
        %1172 = vmatpush1.bf16.msra.mxu0 0
        %1173 = vmatprep.subr.bf16.mxu0 0
        %1174 = vmatpush1.bf16.msra.mxu0 0
        %1175 = vmatprep.subr.bf16.mxu0 0
        %1176 = vmatpush1.bf16.msra.mxu0 0
        %1177 = vmatprep.subr.bf16.mxu0 0
        %1178 = vmatpush1.bf16.msra.mxu0 0
        %1179 = vmatprep.mubr.bf16.mxu0 0
        %1180 = vmatmul.mubr.bf16.gmra.mrb[0].mxu0 %v1145
        %v1181 = vpop.f32.mrb[0].mxu0
        %v1182 = vadd.f32 %v1131, %v1181
        %v1183 = vpop.f32.mrb[0].mxu0
        %v1184 = vpop.f32.mrb[0].mxu0
        %v1185 = vpop.f32.mrb[0].mxu0
        %1186 = vdwg.mxu0
        %v1187 = vadd.f32 %v560, %v1182
        %v1188 = vld [vmem:[#allocation10] sm:$0x1]
        %v1189 = vld [vmem:[#allocation11] sm:$0x1]
        %v1190 = vsel %vm564, %v1187, 0.0
        %1191 = vadd.xlane.f32.xlu0 %v1190
        %v1192 = vpop.xlane.xlu0 %1191
        %v1193 = vmul.f32 %v1192, %v568
        %v1194 = vsub.f32 %v1187, %v1193
        %v1195 = vmul.f32 %v1194, %v1194
        %v1196 = vsel %vm564, %v1195, 0.0
        %1197 = vadd.xlane.f32.xlu0 %v1196
        %v1198 = vpop.xlane.xlu0 %1197
        %v1199 = vmul.f32 %v1198, %v568
        %v1200 = vadd.f32 %v1199, 1e-05
        %v1201 = vrsqrt.pop %v1200
        %v1202 = vmul.f32 %v1194, %v1201
        %v1204 = vlaneseq
        %v1205 = vshrl.u32 %v1204, 7
        %v1206 = vsub.s32 0, %v1205
        %v1207 = vrot.slane %v1188, %v1206
        %v1209 = vmul.f32 %v1202, %v1207
        %v1211 = vlaneseq
        %v1212 = vshrl.u32 %v1211, 7
        %v1213 = vsub.s32 0, %v1212
        %v1214 = vrot.slane %v1189, %v1213
        %v1216 = vadd.f32 %v1209, %v1214
        %v1217 = vpack.c.bf16 %v1216, %v1216
        %v1218 = vld [vmem:[%s9] sm:$0xf]
        %v1219 = vld [vmem:[%s9 + $0x4] sm:$0xf]
        %v1220 = vld [vmem:[%s9 + $0x8] sm:$0xf]
        %v1221 = vld [vmem:[%s9 + $0xc] sm:$0xf]
        %v1222 = vld [vmem:[%s10] sm:$0x1]
        %v1224 = vlaneseq
        %v1225 = vshrl.u32 %v1224, 7
        %v1226 = vsub.s32 0, %v1225
        %v1227 = vrot.slane %v1222, %v1226
        %v1233 = vunpack.c.l.b16 %v1218
        %v1234 = vunpack.c.l.b16 %v1219
        %v1235 = vunpack.c.l.b16 %v1220
        %v1236 = vunpack.c.l.b16 %v1221
        %v1237 = vpack.c.b16 %v1234, %v1233
        %v1238 = vpack.c.b16 %v1236, %v1235
        %v1242 = vsel %vm564, %v1217, 0
        %1244 = vmatprep.subr.bf16.mxu0 0
        %1245 = vmatpush1.bf16.msra.mxu0 %v1237
        %1246 = vmatprep.subr.bf16.mxu0 0
        %1247 = vmatpush1.bf16.msra.mxu0 %v1238
        %1248 = vmatprep.subr.bf16.mxu0 0
        %1249 = vmatpush1.bf16.msra.mxu0 0
        %1250 = vmatprep.subr.bf16.mxu0 0
        %1251 = vmatpush1.bf16.msra.mxu0 0
        %1252 = vmatprep.subr.bf16.mxu0 0
        %1253 = vmatpush1.bf16.msra.mxu0 0
        %1254 = vmatprep.subr.bf16.mxu0 0
        %1255 = vmatpush1.bf16.msra.mxu0 0
        %1256 = vmatprep.subr.bf16.mxu0 0
        %1257 = vmatpush1.bf16.msra.mxu0 0
        %1258 = vmatprep.subr.bf16.mxu0 0
        %1259 = vmatpush1.bf16.msra.mxu0 0
        %1260 = vmatprep.subr.bf16.mxu0 0
        %1261 = vmatpush1.bf16.msra.mxu0 0
        %1262 = vmatprep.subr.bf16.mxu0 0
        %1263 = vmatpush1.bf16.msra.mxu0 0
        %1264 = vmatprep.subr.bf16.mxu0 0
        %1265 = vmatpush1.bf16.msra.mxu0 0
        %1266 = vmatprep.subr.bf16.mxu0 0
        %1267 = vmatpush1.bf16.msra.mxu0 0
        %1268 = vmatprep.subr.bf16.mxu0 0
        %1269 = vmatpush1.bf16.msra.mxu0 0
        %1270 = vmatprep.subr.bf16.mxu0 0
        %1271 = vmatpush1.bf16.msra.mxu0 0
        %1272 = vmatprep.subr.bf16.mxu0 0
        %1273 = vmatpush1.bf16.msra.mxu0 0
        %1274 = vmatprep.subr.bf16.mxu0 0
        %1275 = vmatpush1.bf16.msra.mxu0 0
        %1276 = vmatprep.mubr.bf16.mxu0 0
        %1277 = vmatmul.mubr.bf16.gmra.mrb[0].mxu0 %v1242
        %v1278 = vpop.f32.mrb[0].mxu0
        %v1279 = vadd.f32 %v1227, %v1278
        %v1280 = vpop.f32.mrb[0].mxu0
        %v1281 = vpop.f32.mrb[0].mxu0
        %v1282 = vpop.f32.mrb[0].mxu0
        %1283 = vdwg.mxu0
        %v1284 = vmul.f32 %v1279, 0.5
        %v1285 = vrcp.pop 1.4142135
        %v1286 = vmul.f32 %v1279, %v1285
        %v1287 = verf.f32.pop %v1286
        %v1288 = vadd.f32 %v1287, 1.0
        %v1289 = vmul.f32 %v1284, %v1288
        %v1290 = vpack.c.bf16 %v1289, %v1289
        %v1291 = vld [vmem:[#allocation13] sm:$0xf]
        %v1292 = vld [vmem:[#allocation13 + $0x4] sm:$0xf]
        %v1293 = vld [vmem:[#allocation13 + $0x8] sm:$0xf]
        %v1294 = vld [vmem:[#allocation13 + $0xc] sm:$0xf]
        %v1295 = vld [vmem:[%s12] sm:$0x1]
        %v1297 = vlaneseq
        %v1298 = vshrl.u32 %v1297, 7
        %v1299 = vsub.s32 0, %v1298
        %v1300 = vrot.slane %v1295, %v1299
        %v1306 = vunpack.c.l.b16 %v1291
        %v1307 = vunpack.c.l.b16 %v1292
        %v1308 = vunpack.c.l.b16 %v1293
        %v1309 = vunpack.c.l.b16 %v1294
        %v1310 = vpack.c.b16 %v1307, %v1306
        %v1311 = vpack.c.b16 %v1309, %v1308
        %v1315 = vsel %vm564, %v1290, 0
        %1317 = vmatprep.subr.bf16.mxu0 0
        %1318 = vmatpush1.bf16.msra.mxu0 %v1310
        %1319 = vmatprep.subr.bf16.mxu0 0
        %1320 = vmatpush1.bf16.msra.mxu0 %v1311
        %1321 = vmatprep.subr.bf16.mxu0 0
        %1322 = vmatpush1.bf16.msra.mxu0 0
        %1323 = vmatprep.subr.bf16.mxu0 0
        %1324 = vmatpush1.bf16.msra.mxu0 0
        %1325 = vmatprep.subr.bf16.mxu0 0
        %1326 = vmatpush1.bf16.msra.mxu0 0
        %1327 = vmatprep.subr.bf16.mxu0 0
        %1328 = vmatpush1.bf16.msra.mxu0 0
        %1329 = vmatprep.subr.bf16.mxu0 0
        %1330 = vmatpush1.bf16.msra.mxu0 0
        %1331 = vmatprep.subr.bf16.mxu0 0
        %1332 = vmatpush1.bf16.msra.mxu0 0
        %1333 = vmatprep.subr.bf16.mxu0 0
        %1334 = vmatpush1.bf16.msra.mxu0 0
        %1335 = vmatprep.subr.bf16.mxu0 0
        %1336 = vmatpush1.bf16.msra.mxu0 0
        %1337 = vmatprep.subr.bf16.mxu0 0
        %1338 = vmatpush1.bf16.msra.mxu0 0
        %1339 = vmatprep.subr.bf16.mxu0 0
        %1340 = vmatpush1.bf16.msra.mxu0 0
        %1341 = vmatprep.subr.bf16.mxu0 0
        %1342 = vmatpush1.bf16.msra.mxu0 0
        %1343 = vmatprep.subr.bf16.mxu0 0
        %1344 = vmatpush1.bf16.msra.mxu0 0
        %1345 = vmatprep.subr.bf16.mxu0 0
        %1346 = vmatpush1.bf16.msra.mxu0 0
        %1347 = vmatprep.subr.bf16.mxu0 0
        %1348 = vmatpush1.bf16.msra.mxu0 0
        %1349 = vmatprep.mubr.bf16.mxu0 0
        %1350 = vmatmul.mubr.bf16.gmra.mrb[0].mxu0 %v1315
        %v1351 = vpop.f32.mrb[0].mxu0
        %v1352 = vadd.f32 %v1300, %v1351
        %v1353 = vpop.f32.mrb[0].mxu0
        %v1354 = vpop.f32.mrb[0].mxu0
        %v1355 = vpop.f32.mrb[0].mxu0
        %1356 = vdwg.mxu0
        %v1357 = vadd.f32 %v1187, %v1352
        %1358 = vst.msk [vmem:[%s558] sm:$0xff] %vm564, %v1357
        %s1359 = sand.u32 %s326, 1
        %s1360 = scalar_lea.sflag [#allocation4], %s1359
        %s1361 = sand.u32 %s326, 1
        %s1362 = smul.addr %s1361, 8
        %s1363 = scalar_lea.vmem [#allocation14], %s1362
        // Predicated region
        $region101: #{tpu_custom_call.1} parent=71 // pred_check
          %p1364 = pneg %p336
        $region102: #{tpu_custom_call.1} parent=71 // pred_check_branch
          %1366 = sbr.rel (%p1364) target = $region104
        $region103: #{tpu_custom_call.1} parent=71 // pred_region
          %s1368 = ssub.s32 128, 128
          %1369 = vsyncadd %s1360, %s1368
          %s1370 = smul.addr %s35, 128
          %s1371 = scalar_lea.hbm %s13, %s1370
          %s1373 = sshll.u32 %s1363, 4
          %s1374 = int_to_ptr.vmem [resolvable:$true] %s1373
          %1376 = dma.vmem_to_hbm [thread:$0]  %s1374, 128, %s1371, %s1360
        $region104: #{tpu_custom_call.1} parent=71 // pred_fallthru
          _
      $region72: #{tpu_custom_call.1} parent=5 // pred_fallthru
        _
      %p1377 = scmp.le.s32.totalorder 2, %s30
      // Predicated region
      $region105: #{tpu_custom_call.1} parent=5 // pred_check
        %p1378 = pneg %p1377
      $region106: #{tpu_custom_call.1} parent=5 // pred_check_branch
        %1380 = sbr.rel (%p1378) target = $region108
      $region107: #{tpu_custom_call.1} parent=5 // pred_region
        %s1381 = ssub.s32 %s30, 2
        // Predicated region
        $region109: #{tpu_custom_call.1} parent=107 // pred_check
          %p1382 = pneg %p342
        $region110: #{tpu_custom_call.1} parent=107 // pred_check_branch
          %1384 = sbr.rel (%p1382) target = $region112
        $region111: #{tpu_custom_call.1} parent=107 // pred_region
          %s1385 = sand.u32 %s327, 1
          %s1386 = scalar_lea.sflag [#allocation4], %s1385
          %s1387 = sand.u32 %s327, 1
          %s1388 = smul.addr %s1387, 8
          %s1389 = scalar_lea.vmem [#allocation14], %s1388
          %1390 = dma.done %s1386, 128
        $region112: #{tpu_custom_call.1} parent=107 // pred_fallthru
          _
      $region108: #{tpu_custom_call.1} parent=5 // pred_fallthru
        _
    $region6: #{tpu_custom_call.1} parent=1 // loop_footer
      %s34 = sadd.s32 1, %s30
    $region7: #{tpu_custom_call.1} parent=1 // loop_footer_branch
      %29 = sbr.rel target = $region3
    $region8: #{tpu_custom_call.1} parent=1 // loop_exit
      _
    %1391 = vsyncpa [#allocation3], 1
    %s1392 = scalar_lea.sflag [#allocation3], 1
    %1393 = vsyncpa %s1392, 1
    %1394 = vsyncpa [#allocation6], 1
    %s1395 = scalar_lea.sflag [#allocation6], 1
    %1396 = vsyncpa %s1395, 1
    %1397 = vsyncpa [#allocation9], 1
    %1398 = vsyncpa [#allocation12], 1
    %1399 = vsyncpa [#allocation4], 1
    %s1400 = scalar_lea.sflag [#allocation4], 1
    %1401 = vsyncpa %s1400, 1

// kernel: tpu_custom_call.1
$region0: #{tpu_custom_call.1}
  #allocation0 [shape = 'u32[]', space=smem, size = 0x4, offset = 0x4, fixed_abs, tag = 'smem constant byte address 0x4 - core index']
  #allocation1 [shape = 'u32[144,128]{1,0:T(1,128)}', space=vmem, size = 0x12000, scoped, tag = 'internal scratch']
  %s0 = inlined_call_operand.hbm [shape: f32[2,8,32], index: 0, kind: input, shape index: {}]
  %s1 = inlined_call_operand.hbm [shape: f32[2,8,32], index: 1, kind: input, shape index: {}]
  %s2 = inlined_call_operand.vmem [shape: f32[1,32], index: 2, kind: input, shape index: {}]
  %s3 = inlined_call_operand.vmem [shape: f32[1,32], index: 3, kind: input, shape index: {}]
  %s4 = inlined_call_operand.hbm [shape: bf16[32,96], index: 4, kind: input, shape index: {}]
  %s5 = inlined_call_operand.vmem [shape: bf16[32,32], index: 5, kind: input, shape index: {}]
  %s6 = inlined_call_operand.hbm [shape: f32[1,32], index: 6, kind: input, shape index: {}]
  %s7 = inlined_call_operand.hbm [shape: f32[1,32], index: 7, kind: input, shape index: {}]
  %s8 = inlined_call_operand.hbm [shape: f32[1,32], index: 8, kind: input, shape index: {}]
  %s9 = inlined_call_operand.vmem [shape: bf16[32,32], index: 9, kind: input, shape index: {}]
  %s10 = inlined_call_operand.vmem [shape: f32[1,32], index: 10, kind: input, shape index: {}]
  %s11 = inlined_call_operand.hbm [shape: bf16[32,32], index: 11, kind: input, shape index: {}]
  %s12 = inlined_call_operand.vmem [shape: f32[1,32], index: 12, kind: input, shape index: {}]
  %s13 = inlined_call_operand.hbm [shape: f32[2,8,32], index: 13, kind: output, shape index: {}]
  %s14 = sld [smem:[#allocation0]]
  $region113: #{tpu_custom_call.1} parent=0
    _
  %s16 = ssub.s32 1, %s14
  %s17 = scalar_select 0, %s16, %s14
  $region1: #{tpu_custom_call.1} parent=0
    #allocation2 [shape = 'u8[8192]{0}', space=vmem, size = 0x2000, scoped, tag = 'input window, operand 0']
    #allocation3 [shape = 's32[2]{0}', space=sflag, size = 0x8, scoped, tag = 'scoped memory for tpu_custom_call.1']
    #allocation4 [shape = 's32[2]{0}', space=sflag, size = 0x8, scoped, tag = 'scoped memory for tpu_custom_call.1']
    #allocation5 [shape = 'u8[8192]{0}', space=vmem, size = 0x2000, scoped, tag = 'input window, operand 1']
    #allocation6 [shape = 's32[2]{0}', space=sflag, size = 0x8, scoped, tag = 'scoped memory for tpu_custom_call.1']
    #allocation7 [shape = 'u8[8192]{0}', space=vmem, size = 0x2000, scoped, tag = 'input window, operand 4, single buffered']
    #allocation8 [shape = 'u8[512]{0}', space=vmem, size = 0x400, scoped, tag = 'input window, operand 6, single buffered']
    #allocation9 [shape = 's32[1]{0}', space=sflag, size = 0x4, scoped, tag = 'scoped memory for tpu_custom_call.1']
    #allocation10 [shape = 'u8[512]{0}', space=vmem, size = 0x400, scoped, tag = 'input window, operand 7, single buffered']
    #allocation11 [shape = 'u8[512]{0}', space=vmem, size = 0x400, scoped, tag = 'input window, operand 8, single buffered']
    #allocation12 [shape = 's32[1]{0}', space=sflag, size = 0x4, scoped, tag = 'scoped memory for tpu_custom_call.1']
    #allocation13 [shape = 'u8[8192]{0}', space=vmem, size = 0x2000, scoped, tag = 'input window, operand 11, single buffered']
    #allocation14 [shape = 'u8[8192]{0}', space=vmem, size = 0x2000, scoped, tag = 'output window, operand 0']
    %18 = vsyncpa [#allocation3], 0
    %s19 = scalar_lea.sflag [#allocation3], 1
    %20 = vsyncpa %s19, 0
    %21 = vsyncpa [#allocation6], 0
    %s22 = scalar_lea.sflag [#allocation6], 1
    %23 = vsyncpa %s22, 0
    %24 = vsyncpa [#allocation9], 0
    %25 = vsyncpa [#allocation12], 0
    %26 = vsyncpa [#allocation4], 0
    %s27 = scalar_lea.sflag [#allocation4], 1
    %28 = vsyncpa %s27, 0
    loop: start=0, step=1, limit=4
    $region2: #{tpu_custom_call.1} parent=1 // loop_pre_header
      _
    $region3: #{tpu_custom_call.1} parent=1 // loop_header
      %s30 = sphi 0, %s34
      %p31 = scmp.ge.s32.totalorder %s30, 4
      %s40 = sphi 0, %s42
      %s43 = sphi 0, %s40
      %s44 = sphi 0, %s43
      %s60 = sphi 0, %s44
      %s66 = sphi 0, %s68
      %s69 = sphi 0, %s66
      %s70 = sphi 0, %s69
      %s86 = sphi 0, %s70
      %s90 = sphi 0, %s90
      %s92 = sphi 0, %s90
      %s93 = sphi 0, %s92
      %s107 = sphi 0, %s93
      %s111 = sphi 0, %s111
      %s113 = sphi 0, %s111
      %s114 = sphi 0, %s113
      %s128 = sphi 0, %s114
      %s132 = sphi 0, %s132
      %s134 = sphi 0, %s132
      %s135 = sphi 0, %s134
      %s149 = sphi 0, %s135
      %s153 = sphi 0, %s153
      %s155 = sphi 0, %s153
      %s156 = sphi 0, %s155
      %s170 = sphi 0, %s156
      %s174 = sphi 0, %s174
      %s176 = sphi 0, %s174
      %s177 = sphi 0, %s176
      %s191 = sphi 0, %s177
      %s195 = sphi 0, %s195
      %s197 = sphi 0, %s195
      %s198 = sphi 0, %s197
      %s212 = sphi 0, %s198
      %s216 = sphi 0, %s216
      %s218 = sphi 0, %s216
      %s219 = sphi 0, %s218
      %s233 = sphi 0, %s219
      %s237 = sphi 0, %s237
      %s239 = sphi 0, %s237
      %s240 = sphi 0, %s239
      %s254 = sphi 0, %s240
      %s258 = sphi 0, %s258
      %s260 = sphi 0, %s258
      %s261 = sphi 0, %s260
      %s275 = sphi 0, %s261
      %s279 = sphi 0, %s279
      %s281 = sphi 0, %s279
      %s282 = sphi 0, %s281
      %s296 = sphi 0, %s282
      %s300 = sphi 0, %s300
      %s302 = sphi 0, %s300
      %s303 = sphi 0, %s302
      %s317 = sphi 0, %s303
      %s323 = sphi 0, %s325
      %s326 = sphi 0, %s323
      %s327 = sphi 0, %s326
      %s343 = sphi 0, %s327
    $region4: #{tpu_custom_call.1} parent=1 // loop_header_branch
      %33 = sbr.rel (%p31) target = $region8
    $region5: #{tpu_custom_call.1} parent=1 // loop_body
      %s35 = ssub.s32 %s30, 1
      %s36 = ssub.s32 %s30, 2
      %s37 = sadd.s32 %s30, 1
      %s38 = ssub.s32 %s30, %s37
      %p39 = scmp.eq.s32.totalorder %s38, 0
      %s41 = sadd.s32 %s40, 1
      %s42 = scalar_select %p39, %s40, %s41
      %p45 = pneg %p39
      %p46 = scmp.eq.s32.totalorder %s30, 1
      %p47 = por %p45, %p46
      %p48 = scmp.ne.s32.totalorder %s40, %s43
      %p49 = scmp.eq.s32.totalorder %s30, 0
      %p50 = por %p48, %p49
      %p51 = scmp.ne.s32.totalorder %s40, %s43
      %p52 = scmp.eq.s32.totalorder %s35, 1
      %p53 = por %p51, %p52
      %p54 = scmp.ne.s32.totalorder %s43, %s44
      %p55 = scmp.eq.s32.totalorder %s35, 0
      %p56 = por %p54, %p55
      %p57 = scmp.ne.s32.totalorder %s43, %s44
      %p58 = scmp.eq.s32.totalorder %s36, 1
      %p59 = por %p57, %p58
      %p61 = scmp.ne.s32.totalorder %s44, %s60
      %p62 = scmp.eq.s32.totalorder %s36, 0
      %p63 = por %p61, %p62
      %s64 = ssub.s32 %s30, %s37
      %p65 = scmp.eq.s32.totalorder %s64, 0
      %s67 = sadd.s32 %s66, 1
      %s68 = scalar_select %p65, %s66, %s67
      %p71 = pneg %p65
      %p72 = scmp.eq.s32.totalorder %s30, 1
      %p73 = por %p71, %p72
      %p74 = scmp.ne.s32.totalorder %s66, %s69
      %p75 = scmp.eq.s32.totalorder %s30, 0
      %p76 = por %p74, %p75
      %p77 = scmp.ne.s32.totalorder %s66, %s69
      %p78 = scmp.eq.s32.totalorder %s35, 1
      %p79 = por %p77, %p78
      %p80 = scmp.ne.s32.totalorder %s69, %s70
      %p81 = scmp.eq.s32.totalorder %s35, 0
      %p82 = por %p80, %p81
      %p83 = scmp.ne.s32.totalorder %s69, %s70
      %p84 = scmp.eq.s32.totalorder %s36, 1
      %p85 = por %p83, %p84
      %p87 = scmp.ne.s32.totalorder %s70, %s86
      %p88 = scmp.eq.s32.totalorder %s36, 0
      %p89 = por %p87, %p88
      %s91 = sadd.s32 %s90, 1
      %p94 = scmp.eq.s32.totalorder %s30, 1
      %p95 = scmp.ne.s32.totalorder %s90, %s92
      %p96 = scmp.eq.s32.totalorder %s30, 0
      %p97 = por %p95, %p96
      %p98 = scmp.ne.s32.totalorder %s90, %s92
      %p99 = scmp.eq.s32.totalorder %s35, 1
      %p100 = por %p98, %p99
      %p101 = scmp.ne.s32.totalorder %s92, %s93
      %p102 = scmp.eq.s32.totalorder %s35, 0
      %p103 = por %p101, %p102
      %p104 = scmp.ne.s32.totalorder %s92, %s93
      %p105 = scmp.eq.s32.totalorder %s36, 1
      %p106 = por %p104, %p105
      %p108 = scmp.ne.s32.totalorder %s93, %s107
      %p109 = scmp.eq.s32.totalorder %s36, 0
      %p110 = por %p108, %p109
      %s112 = sadd.s32 %s111, 1
      %p115 = scmp.eq.s32.totalorder %s30, 1
      %p116 = scmp.ne.s32.totalorder %s111, %s113
      %p117 = scmp.eq.s32.totalorder %s30, 0
      %p118 = por %p116, %p117
      %p119 = scmp.ne.s32.totalorder %s111, %s113
      %p120 = scmp.eq.s32.totalorder %s35, 1
      %p121 = por %p119, %p120
      %p122 = scmp.ne.s32.totalorder %s113, %s114
      %p123 = scmp.eq.s32.totalorder %s35, 0
      %p124 = por %p122, %p123
      %p125 = scmp.ne.s32.totalorder %s113, %s114
      %p126 = scmp.eq.s32.totalorder %s36, 1
      %p127 = por %p125, %p126
      %p129 = scmp.ne.s32.totalorder %s114, %s128
      %p130 = scmp.eq.s32.totalorder %s36, 0
      %p131 = por %p129, %p130
      %s133 = sadd.s32 %s132, 1
      %p136 = scmp.eq.s32.totalorder %s30, 1
      %p137 = scmp.ne.s32.totalorder %s132, %s134
      %p138 = scmp.eq.s32.totalorder %s30, 0
      %p139 = por %p137, %p138
      %p140 = scmp.ne.s32.totalorder %s132, %s134
      %p141 = scmp.eq.s32.totalorder %s35, 1
      %p142 = por %p140, %p141
      %p143 = scmp.ne.s32.totalorder %s134, %s135
      %p144 = scmp.eq.s32.totalorder %s35, 0
      %p145 = por %p143, %p144
      %p146 = scmp.ne.s32.totalorder %s134, %s135
      %p147 = scmp.eq.s32.totalorder %s36, 1
      %p148 = por %p146, %p147
      %p150 = scmp.ne.s32.totalorder %s135, %s149
      %p151 = scmp.eq.s32.totalorder %s36, 0
      %p152 = por %p150, %p151
      %s154 = sadd.s32 %s153, 1
      %p157 = scmp.eq.s32.totalorder %s30, 1
      %p158 = scmp.ne.s32.totalorder %s153, %s155
      %p159 = scmp.eq.s32.totalorder %s30, 0
      %p160 = por %p158, %p159
      %p161 = scmp.ne.s32.totalorder %s153, %s155
      %p162 = scmp.eq.s32.totalorder %s35, 1
      %p163 = por %p161, %p162
      %p164 = scmp.ne.s32.totalorder %s155, %s156
      %p165 = scmp.eq.s32.totalorder %s35, 0
      %p166 = por %p164, %p165
      %p167 = scmp.ne.s32.totalorder %s155, %s156
      %p168 = scmp.eq.s32.totalorder %s36, 1
      %p169 = por %p167, %p168
      %p171 = scmp.ne.s32.totalorder %s156, %s170
      %p172 = scmp.eq.s32.totalorder %s36, 0
      %p173 = por %p171, %p172
      %s175 = sadd.s32 %s174, 1
      %p178 = scmp.eq.s32.totalorder %s30, 1
      %p179 = scmp.ne.s32.totalorder %s174, %s176
      %p180 = scmp.eq.s32.totalorder %s30, 0
      %p181 = por %p179, %p180
      %p182 = scmp.ne.s32.totalorder %s174, %s176
      %p183 = scmp.eq.s32.totalorder %s35, 1
      %p184 = por %p182, %p183
      %p185 = scmp.ne.s32.totalorder %s176, %s177
      %p186 = scmp.eq.s32.totalorder %s35, 0
      %p187 = por %p185, %p186
      %p188 = scmp.ne.s32.totalorder %s176, %s177
      %p189 = scmp.eq.s32.totalorder %s36, 1
      %p190 = por %p188, %p189
      %p192 = scmp.ne.s32.totalorder %s177, %s191
      %p193 = scmp.eq.s32.totalorder %s36, 0
      %p194 = por %p192, %p193
      %s196 = sadd.s32 %s195, 1
      %p199 = scmp.eq.s32.totalorder %s30, 1
      %p200 = scmp.ne.s32.totalorder %s195, %s197
      %p201 = scmp.eq.s32.totalorder %s30, 0
      %p202 = por %p200, %p201
      %p203 = scmp.ne.s32.totalorder %s195, %s197
      %p204 = scmp.eq.s32.totalorder %s35, 1
      %p205 = por %p203, %p204
      %p206 = scmp.ne.s32.totalorder %s197, %s198
      %p207 = scmp.eq.s32.totalorder %s35, 0
      %p208 = por %p206, %p207
      %p209 = scmp.ne.s32.totalorder %s197, %s198
      %p210 = scmp.eq.s32.totalorder %s36, 1
      %p211 = por %p209, %p210
      %p213 = scmp.ne.s32.totalorder %s198, %s212
      %p214 = scmp.eq.s32.totalorder %s36, 0
      %p215 = por %p213, %p214
      %s217 = sadd.s32 %s216, 1
      %p220 = scmp.eq.s32.totalorder %s30, 1
      %p221 = scmp.ne.s32.totalorder %s216, %s218
      %p222 = scmp.eq.s32.totalorder %s30, 0
      %p223 = por %p221, %p222
      %p224 = scmp.ne.s32.totalorder %s216, %s218
      %p225 = scmp.eq.s32.totalorder %s35, 1
      %p226 = por %p224, %p225
      %p227 = scmp.ne.s32.totalorder %s218, %s219
      %p228 = scmp.eq.s32.totalorder %s35, 0
      %p229 = por %p227, %p228
      %p230 = scmp.ne.s32.totalorder %s218, %s219
      %p231 = scmp.eq.s32.totalorder %s36, 1
      %p232 = por %p230, %p231
      %p234 = scmp.ne.s32.totalorder %s219, %s233
      %p235 = scmp.eq.s32.totalorder %s36, 0
      %p236 = por %p234, %p235
      %s238 = sadd.s32 %s237, 1
      %p241 = scmp.eq.s32.totalorder %s30, 1
      %p242 = scmp.ne.s32.totalorder %s237, %s239
      %p243 = scmp.eq.s32.totalorder %s30, 0
      %p244 = por %p242, %p243
      %p245 = scmp.ne.s32.totalorder %s237, %s239
      %p246 = scmp.eq.s32.totalorder %s35, 1
      %p247 = por %p245, %p246
      %p248 = scmp.ne.s32.totalorder %s239, %s240
      %p249 = scmp.eq.s32.totalorder %s35, 0
      %p250 = por %p248, %p249
      %p251 = scmp.ne.s32.totalorder %s239, %s240
      %p252 = scmp.eq.s32.totalorder %s36, 1
      %p253 = por %p251, %p252
      %p255 = scmp.ne.s32.totalorder %s240, %s254
      %p256 = scmp.eq.s32.totalorder %s36, 0
      %p257 = por %p255, %p256
      %s259 = sadd.s32 %s258, 1
      %p262 = scmp.eq.s32.totalorder %s30, 1
      %p263 = scmp.ne.s32.totalorder %s258, %s260
      %p264 = scmp.eq.s32.totalorder %s30, 0
      %p265 = por %p263, %p264
      %p266 = scmp.ne.s32.totalorder %s258, %s260
      %p267 = scmp.eq.s32.totalorder %s35, 1
      %p268 = por %p266, %p267
      %p269 = scmp.ne.s32.totalorder %s260, %s261
      %p270 = scmp.eq.s32.totalorder %s35, 0
      %p271 = por %p269, %p270
      %p272 = scmp.ne.s32.totalorder %s260, %s261
      %p273 = scmp.eq.s32.totalorder %s36, 1
      %p274 = por %p272, %p273
      %p276 = scmp.ne.s32.totalorder %s261, %s275
      %p277 = scmp.eq.s32.totalorder %s36, 0
      %p278 = por %p276, %p277
      %s280 = sadd.s32 %s279, 1
      %p283 = scmp.eq.s32.totalorder %s30, 1
      %p284 = scmp.ne.s32.totalorder %s279, %s281
      %p285 = scmp.eq.s32.totalorder %s30, 0
      %p286 = por %p284, %p285
      %p287 = scmp.ne.s32.totalorder %s279, %s281
      %p288 = scmp.eq.s32.totalorder %s35, 1
      %p289 = por %p287, %p288
      %p290 = scmp.ne.s32.totalorder %s281, %s282
      %p291 = scmp.eq.s32.totalorder %s35, 0
      %p292 = por %p290, %p291
      %p293 = scmp.ne.s32.totalorder %s281, %s282
      %p294 = scmp.eq.s32.totalorder %s36, 1
      %p295 = por %p293, %p294
      %p297 = scmp.ne.s32.totalorder %s282, %s296
      %p298 = scmp.eq.s32.totalorder %s36, 0
      %p299 = por %p297, %p298
      %s301 = sadd.s32 %s300, 1
      %p304 = scmp.eq.s32.totalorder %s30, 1
      %p305 = scmp.ne.s32.totalorder %s300, %s302
      %p306 = scmp.eq.s32.totalorder %s30, 0
      %p307 = por %p305, %p306
      %p308 = scmp.ne.s32.totalorder %s300, %s302
      %p309 = scmp.eq.s32.totalorder %s35, 1
      %p310 = por %p308, %p309
      %p311 = scmp.ne.s32.totalorder %s302, %s303
      %p312 = scmp.eq.s32.totalorder %s35, 0
      %p313 = por %p311, %p312
      %p314 = scmp.ne.s32.totalorder %s302, %s303
      %p315 = scmp.eq.s32.totalorder %s36, 1
      %p316 = por %p314, %p315
      %p318 = scmp.ne.s32.totalorder %s303, %s317
      %p319 = scmp.eq.s32.totalorder %s36, 0
      %p320 = por %p318, %p319
      %s321 = ssub.s32 %s30, %s37
      %p322 = scmp.eq.s32.totalorder %s321, 0
      %s324 = sadd.s32 %s323, 1
      %s325 = scalar_select %p322, %s323, %s324
      %p328 = pneg %p322
      %p329 = scmp.eq.s32.totalorder %s30, 1
      %p330 = por %p328, %p329
      %p331 = scmp.ne.s32.totalorder %s323, %s326
      %p332 = scmp.eq.s32.totalorder %s30, 0
      %p333 = por %p331, %p332
      %p334 = scmp.ne.s32.totalorder %s323, %s326
      %p335 = scmp.eq.s32.totalorder %s35, 1
      %p336 = por %p334, %p335
      %p337 = scmp.ne.s32.totalorder %s326, %s327
      %p338 = scmp.eq.s32.totalorder %s35, 0
      %p339 = por %p337, %p338
      %p340 = scmp.ne.s32.totalorder %s326, %s327
      %p341 = scmp.eq.s32.totalorder %s36, 1
      %p342 = por %p340, %p341
      %p344 = scmp.ne.s32.totalorder %s327, %s343
      %p345 = scmp.eq.s32.totalorder %s36, 0
      %p346 = por %p344, %p345
      %p347 = scmp.le.s32.totalorder 1, %s30
      %p348 = scmp.lt.s32.totalorder %s30, 3
      %p349 = pnand %p347, %p348
      %p350 = pneg %p349
      // Predicated region
      $region9: #{tpu_custom_call.1} parent=5 // pred_check
        _
      $region10: #{tpu_custom_call.1} parent=5 // pred_check_branch
        %352 = sbr.rel (%p349) target = $region12
      $region11: #{tpu_custom_call.1} parent=5 // pred_region
        %s353 = ssub.s32 %s30, 1
        // Predicated region
        $region13: #{tpu_custom_call.1} parent=11 // pred_check
          %p354 = pneg %p103
        $region14: #{tpu_custom_call.1} parent=11 // pred_check_branch
          %356 = sbr.rel (%p354) target = $region16
        $region15: #{tpu_custom_call.1} parent=11 // pred_region
          _
        $region16: #{tpu_custom_call.1} parent=11 // pred_fallthru
          _
        // Predicated region
        $region17: #{tpu_custom_call.1} parent=11 // pred_check
          %p357 = pneg %p124
        $region18: #{tpu_custom_call.1} parent=11 // pred_check_branch
          %359 = sbr.rel (%p357) target = $region20
        $region19: #{tpu_custom_call.1} parent=11 // pred_region
          _
        $region20: #{tpu_custom_call.1} parent=11 // pred_fallthru
          _
        // Predicated region
        $region21: #{tpu_custom_call.1} parent=11 // pred_check
          %p360 = pneg %p145
        $region22: #{tpu_custom_call.1} parent=11 // pred_check_branch
          %362 = sbr.rel (%p360) target = $region24
        $region23: #{tpu_custom_call.1} parent=11 // pred_region
          %s364 = ssub.s32 256, 256
          %365 = vsyncadd [#allocation6], %s364
          %s366 = sshll.u32 [#allocation7], 4
          %s367 = int_to_ptr.vmem [resolvable:$true] %s366
          %372 = dma.hbm_to_vmem [thread:$0]  %s4, 256, %s367, [#allocation6], 64, 64, 4
        $region24: #{tpu_custom_call.1} parent=11 // pred_fallthru
          _
        // Predicated region
        $region25: #{tpu_custom_call.1} parent=11 // pred_check
          %p373 = pneg %p166
        $region26: #{tpu_custom_call.1} parent=11 // pred_check_branch
          %375 = sbr.rel (%p373) target = $region28
        $region27: #{tpu_custom_call.1} parent=11 // pred_region
          _
        $region28: #{tpu_custom_call.1} parent=11 // pred_fallthru
          _
        // Predicated region
        $region29: #{tpu_custom_call.1} parent=11 // pred_check
          %p376 = pneg %p187
        $region30: #{tpu_custom_call.1} parent=11 // pred_check_branch
          %378 = sbr.rel (%p376) target = $region32
        $region31: #{tpu_custom_call.1} parent=11 // pred_region
          %s380 = ssub.s32 16, 16
          %381 = vsyncadd [#allocation9], %s380
          %s383 = sshll.u32 [#allocation8], 4
          %s384 = int_to_ptr.vmem [resolvable:$true] %s383
          %386 = dma.hbm_to_vmem [thread:$0]  %s6, 16, %s384, [#allocation9]
        $region32: #{tpu_custom_call.1} parent=11 // pred_fallthru
          _
        // Predicated region
        $region33: #{tpu_custom_call.1} parent=11 // pred_check
          %p387 = pneg %p208
        $region34: #{tpu_custom_call.1} parent=11 // pred_check_branch
          %389 = sbr.rel (%p387) target = $region36
        $region35: #{tpu_custom_call.1} parent=11 // pred_region
          %s391 = ssub.s32 16, 16
          %392 = vsyncadd [#allocation9], %s391
          %s394 = sshll.u32 [#allocation10], 4
          %s395 = int_to_ptr.vmem [resolvable:$true] %s394
          %397 = dma.hbm_to_vmem [thread:$0]  %s7, 16, %s395, [#allocation9]
        $region36: #{tpu_custom_call.1} parent=11 // pred_fallthru
          _
        // Predicated region
        $region37: #{tpu_custom_call.1} parent=11 // pred_check
          %p398 = pneg %p229
        $region38: #{tpu_custom_call.1} parent=11 // pred_check_branch
          %400 = sbr.rel (%p398) target = $region40
        $region39: #{tpu_custom_call.1} parent=11 // pred_region
          %s402 = ssub.s32 16, 16
          %403 = vsyncadd [#allocation12], %s402
          %s405 = sshll.u32 [#allocation11], 4
          %s406 = int_to_ptr.vmem [resolvable:$true] %s405
          %408 = dma.hbm_to_vmem [thread:$0]  %s8, 16, %s406, [#allocation12]
        $region40: #{tpu_custom_call.1} parent=11 // pred_fallthru
          _
        // Predicated region
        $region41: #{tpu_custom_call.1} parent=11 // pred_check
          %p409 = pneg %p250
        $region42: #{tpu_custom_call.1} parent=11 // pred_check_branch
          %411 = sbr.rel (%p409) target = $region44
        $region43: #{tpu_custom_call.1} parent=11 // pred_region
          _
        $region44: #{tpu_custom_call.1} parent=11 // pred_fallthru
          _
        // Predicated region
        $region45: #{tpu_custom_call.1} parent=11 // pred_check
          %p412 = pneg %p271
        $region46: #{tpu_custom_call.1} parent=11 // pred_check_branch
          %414 = sbr.rel (%p412) target = $region48
        $region47: #{tpu_custom_call.1} parent=11 // pred_region
          _
        $region48: #{tpu_custom_call.1} parent=11 // pred_fallthru
          _
        // Predicated region
        $region49: #{tpu_custom_call.1} parent=11 // pred_check
          %p415 = pneg %p292
        $region50: #{tpu_custom_call.1} parent=11 // pred_check_branch
          %417 = sbr.rel (%p415) target = $region52
        $region51: #{tpu_custom_call.1} parent=11 // pred_region
          %s419 = ssub.s32 256, 256
          %420 = vsyncadd [#allocation12], %s419
          %s421 = sshll.u32 [#allocation13], 4
          %s422 = int_to_ptr.vmem [resolvable:$true] %s421
          %427 = dma.hbm_to_vmem [thread:$0]  %s11, 256, %s422, [#allocation12], 64, 64, 4
        $region52: #{tpu_custom_call.1} parent=11 // pred_fallthru
          _
        // Predicated region
        $region53: #{tpu_custom_call.1} parent=11 // pred_check
          %p428 = pneg %p313
        $region54: #{tpu_custom_call.1} parent=11 // pred_check_branch
          %430 = sbr.rel (%p428) target = $region56
        $region55: #{tpu_custom_call.1} parent=11 // pred_region
          _
        $region56: #{tpu_custom_call.1} parent=11 // pred_fallthru
          _
      $region12: #{tpu_custom_call.1} parent=5 // pred_fallthru
        _
      %p431 = scmp.lt.s32.totalorder %s30, 2
      // Predicated region
      $region57: #{tpu_custom_call.1} parent=5 // pred_check
        %p432 = pneg %p431
      $region58: #{tpu_custom_call.1} parent=5 // pred_check_branch
        %434 = sbr.rel (%p432) target = $region60
      $region59: #{tpu_custom_call.1} parent=5 // pred_region
        // Predicated region
        $region61: #{tpu_custom_call.1} parent=59 // pred_check
          %p435 = pneg %p50
        $region62: #{tpu_custom_call.1} parent=59 // pred_check_branch
          %437 = sbr.rel (%p435) target = $region64
        $region63: #{tpu_custom_call.1} parent=59 // pred_region
          %s438 = sand.u32 %s40, 1
          %s439 = scalar_lea.sflag [#allocation3], %s438
          %s440 = sand.u32 %s40, 1
          %s441 = smul.addr %s440, 8
          %s442 = scalar_lea.vmem [#allocation2], %s441
          %s444 = ssub.s32 128, 128
          %445 = vsyncadd %s439, %s444
          %s446 = smul.addr %s30, 128
          %s447 = scalar_lea.hbm %s0, %s446
          %s449 = sshll.u32 %s442, 4
          %s450 = int_to_ptr.vmem [resolvable:$true] %s449
          %452 = dma.hbm_to_vmem [thread:$0]  %s447, 128, %s450, %s439
        $region64: #{tpu_custom_call.1} parent=59 // pred_fallthru
          _
        // Predicated region
        $region65: #{tpu_custom_call.1} parent=59 // pred_check
          %p453 = pneg %p76
        $region66: #{tpu_custom_call.1} parent=59 // pred_check_branch
          %455 = sbr.rel (%p453) target = $region68
        $region67: #{tpu_custom_call.1} parent=59 // pred_region
          %s456 = sand.u32 %s30, 1
          %s457 = scalar_lea.sflag [#allocation6], %s456
          %s458 = sand.u32 %s66, 1
          %s459 = smul.addr %s458, 8
          %s460 = scalar_lea.vmem [#allocation5], %s459
          %s462 = ssub.s32 128, 128
          %463 = vsyncadd %s457, %s462
          %s464 = smul.addr %s30, 128
          %s465 = scalar_lea.hbm %s1, %s464
          %s467 = sshll.u32 %s460, 4
          %s468 = int_to_ptr.vmem [resolvable:$true] %s467
          %470 = dma.hbm_to_vmem [thread:$0]  %s465, 128, %s468, %s457
        $region68: #{tpu_custom_call.1} parent=59 // pred_fallthru
          _
      $region60: #{tpu_custom_call.1} parent=5 // pred_fallthru
        _
      %p471 = scmp.le.s32.totalorder 1, %s30
      %p472 = scmp.lt.s32.totalorder %s30, 3
      %p473 = pnand %p471, %p472
      %p474 = pneg %p473
      // Predicated region
      $region69: #{tpu_custom_call.1} parent=5 // pred_check
        _
      $region70: #{tpu_custom_call.1} parent=5 // pred_check_branch
        %476 = sbr.rel (%p473) target = $region72
      $region71: #{tpu_custom_call.1} parent=5 // pred_region
        %s477 = ssub.s32 %s30, 1
        %s478 = sand.u32 %s43, 1
        %s479 = scalar_lea.sflag [#allocation3], %s478
        %s480 = sand.u32 %s43, 1
        %s481 = smul.addr %s480, 8
        %s482 = scalar_lea.vmem [#allocation2], %s481
        // Predicated region
        $region73: #{tpu_custom_call.1} parent=71 // pred_check
          %p483 = pneg %p56
        $region74: #{tpu_custom_call.1} parent=71 // pred_check_branch
          %485 = sbr.rel (%p483) target = $region76
        $region75: #{tpu_custom_call.1} parent=71 // pred_region
          %486 = dma.done %s479, 128
        $region76: #{tpu_custom_call.1} parent=71 // pred_fallthru
          _
        %s487 = sand.u32 %s35, 1
        %s488 = scalar_lea.sflag [#allocation6], %s487
        %s489 = sand.u32 %s69, 1
        %s490 = smul.addr %s489, 8
        %s491 = scalar_lea.vmem [#allocation5], %s490
        // Predicated region
        $region77: #{tpu_custom_call.1} parent=71 // pred_check
          %p492 = pneg %p82
        $region78: #{tpu_custom_call.1} parent=71 // pred_check_branch
          %494 = sbr.rel (%p492) target = $region80
        $region79: #{tpu_custom_call.1} parent=71 // pred_region
          %495 = dma.done %s488, 128
        $region80: #{tpu_custom_call.1} parent=71 // pred_fallthru
          _
        // Predicated region
        $region81: #{tpu_custom_call.1} parent=71 // pred_check
          %p496 = pneg %p145
        $region82: #{tpu_custom_call.1} parent=71 // pred_check_branch
          %498 = sbr.rel (%p496) target = $region84
        $region83: #{tpu_custom_call.1} parent=71 // pred_region
          %499 = dma.done [#allocation6], 256
        $region84: #{tpu_custom_call.1} parent=71 // pred_fallthru
          _
        // Predicated region
        $region85: #{tpu_custom_call.1} parent=71 // pred_check
          %p500 = pneg %p187
        $region86: #{tpu_custom_call.1} parent=71 // pred_check_branch
          %502 = sbr.rel (%p500) target = $region88
        $region87: #{tpu_custom_call.1} parent=71 // pred_region
          %503 = dma.done [#allocation9], 16
        $region88: #{tpu_custom_call.1} parent=71 // pred_fallthru
          _
        // Predicated region
        $region89: #{tpu_custom_call.1} parent=71 // pred_check
          %p504 = pneg %p208
        $region90: #{tpu_custom_call.1} parent=71 // pred_check_branch
          %506 = sbr.rel (%p504) target = $region92
        $region91: #{tpu_custom_call.1} parent=71 // pred_region
          %507 = dma.done [#allocation9], 16
        $region92: #{tpu_custom_call.1} parent=71 // pred_fallthru
          _
        // Predicated region
        $region93: #{tpu_custom_call.1} parent=71 // pred_check
          %p508 = pneg %p229
        $region94: #{tpu_custom_call.1} parent=71 // pred_check_branch
          %510 = sbr.rel (%p508) target = $region96
        $region95: #{tpu_custom_call.1} parent=71 // pred_region
          %511 = dma.done [#allocation12], 16
        $region96: #{tpu_custom_call.1} parent=71 // pred_fallthru
          _
        // Predicated region
        $region97: #{tpu_custom_call.1} parent=71 // pred_check
          %p512 = pneg %p292
        $region98: #{tpu_custom_call.1} parent=71 // pred_check_branch
          %514 = sbr.rel (%p512) target = $region100
        $region99: #{tpu_custom_call.1} parent=71 // pred_region
          %515 = dma.done [#allocation12], 256
        $region100: #{tpu_custom_call.1} parent=71 // pred_fallthru
          _
        %s516 = sand.u32 %s43, 1
        %s517 = scalar_lea.sflag [#allocation3], %s516
        %s518 = sand.u32 %s43, 1
        %s519 = smul.addr %s518, 8
        %s520 = scalar_lea.vmem [#allocation2], %s519
        %p521 = pneg %p56
        %p522 = pneg %p53
        %s523 = sand.u32 %s35, 1
        %s524 = scalar_lea.sflag [#allocation6], %s523
        %s525 = sand.u32 %s69, 1
        %s526 = smul.addr %s525, 8
        %s527 = scalar_lea.vmem [#allocation5], %s526
        %p528 = pneg %p82
        %p529 = pneg %p79
        %p530 = pneg %p103
        %p531 = pneg %p100
        %p532 = pneg %p124
        %p533 = pneg %p121
        %p534 = pneg %p145
        %p535 = pneg %p142
        %p536 = pneg %p166
        %p537 = pneg %p163
        %p538 = pneg %p187
        %p539 = pneg %p184
        %p540 = pneg %p208
        %p541 = pneg %p205
        %p542 = pneg %p229
        %p543 = pneg %p226
        %p544 = pneg %p250
        %p545 = pneg %p247
        %p546 = pneg %p271
        %p547 = pneg %p268
        %p548 = pneg %p292
        %p549 = pneg %p289
        %p550 = pneg %p313
        %p551 = pneg %p310
        %p552 = pneg %p339
        %p553 = pneg %p336
        %s554 = sand.u32 %s326, 1
        %s555 = scalar_lea.sflag [#allocation4], %s554
        %s556 = sand.u32 %s326, 1
        %s557 = smul.addr %s556, 8
        %s558 = scalar_lea.vmem [#allocation14], %s557
        %v560 = vld [vmem:[%s482] sm:$0xff]
        %v561 = vld [vmem:[%s491] sm:$0xff]
        %v562 = vld [vmem:[%s2] sm:$0x1]
        %v563 = vld [vmem:[%s3] sm:$0x1]
        %vm564 = vcmask 261120
        %v565 = vsel %vm564, %v560, 0.0
        %566 = vadd.xlane.f32.xlu0 %v565
        %v567 = vpop.xlane.xlu0 %566
        %v568 = vrcp.pop 32.0
        %v569 = vmul.f32 %v567, %v568
        %v570 = vsub.f32 %v560, %v569
        %v571 = vmul.f32 %v570, %v570
        %v572 = vsel %vm564, %v571, 0.0
        %573 = vadd.xlane.f32.xlu0 %v572
        %v574 = vpop.xlane.xlu0 %573
        %v575 = vmul.f32 %v574, %v568
        %v576 = vadd.f32 %v575, 1e-05
        %v577 = vrsqrt.pop %v576
        %v578 = vmul.f32 %v570, %v577
        %v580 = vlaneseq
        %v581 = vshrl.u32 %v580, 7
        %v582 = vsub.s32 0, %v581
        %v583 = vrot.slane %v562, %v582
        %v585 = vmul.f32 %v578, %v583
        %v587 = vlaneseq
        %v588 = vshrl.u32 %v587, 7
        %v589 = vsub.s32 0, %v588
        %v590 = vrot.slane %v563, %v589
        %v592 = vadd.f32 %v585, %v590
        %v593 = vadd.f32 %v592, %v561
        %v594 = vpack.c.bf16 %v593, %v593
        %v595 = vld [vmem:[#allocation7] sm:$0xf]
        %v596 = vld [vmem:[#allocation7 + $0x4] sm:$0xf]
        %v597 = vld [vmem:[#allocation7 + $0x8] sm:$0xf]
        %v598 = vld [vmem:[#allocation7 + $0xc] sm:$0xf]
        %v603 = vunpack.c.l.b16 %v595
        %v604 = vunpack.c.l.b16 %v596
        %v605 = vunpack.c.l.b16 %v597
        %v606 = vunpack.c.l.b16 %v598
        %v607 = vpack.c.b16 %v604, %v603
        %v608 = vpack.c.b16 %v606, %v605
        %v612 = vsel %vm564, %v594, 0
        %614 = vmatprep.subr.bf16.mxu0 0
        %615 = vmatpush1.bf16.msra.mxu0 %v607
        %616 = vmatprep.subr.bf16.mxu0 0
        %617 = vmatpush1.bf16.msra.mxu0 %v608
        %618 = vmatprep.subr.bf16.mxu0 0
        %619 = vmatpush1.bf16.msra.mxu0 0
        %620 = vmatprep.subr.bf16.mxu0 0
        %621 = vmatpush1.bf16.msra.mxu0 0
        %622 = vmatprep.subr.bf16.mxu0 0
        %623 = vmatpush1.bf16.msra.mxu0 0
        %624 = vmatprep.subr.bf16.mxu0 0
        %625 = vmatpush1.bf16.msra.mxu0 0
        %626 = vmatprep.subr.bf16.mxu0 0
        %627 = vmatpush1.bf16.msra.mxu0 0
        %628 = vmatprep.subr.bf16.mxu0 0
        %629 = vmatpush1.bf16.msra.mxu0 0
        %630 = vmatprep.subr.bf16.mxu0 0
        %631 = vmatpush1.bf16.msra.mxu0 0
        %632 = vmatprep.subr.bf16.mxu0 0
        %633 = vmatpush1.bf16.msra.mxu0 0
        %634 = vmatprep.subr.bf16.mxu0 0
        %635 = vmatpush1.bf16.msra.mxu0 0
        %636 = vmatprep.subr.bf16.mxu0 0
        %637 = vmatpush1.bf16.msra.mxu0 0
        %638 = vmatprep.subr.bf16.mxu0 0
        %639 = vmatpush1.bf16.msra.mxu0 0
        %640 = vmatprep.subr.bf16.mxu0 0
        %641 = vmatpush1.bf16.msra.mxu0 0
        %642 = vmatprep.subr.bf16.mxu0 0
        %643 = vmatpush1.bf16.msra.mxu0 0
        %644 = vmatprep.subr.bf16.mxu0 0
        %645 = vmatpush1.bf16.msra.mxu0 0
        %646 = vmatprep.mubr.bf16.mxu0 0
        %647 = vmatmul.mubr.bf16.gmra.mrb[0].mxu0 %v612
        %v648 = vpop.f32.mrb[0].mxu0
        %v649 = vadd.f32 0.0, %v648
        %v650 = vpop.f32.mrb[0].mxu0
        %v651 = vpop.f32.mrb[0].mxu0
        %v652 = vpop.f32.mrb[0].mxu0
        %653 = vdwg.mxu0
        %v654 = vpack.c.bf16 %v649, %v649
        %656 = vrot.lane.b32.xlu0 %v654, 96
        %v657 = vpop.permute.xlu0 %656
        %vm658 = vcmask 64512
        %v660 = vsel %vm658, %v654, 0
        %v663 = vsel %vm658, %v657, 0
        %665 = vmatprep.subr.bf16.mxu0 0
        %666 = vmatpush1.bf16.xpose.msra.mxu0 %v663
        %667 = vmatprep.subr.bf16.mxu0 0
        %668 = vmatpush1.bf16.xpose.msra.mxu0 0
        %669 = vmatprep.subr.bf16.mxu0 0
        %670 = vmatpush1.bf16.xpose.msra.mxu0 0
        %671 = vmatprep.subr.bf16.mxu0 0
        %672 = vmatpush1.bf16.xpose.msra.mxu0 0
        %673 = vmatprep.subr.bf16.mxu0 0
        %674 = vmatpush1.bf16.xpose.msra.mxu0 0
        %675 = vmatprep.subr.bf16.mxu0 0
        %676 = vmatpush1.bf16.xpose.msra.mxu0 0
        %677 = vmatprep.subr.bf16.mxu0 0
        %678 = vmatpush1.bf16.xpose.msra.mxu0 0
        %679 = vmatprep.subr.bf16.mxu0 0
        %680 = vmatpush1.bf16.xpose.msra.mxu0 0
        %681 = vmatprep.subr.bf16.mxu0 0
        %682 = vmatpush1.bf16.xpose.msra.mxu0 0
        %683 = vmatprep.subr.bf16.mxu0 0
        %684 = vmatpush1.bf16.xpose.msra.mxu0 0
        %685 = vmatprep.subr.bf16.mxu0 0
        %686 = vmatpush1.bf16.xpose.msra.mxu0 0
        %687 = vmatprep.subr.bf16.mxu0 0
        %688 = vmatpush1.bf16.xpose.msra.mxu0 0
        %689 = vmatprep.subr.bf16.mxu0 0
        %690 = vmatpush1.bf16.xpose.msra.mxu0 0
        %691 = vmatprep.subr.bf16.mxu0 0
        %692 = vmatpush1.bf16.xpose.msra.mxu0 0
        %693 = vmatprep.subr.bf16.mxu0 0
        %694 = vmatpush1.bf16.xpose.msra.mxu0 0
        %695 = vmatprep.subr.bf16.mxu0 0
        %696 = vmatpush1.bf16.xpose.msra.mxu0 0
        %697 = vmatprep.mubr.bf16.mxu0 0
        %698 = vmatmul.mubr.bf16.gmra.mrb[0].mxu0 %v660
        %v699 = vpop.f32.mrb[0].mxu0
        %v700 = vadd.f32 0.0, %v699
        %v701 = vpop.f32.mrb[0].mxu0
        %v702 = vpop.f32.mrb[0].mxu0
        %v703 = vpop.f32.mrb[0].mxu0
        %704 = vdwg.mxu0
        %v705 = vmul.f32 %v700, 0.35355338
        %v706 = vsel %vm658, %v705, -inf
        %707 = vmax.xlane.f32.xlu0 %v706
        %v708 = vpop.xlane.xlu0 %707
        %v709 = vsub.f32 %v705, %v708
        %v710 = vmul.f32 %v709, 1.442695
        %v711 = vpow.pop %v710
        %v712 = vsel %vm658, %v711, 0.0
        %713 = vadd.xlane.f32.xlu0 %v712
        %v714 = vpop.xlane.xlu0 %713
        %v715 = vrcp.pop %v714
        %v716 = vmul.f32 %v711, %v715
        %v717 = vpack.c.bf16 %v716, %v716
        %718 = vrot.lane.b32.xlu0 %v654, 64
        %v719 = vpop.permute.xlu0 %718
        %v721 = vsel %vm658, %v717, 0
        %vm723 = vcmask 1043456
        %v725 = vsel %vm723, %v719, 0
        %727 = vmatprep.subr.bf16.mxu0 0
        %728 = vmatpush1.bf16.msra.mxu0 %v725
        %729 = vmatprep.subr.bf16.mxu0 0
        %730 = vmatpush1.bf16.msra.mxu0 0
        %731 = vmatprep.subr.bf16.mxu0 0
        %732 = vmatpush1.bf16.msra.mxu0 0
        %733 = vmatprep.subr.bf16.mxu0 0
        %734 = vmatpush1.bf16.msra.mxu0 0
        %735 = vmatprep.subr.bf16.mxu0 0
        %736 = vmatpush1.bf16.msra.mxu0 0
        %737 = vmatprep.subr.bf16.mxu0 0
        %738 = vmatpush1.bf16.msra.mxu0 0
        %739 = vmatprep.subr.bf16.mxu0 0
        %740 = vmatpush1.bf16.msra.mxu0 0
        %741 = vmatprep.subr.bf16.mxu0 0
        %742 = vmatpush1.bf16.msra.mxu0 0
        %743 = vmatprep.subr.bf16.mxu0 0
        %744 = vmatpush1.bf16.msra.mxu0 0
        %745 = vmatprep.subr.bf16.mxu0 0
        %746 = vmatpush1.bf16.msra.mxu0 0
        %747 = vmatprep.subr.bf16.mxu0 0
        %748 = vmatpush1.bf16.msra.mxu0 0
        %749 = vmatprep.subr.bf16.mxu0 0
        %750 = vmatpush1.bf16.msra.mxu0 0
        %751 = vmatprep.subr.bf16.mxu0 0
        %752 = vmatpush1.bf16.msra.mxu0 0
        %753 = vmatprep.subr.bf16.mxu0 0
        %754 = vmatpush1.bf16.msra.mxu0 0
        %755 = vmatprep.subr.bf16.mxu0 0
        %756 = vmatpush1.bf16.msra.mxu0 0
        %757 = vmatprep.subr.bf16.mxu0 0
        %758 = vmatpush1.bf16.msra.mxu0 0
        %759 = vmatprep.mubr.bf16.mxu0 0
        %760 = vmatmul.mubr.bf16.gmra.mrb[0].mxu0 %v721
        %v761 = vpop.f32.mrb[0].mxu0
        %v762 = vadd.f32 0.0, %v761
        %v763 = vpop.f32.mrb[0].mxu0
        %v764 = vpop.f32.mrb[0].mxu0
        %v765 = vpop.f32.mrb[0].mxu0
        %766 = vdwg.mxu0
        %v767 = vpack.c.bf16 %v762, %v762
        %768 = vrot.lane.b32.xlu0 %v654, 120
        %v769 = vpop.permute.xlu0 %768
        %770 = vrot.lane.b32.xlu0 %v654, 88
        %v771 = vpop.permute.xlu0 %770
        %v773 = vsel %vm658, %v769, 0
        %v776 = vsel %vm658, %v771, 0
        %778 = vmatprep.subr.bf16.mxu0 0
        %779 = vmatpush1.bf16.xpose.msra.mxu0 %v776
        %780 = vmatprep.subr.bf16.mxu0 0
        %781 = vmatpush1.bf16.xpose.msra.mxu0 0
        %782 = vmatprep.subr.bf16.mxu0 0
        %783 = vmatpush1.bf16.xpose.msra.mxu0 0
        %784 = vmatprep.subr.bf16.mxu0 0
        %785 = vmatpush1.bf16.xpose.msra.mxu0 0
        %786 = vmatprep.subr.bf16.mxu0 0
        %787 = vmatpush1.bf16.xpose.msra.mxu0 0
        %788 = vmatprep.subr.bf16.mxu0 0
        %789 = vmatpush1.bf16.xpose.msra.mxu0 0
        %790 = vmatprep.subr.bf16.mxu0 0
        %791 = vmatpush1.bf16.xpose.msra.mxu0 0
        %792 = vmatprep.subr.bf16.mxu0 0
        %793 = vmatpush1.bf16.xpose.msra.mxu0 0
        %794 = vmatprep.subr.bf16.mxu0 0
        %795 = vmatpush1.bf16.xpose.msra.mxu0 0
        %796 = vmatprep.subr.bf16.mxu0 0
        %797 = vmatpush1.bf16.xpose.msra.mxu0 0
        %798 = vmatprep.subr.bf16.mxu0 0
        %799 = vmatpush1.bf16.xpose.msra.mxu0 0
        %800 = vmatprep.subr.bf16.mxu0 0
        %801 = vmatpush1.bf16.xpose.msra.mxu0 0
        %802 = vmatprep.subr.bf16.mxu0 0
        %803 = vmatpush1.bf16.xpose.msra.mxu0 0
        %804 = vmatprep.subr.bf16.mxu0 0
        %805 = vmatpush1.bf16.xpose.msra.mxu0 0
        %806 = vmatprep.subr.bf16.mxu0 0
        %807 = vmatpush1.bf16.xpose.msra.mxu0 0
        %808 = vmatprep.subr.bf16.mxu0 0
        %809 = vmatpush1.bf16.xpose.msra.mxu0 0
        %810 = vmatprep.mubr.bf16.mxu0 0
        %811 = vmatmul.mubr.bf16.gmra.mrb[0].mxu0 %v773
        %v812 = vpop.f32.mrb[0].mxu0
        %v813 = vadd.f32 0.0, %v812
        %v814 = vpop.f32.mrb[0].mxu0
        %v815 = vpop.f32.mrb[0].mxu0
        %v816 = vpop.f32.mrb[0].mxu0
        %817 = vdwg.mxu0
        %v818 = vmul.f32 %v813, 0.35355338
        %v819 = vsel %vm658, %v818, -inf
        %820 = vmax.xlane.f32.xlu0 %v819
        %v821 = vpop.xlane.xlu0 %820
        %v822 = vsub.f32 %v818, %v821
        %v823 = vmul.f32 %v822, 1.442695
        %v824 = vpow.pop %v823
        %v825 = vsel %vm658, %v824, 0.0
        %826 = vadd.xlane.f32.xlu0 %v825
        %v827 = vpop.xlane.xlu0 %826
        %v828 = vrcp.pop %v827
        %v829 = vmul.f32 %v824, %v828
        %v830 = vpack.c.bf16 %v829, %v829
        %831 = vrot.lane.b32.xlu0 %v654, 56
        %v832 = vpop.permute.xlu0 %831
        %v834 = vsel %vm658, %v830, 0
        %v837 = vsel %vm723, %v832, 0
        %839 = vmatprep.subr.bf16.mxu0 0
        %840 = vmatpush1.bf16.msra.mxu0 %v837
        %841 = vmatprep.subr.bf16.mxu0 0
        %842 = vmatpush1.bf16.msra.mxu0 0
        %843 = vmatprep.subr.bf16.mxu0 0
        %844 = vmatpush1.bf16.msra.mxu0 0
        %845 = vmatprep.subr.bf16.mxu0 0
        %846 = vmatpush1.bf16.msra.mxu0 0
        %847 = vmatprep.subr.bf16.mxu0 0
        %848 = vmatpush1.bf16.msra.mxu0 0
        %849 = vmatprep.subr.bf16.mxu0 0
        %850 = vmatpush1.bf16.msra.mxu0 0
        %851 = vmatprep.subr.bf16.mxu0 0
        %852 = vmatpush1.bf16.msra.mxu0 0
        %853 = vmatprep.subr.bf16.mxu0 0
        %854 = vmatpush1.bf16.msra.mxu0 0
        %855 = vmatprep.subr.bf16.mxu0 0
        %856 = vmatpush1.bf16.msra.mxu0 0
        %857 = vmatprep.subr.bf16.mxu0 0
        %858 = vmatpush1.bf16.msra.mxu0 0
        %859 = vmatprep.subr.bf16.mxu0 0
        %860 = vmatpush1.bf16.msra.mxu0 0
        %861 = vmatprep.subr.bf16.mxu0 0
        %862 = vmatpush1.bf16.msra.mxu0 0
        %863 = vmatprep.subr.bf16.mxu0 0
        %864 = vmatpush1.bf16.msra.mxu0 0
        %865 = vmatprep.subr.bf16.mxu0 0
        %866 = vmatpush1.bf16.msra.mxu0 0
        %867 = vmatprep.subr.bf16.mxu0 0
        %868 = vmatpush1.bf16.msra.mxu0 0
        %869 = vmatprep.subr.bf16.mxu0 0
        %870 = vmatpush1.bf16.msra.mxu0 0
        %871 = vmatprep.mubr.bf16.mxu0 0
        %872 = vmatmul.mubr.bf16.gmra.mrb[0].mxu0 %v834
        %v873 = vpop.f32.mrb[0].mxu0
        %v874 = vadd.f32 0.0, %v873
        %v875 = vpop.f32.mrb[0].mxu0
        %v876 = vpop.f32.mrb[0].mxu0
        %v877 = vpop.f32.mrb[0].mxu0
        %878 = vdwg.mxu0
        %v879 = vpack.c.bf16 %v874, %v874
        %880 = vrot.lane.b32.xlu0 %v654, 112
        %v881 = vpop.permute.xlu0 %880
        %882 = vrot.lane.b32.xlu0 %v654, 80
        %v883 = vpop.permute.xlu0 %882
        %v885 = vsel %vm658, %v881, 0
        %v888 = vsel %vm658, %v883, 0
        %890 = vmatprep.subr.bf16.mxu0 0
        %891 = vmatpush1.bf16.xpose.msra.mxu0 %v888
        %892 = vmatprep.subr.bf16.mxu0 0
        %893 = vmatpush1.bf16.xpose.msra.mxu0 0
        %894 = vmatprep.subr.bf16.mxu0 0
        %895 = vmatpush1.bf16.xpose.msra.mxu0 0
        %896 = vmatprep.subr.bf16.mxu0 0
        %897 = vmatpush1.bf16.xpose.msra.mxu0 0
        %898 = vmatprep.subr.bf16.mxu0 0
        %899 = vmatpush1.bf16.xpose.msra.mxu0 0
        %900 = vmatprep.subr.bf16.mxu0 0
        %901 = vmatpush1.bf16.xpose.msra.mxu0 0
        %902 = vmatprep.subr.bf16.mxu0 0
        %903 = vmatpush1.bf16.xpose.msra.mxu0 0
        %904 = vmatprep.subr.bf16.mxu0 0
        %905 = vmatpush1.bf16.xpose.msra.mxu0 0
        %906 = vmatprep.subr.bf16.mxu0 0
        %907 = vmatpush1.bf16.xpose.msra.mxu0 0
        %908 = vmatprep.subr.bf16.mxu0 0
        %909 = vmatpush1.bf16.xpose.msra.mxu0 0
        %910 = vmatprep.subr.bf16.mxu0 0
        %911 = vmatpush1.bf16.xpose.msra.mxu0 0
        %912 = vmatprep.subr.bf16.mxu0 0
        %913 = vmatpush1.bf16.xpose.msra.mxu0 0
        %914 = vmatprep.subr.bf16.mxu0 0
        %915 = vmatpush1.bf16.xpose.msra.mxu0 0
        %916 = vmatprep.subr.bf16.mxu0 0
        %917 = vmatpush1.bf16.xpose.msra.mxu0 0
        %918 = vmatprep.subr.bf16.mxu0 0
        %919 = vmatpush1.bf16.xpose.msra.mxu0 0
        %920 = vmatprep.subr.bf16.mxu0 0
        %921 = vmatpush1.bf16.xpose.msra.mxu0 0
        %922 = vmatprep.mubr.bf16.mxu0 0
        %923 = vmatmul.mubr.bf16.gmra.mrb[0].mxu0 %v885
        %v924 = vpop.f32.mrb[0].mxu0
        %v925 = vadd.f32 0.0, %v924
        %v926 = vpop.f32.mrb[0].mxu0
        %v927 = vpop.f32.mrb[0].mxu0
        %v928 = vpop.f32.mrb[0].mxu0
        %929 = vdwg.mxu0
        %v930 = vmul.f32 %v925, 0.35355338
        %v931 = vsel %vm658, %v930, -inf
        %932 = vmax.xlane.f32.xlu0 %v931
        %v933 = vpop.xlane.xlu0 %932
        %v934 = vsub.f32 %v930, %v933
        %v935 = vmul.f32 %v934, 1.442695
        %v936 = vpow.pop %v935
        %v937 = vsel %vm658, %v936, 0.0
        %938 = vadd.xlane.f32.xlu0 %v937
        %v939 = vpop.xlane.xlu0 %938
        %v940 = vrcp.pop %v939
        %v941 = vmul.f32 %v936, %v940
        %v942 = vpack.c.bf16 %v941, %v941
        %943 = vrot.lane.b32.xlu0 %v654, 48
        %v944 = vpop.permute.xlu0 %943
        %v946 = vsel %vm658, %v942, 0
        %v949 = vsel %vm723, %v944, 0
        %951 = vmatprep.subr.bf16.mxu0 0
        %952 = vmatpush1.bf16.msra.mxu0 %v949
        %953 = vmatprep.subr.bf16.mxu0 0
        %954 = vmatpush1.bf16.msra.mxu0 0
        %955 = vmatprep.subr.bf16.mxu0 0
        %956 = vmatpush1.bf16.msra.mxu0 0
        %957 = vmatprep.subr.bf16.mxu0 0
        %958 = vmatpush1.bf16.msra.mxu0 0
        %959 = vmatprep.subr.bf16.mxu0 0
        %960 = vmatpush1.bf16.msra.mxu0 0
        %961 = vmatprep.subr.bf16.mxu0 0
        %962 = vmatpush1.bf16.msra.mxu0 0
        %963 = vmatprep.subr.bf16.mxu0 0
        %964 = vmatpush1.bf16.msra.mxu0 0
        %965 = vmatprep.subr.bf16.mxu0 0
        %966 = vmatpush1.bf16.msra.mxu0 0
        %967 = vmatprep.subr.bf16.mxu0 0
        %968 = vmatpush1.bf16.msra.mxu0 0
        %969 = vmatprep.subr.bf16.mxu0 0
        %970 = vmatpush1.bf16.msra.mxu0 0
        %971 = vmatprep.subr.bf16.mxu0 0
        %972 = vmatpush1.bf16.msra.mxu0 0
        %973 = vmatprep.subr.bf16.mxu0 0
        %974 = vmatpush1.bf16.msra.mxu0 0
        %975 = vmatprep.subr.bf16.mxu0 0
        %976 = vmatpush1.bf16.msra.mxu0 0
        %977 = vmatprep.subr.bf16.mxu0 0
        %978 = vmatpush1.bf16.msra.mxu0 0
        %979 = vmatprep.subr.bf16.mxu0 0
        %980 = vmatpush1.bf16.msra.mxu0 0
        %981 = vmatprep.subr.bf16.mxu0 0
        %982 = vmatpush1.bf16.msra.mxu0 0
        %983 = vmatprep.mubr.bf16.mxu0 0
        %984 = vmatmul.mubr.bf16.gmra.mrb[0].mxu0 %v946
        %v985 = vpop.f32.mrb[0].mxu0
        %v986 = vadd.f32 0.0, %v985
        %v987 = vpop.f32.mrb[0].mxu0
        %v988 = vpop.f32.mrb[0].mxu0
        %v989 = vpop.f32.mrb[0].mxu0
        %990 = vdwg.mxu0
        %v991 = vpack.c.bf16 %v986, %v986
        %992 = vrot.lane.b32.xlu0 %v654, 104
        %v993 = vpop.permute.xlu0 %992
        %994 = vrot.lane.b32.xlu0 %v654, 72
        %v995 = vpop.permute.xlu0 %994
        %v997 = vsel %vm658, %v993, 0
        %v1000 = vsel %vm658, %v995, 0
        %1002 = vmatprep.subr.bf16.mxu0 0
        %1003 = vmatpush1.bf16.xpose.msra.mxu0 %v1000
        %1004 = vmatprep.subr.bf16.mxu0 0
        %1005 = vmatpush1.bf16.xpose.msra.mxu0 0
        %1006 = vmatprep.subr.bf16.mxu0 0
        %1007 = vmatpush1.bf16.xpose.msra.mxu0 0
        %1008 = vmatprep.subr.bf16.mxu0 0
        %1009 = vmatpush1.bf16.xpose.msra.mxu0 0
        %1010 = vmatprep.subr.bf16.mxu0 0
        %1011 = vmatpush1.bf16.xpose.msra.mxu0 0
        %1012 = vmatprep.subr.bf16.mxu0 0
        %1013 = vmatpush1.bf16.xpose.msra.mxu0 0
        %1014 = vmatprep.subr.bf16.mxu0 0
        %1015 = vmatpush1.bf16.xpose.msra.mxu0 0
        %1016 = vmatprep.subr.bf16.mxu0 0
        %1017 = vmatpush1.bf16.xpose.msra.mxu0 0
        %1018 = vmatprep.subr.bf16.mxu0 0
        %1019 = vmatpush1.bf16.xpose.msra.mxu0 0
        %1020 = vmatprep.subr.bf16.mxu0 0
        %1021 = vmatpush1.bf16.xpose.msra.mxu0 0
        %1022 = vmatprep.subr.bf16.mxu0 0
        %1023 = vmatpush1.bf16.xpose.msra.mxu0 0
        %1024 = vmatprep.subr.bf16.mxu0 0
        %1025 = vmatpush1.bf16.xpose.msra.mxu0 0
        %1026 = vmatprep.subr.bf16.mxu0 0
        %1027 = vmatpush1.bf16.xpose.msra.mxu0 0
        %1028 = vmatprep.subr.bf16.mxu0 0
        %1029 = vmatpush1.bf16.xpose.msra.mxu0 0
        %1030 = vmatprep.subr.bf16.mxu0 0
        %1031 = vmatpush1.bf16.xpose.msra.mxu0 0
        %1032 = vmatprep.subr.bf16.mxu0 0
        %1033 = vmatpush1.bf16.xpose.msra.mxu0 0
        %1034 = vmatprep.mubr.bf16.mxu0 0
        %1035 = vmatmul.mubr.bf16.gmra.mrb[0].mxu0 %v997
        %v1036 = vpop.f32.mrb[0].mxu0
        %v1037 = vadd.f32 0.0, %v1036
        %v1038 = vpop.f32.mrb[0].mxu0
        %v1039 = vpop.f32.mrb[0].mxu0
        %v1040 = vpop.f32.mrb[0].mxu0
        %1041 = vdwg.mxu0
        %v1042 = vmul.f32 %v1037, 0.35355338
        %v1043 = vsel %vm658, %v1042, -inf
        %1044 = vmax.xlane.f32.xlu0 %v1043
        %v1045 = vpop.xlane.xlu0 %1044
        %v1046 = vsub.f32 %v1042, %v1045
        %v1047 = vmul.f32 %v1046, 1.442695
        %v1048 = vpow.pop %v1047
        %v1049 = vsel %vm658, %v1048, 0.0
        %1050 = vadd.xlane.f32.xlu0 %v1049
        %v1051 = vpop.xlane.xlu0 %1050
        %v1052 = vrcp.pop %v1051
        %v1053 = vmul.f32 %v1048, %v1052
        %v1054 = vpack.c.bf16 %v1053, %v1053
        %1055 = vrot.lane.b32.xlu0 %v654, 40
        %v1056 = vpop.permute.xlu0 %1055
        %v1058 = vsel %vm658, %v1054, 0
        %v1061 = vsel %vm723, %v1056, 0
        %1063 = vmatprep.subr.bf16.mxu0 0
        %1064 = vmatpush1.bf16.msra.mxu0 %v1061
        %1065 = vmatprep.subr.bf16.mxu0 0
        %1066 = vmatpush1.bf16.msra.mxu0 0
        %1067 = vmatprep.subr.bf16.mxu0 0
        %1068 = vmatpush1.bf16.msra.mxu0 0
        %1069 = vmatprep.subr.bf16.mxu0 0
        %1070 = vmatpush1.bf16.msra.mxu0 0
        %1071 = vmatprep.subr.bf16.mxu0 0
        %1072 = vmatpush1.bf16.msra.mxu0 0
        %1073 = vmatprep.subr.bf16.mxu0 0
        %1074 = vmatpush1.bf16.msra.mxu0 0
        %1075 = vmatprep.subr.bf16.mxu0 0
        %1076 = vmatpush1.bf16.msra.mxu0 0
        %1077 = vmatprep.subr.bf16.mxu0 0
        %1078 = vmatpush1.bf16.msra.mxu0 0
        %1079 = vmatprep.subr.bf16.mxu0 0
        %1080 = vmatpush1.bf16.msra.mxu0 0
        %1081 = vmatprep.subr.bf16.mxu0 0
        %1082 = vmatpush1.bf16.msra.mxu0 0
        %1083 = vmatprep.subr.bf16.mxu0 0
        %1084 = vmatpush1.bf16.msra.mxu0 0
        %1085 = vmatprep.subr.bf16.mxu0 0
        %1086 = vmatpush1.bf16.msra.mxu0 0
        %1087 = vmatprep.subr.bf16.mxu0 0
        %1088 = vmatpush1.bf16.msra.mxu0 0
        %1089 = vmatprep.subr.bf16.mxu0 0
        %1090 = vmatpush1.bf16.msra.mxu0 0
        %1091 = vmatprep.subr.bf16.mxu0 0
        %1092 = vmatpush1.bf16.msra.mxu0 0
        %1093 = vmatprep.subr.bf16.mxu0 0
        %1094 = vmatpush1.bf16.msra.mxu0 0
        %1095 = vmatprep.mubr.bf16.mxu0 0
        %1096 = vmatmul.mubr.bf16.gmra.mrb[0].mxu0 %v1058
        %v1097 = vpop.f32.mrb[0].mxu0
        %v1098 = vadd.f32 0.0, %v1097
        %v1099 = vpop.f32.mrb[0].mxu0
        %v1100 = vpop.f32.mrb[0].mxu0
        %v1101 = vpop.f32.mrb[0].mxu0
        %1102 = vdwg.mxu0
        %v1103 = vpack.c.bf16 %v1098, %v1098
        %1105 = vrot.lane.b32.xlu0 %v879, 8
        %v1106 = vpop.permute.xlu0 %1105
        %1108 = vrot.lane.b32.xlu0 %v991, 16
        %v1109 = vpop.permute.xlu0 %1108
        %1111 = vrot.lane.b32.xlu0 %v1103, 24
        %v1112 = vpop.permute.xlu0 %1111
        %v1115 = vsel %vm658, %v767, %v1106
        %vm1116 = vcmask 130048
        %v1118 = vsel %vm1116, %v1115, %v1109
        %vm1119 = vcmask 195584
        %v1121 = vsel %vm1119, %v1118, %v1112
        %v1122 = vld [vmem:[%s5] sm:$0xf]
        %v1123 = vld [vmem:[%s5 + $0x4] sm:$0xf]
        %v1124 = vld [vmem:[%s5 + $0x8] sm:$0xf]
        %v1125 = vld [vmem:[%s5 + $0xc] sm:$0xf]
        %v1126 = vld [vmem:[#allocation8] sm:$0x1]
        %v1128 = vlaneseq
        %v1129 = vshrl.u32 %v1128, 7
        %v1130 = vsub.s32 0, %v1129
        %v1131 = vrot.slane %v1126, %v1130
        %v1137 = vunpack.c.l.b16 %v1122
        %v1138 = vunpack.c.l.b16 %v1123
        %v1139 = vunpack.c.l.b16 %v1124
        %v1140 = vunpack.c.l.b16 %v1125
        %v1141 = vpack.c.b16 %v1138, %v1137
        %v1142 = vpack.c.b16 %v1140, %v1139
        %v1145 = vsel %vm564, %v1121, 0
        %1147 = vmatprep.subr.bf16.mxu0 0
        %1148 = vmatpush1.bf16.msra.mxu0 %v1141
        %1149 = vmatprep.subr.bf16.mxu0 0
        %1150 = vmatpush1.bf16.msra.mxu0 %v1142
        %1151 = vmatprep.subr.bf16.mxu0 0
        %1152 = vmatpush1.bf16.msra.mxu0 0
        %1153 = vmatprep.subr.bf16.mxu0 0
        %1154 = vmatpush1.bf16.msra.mxu0 0
        %1155 = vmatprep.subr.bf16.mxu0 0
        %1156 = vmatpush1.bf16.msra.mxu0 0
        %1157 = vmatprep.subr.bf16.mxu0 0
        %1158 = vmatpush1.bf16.msra.mxu0 0
        %1159 = vmatprep.subr.bf16.mxu0 0
        %1160 = vmatpush1.bf16.msra.mxu0 0
        %1161 = vmatprep.subr.bf16.mxu0 0
        %1162 = vmatpush1.bf16.msra.mxu0 0
        %1163 = vmatprep.subr.bf16.mxu0 0
        %1164 = vmatpush1.bf16.msra.mxu0 0
        %1165 = vmatprep.subr.bf16.mxu0 0
        %1166 = vmatpush1.bf16.msra.mxu0 0
        %1167 = vmatprep.subr.bf16.mxu0 0
        %1168 = vmatpush1.bf16.msra.mxu0 0
        %1169 = vmatprep.subr.bf16.mxu0 0
        %1170 = vmatpush1.bf16.msra.mxu0 0
        %1171 = vmatprep.subr.bf16.mxu0 0
        %1172 = vmatpush1.bf16.msra.mxu0 0
        %1173 = vmatprep.subr.bf16.mxu0 0
        %1174 = vmatpush1.bf16.msra.mxu0 0
        %1175 = vmatprep.subr.bf16.mxu0 0
        %1176 = vmatpush1.bf16.msra.mxu0 0
        %1177 = vmatprep.subr.bf16.mxu0 0
        %1178 = vmatpush1.bf16.msra.mxu0 0
        %1179 = vmatprep.mubr.bf16.mxu0 0
        %1180 = vmatmul.mubr.bf16.gmra.mrb[0].mxu0 %v1145
        %v1181 = vpop.f32.mrb[0].mxu0
        %v1182 = vadd.f32 %v1131, %v1181
        %v1183 = vpop.f32.mrb[0].mxu0
        %v1184 = vpop.f32.mrb[0].mxu0
        %v1185 = vpop.f32.mrb[0].mxu0
        %1186 = vdwg.mxu0
        %v1187 = vadd.f32 %v560, %v1182
        %v1188 = vld [vmem:[#allocation10] sm:$0x1]
        %v1189 = vld [vmem:[#allocation11] sm:$0x1]
        %v1190 = vsel %vm564, %v1187, 0.0
        %1191 = vadd.xlane.f32.xlu0 %v1190
        %v1192 = vpop.xlane.xlu0 %1191
        %v1193 = vmul.f32 %v1192, %v568
        %v1194 = vsub.f32 %v1187, %v1193
        %v1195 = vmul.f32 %v1194, %v1194
        %v1196 = vsel %vm564, %v1195, 0.0
        %1197 = vadd.xlane.f32.xlu0 %v1196
        %v1198 = vpop.xlane.xlu0 %1197
        %v1199 = vmul.f32 %v1198, %v568
        %v1200 = vadd.f32 %v1199, 1e-05
        %v1201 = vrsqrt.pop %v1200
        %v1202 = vmul.f32 %v1194, %v1201
        %v1204 = vlaneseq
        %v1205 = vshrl.u32 %v1204, 7
        %v1206 = vsub.s32 0, %v1205
        %v1207 = vrot.slane %v1188, %v1206
        %v1209 = vmul.f32 %v1202, %v1207
        %v1211 = vlaneseq
        %v1212 = vshrl.u32 %v1211, 7
        %v1213 = vsub.s32 0, %v1212
        %v1214 = vrot.slane %v1189, %v1213
        %v1216 = vadd.f32 %v1209, %v1214
        %v1217 = vpack.c.bf16 %v1216, %v1216
        %v1218 = vld [vmem:[%s9] sm:$0xf]
        %v1219 = vld [vmem:[%s9 + $0x4] sm:$0xf]
        %v1220 = vld [vmem:[%s9 + $0x8] sm:$0xf]
        %v1221 = vld [vmem:[%s9 + $0xc] sm:$0xf]
        %v1222 = vld [vmem:[%s10] sm:$0x1]
        %v1224 = vlaneseq
        %v1225 = vshrl.u32 %v1224, 7
        %v1226 = vsub.s32 0, %v1225
        %v1227 = vrot.slane %v1222, %v1226
        %v1233 = vunpack.c.l.b16 %v1218
        %v1234 = vunpack.c.l.b16 %v1219
        %v1235 = vunpack.c.l.b16 %v1220
        %v1236 = vunpack.c.l.b16 %v1221
        %v1237 = vpack.c.b16 %v1234, %v1233
        %v1238 = vpack.c.b16 %v1236, %v1235
        %v1242 = vsel %vm564, %v1217, 0
        %1244 = vmatprep.subr.bf16.mxu0 0
        %1245 = vmatpush1.bf16.msra.mxu0 %v1237
        %1246 = vmatprep.subr.bf16.mxu0 0
        %1247 = vmatpush1.bf16.msra.mxu0 %v1238
        %1248 = vmatprep.subr.bf16.mxu0 0
        %1249 = vmatpush1.bf16.msra.mxu0 0
        %1250 = vmatprep.subr.bf16.mxu0 0
        %1251 = vmatpush1.bf16.msra.mxu0 0
        %1252 = vmatprep.subr.bf16.mxu0 0
        %1253 = vmatpush1.bf16.msra.mxu0 0
        %1254 = vmatprep.subr.bf16.mxu0 0
        %1255 = vmatpush1.bf16.msra.mxu0 0
        %1256 = vmatprep.subr.bf16.mxu0 0
        %1257 = vmatpush1.bf16.msra.mxu0 0
        %1258 = vmatprep.subr.bf16.mxu0 0
        %1259 = vmatpush1.bf16.msra.mxu0 0
        %1260 = vmatprep.subr.bf16.mxu0 0
        %1261 = vmatpush1.bf16.msra.mxu0 0
        %1262 = vmatprep.subr.bf16.mxu0 0
        %1263 = vmatpush1.bf16.msra.mxu0 0
        %1264 = vmatprep.subr.bf16.mxu0 0
        %1265 = vmatpush1.bf16.msra.mxu0 0
        %1266 = vmatprep.subr.bf16.mxu0 0
        %1267 = vmatpush1.bf16.msra.mxu0 0
        %1268 = vmatprep.subr.bf16.mxu0 0
        %1269 = vmatpush1.bf16.msra.mxu0 0
        %1270 = vmatprep.subr.bf16.mxu0 0
        %1271 = vmatpush1.bf16.msra.mxu0 0
        %1272 = vmatprep.subr.bf16.mxu0 0
        %1273 = vmatpush1.bf16.msra.mxu0 0
        %1274 = vmatprep.subr.bf16.mxu0 0
        %1275 = vmatpush1.bf16.msra.mxu0 0
        %1276 = vmatprep.mubr.bf16.mxu0 0
        %1277 = vmatmul.mubr.bf16.gmra.mrb[0].mxu0 %v1242
        %v1278 = vpop.f32.mrb[0].mxu0
        %v1279 = vadd.f32 %v1227, %v1278
        %v1280 = vpop.f32.mrb[0].mxu0
        %v1281 = vpop.f32.mrb[0].mxu0
        %v1282 = vpop.f32.mrb[0].mxu0
        %1283 = vdwg.mxu0
        %v1284 = vmul.f32 %v1279, 0.5
        %v1285 = vrcp.pop 1.4142135
        %v1286 = vmul.f32 %v1279, %v1285
        %v1287 = verf.f32.pop %v1286
        %v1288 = vadd.f32 %v1287, 1.0
        %v1289 = vmul.f32 %v1284, %v1288
        %v1290 = vpack.c.bf16 %v1289, %v1289
        %v1291 = vld [vmem:[#allocation13] sm:$0xf]
        %v1292 = vld [vmem:[#allocation13 + $0x4] sm:$0xf]
        %v1293 = vld [vmem:[#allocation13 + $0x8] sm:$0xf]
        %v1294 = vld [vmem:[#allocation13 + $0xc] sm:$0xf]
        %v1295 = vld [vmem:[%s12] sm:$0x1]
        %v1297 = vlaneseq
        %v1298 = vshrl.u32 %v1297, 7
        %v1299 = vsub.s32 0, %v1298
        %v1300 = vrot.slane %v1295, %v1299
        %v1306 = vunpack.c.l.b16 %v1291
        %v1307 = vunpack.c.l.b16 %v1292
        %v1308 = vunpack.c.l.b16 %v1293
        %v1309 = vunpack.c.l.b16 %v1294
        %v1310 = vpack.c.b16 %v1307, %v1306
        %v1311 = vpack.c.b16 %v1309, %v1308
        %v1315 = vsel %vm564, %v1290, 0
        %1317 = vmatprep.subr.bf16.mxu0 0
        %1318 = vmatpush1.bf16.msra.mxu0 %v1310
        %1319 = vmatprep.subr.bf16.mxu0 0
        %1320 = vmatpush1.bf16.msra.mxu0 %v1311
        %1321 = vmatprep.subr.bf16.mxu0 0
        %1322 = vmatpush1.bf16.msra.mxu0 0
        %1323 = vmatprep.subr.bf16.mxu0 0
        %1324 = vmatpush1.bf16.msra.mxu0 0
        %1325 = vmatprep.subr.bf16.mxu0 0
        %1326 = vmatpush1.bf16.msra.mxu0 0
        %1327 = vmatprep.subr.bf16.mxu0 0
        %1328 = vmatpush1.bf16.msra.mxu0 0
        %1329 = vmatprep.subr.bf16.mxu0 0
        %1330 = vmatpush1.bf16.msra.mxu0 0
        %1331 = vmatprep.subr.bf16.mxu0 0
        %1332 = vmatpush1.bf16.msra.mxu0 0
        %1333 = vmatprep.subr.bf16.mxu0 0
        %1334 = vmatpush1.bf16.msra.mxu0 0
        %1335 = vmatprep.subr.bf16.mxu0 0
        %1336 = vmatpush1.bf16.msra.mxu0 0
        %1337 = vmatprep.subr.bf16.mxu0 0
        %1338 = vmatpush1.bf16.msra.mxu0 0
        %1339 = vmatprep.subr.bf16.mxu0 0
        %1340 = vmatpush1.bf16.msra.mxu0 0
        %1341 = vmatprep.subr.bf16.mxu0 0
        %1342 = vmatpush1.bf16.msra.mxu0 0
        %1343 = vmatprep.subr.bf16.mxu0 0
        %1344 = vmatpush1.bf16.msra.mxu0 0
        %1345 = vmatprep.subr.bf16.mxu0 0
        %1346 = vmatpush1.bf16.msra.mxu0 0
        %1347 = vmatprep.subr.bf16.mxu0 0
        %1348 = vmatpush1.bf16.msra.mxu0 0
        %1349 = vmatprep.mubr.bf16.mxu0 0
        %1350 = vmatmul.mubr.bf16.gmra.mrb[0].mxu0 %v1315
        %v1351 = vpop.f32.mrb[0].mxu0
        %v1352 = vadd.f32 %v1300, %v1351
        %v1353 = vpop.f32.mrb[0].mxu0
        %v1354 = vpop.f32.mrb[0].mxu0
        %v1355 = vpop.f32.mrb[0].mxu0
        %1356 = vdwg.mxu0
        %v1357 = vadd.f32 %v1187, %v1352
        %1358 = vst.msk [vmem:[%s558] sm:$0xff] %vm564, %v1357
        %s1359 = sand.u32 %s326, 1
        %s1360 = scalar_lea.sflag [#allocation4], %s1359
        %s1361 = sand.u32 %s326, 1
        %s1362 = smul.addr %s1361, 8
        %s1363 = scalar_lea.vmem [#allocation14], %s1362
        // Predicated region
        $region101: #{tpu_custom_call.1} parent=71 // pred_check
          %p1364 = pneg %p336
        $region102: #{tpu_custom_call.1} parent=71 // pred_check_branch
          %1366 = sbr.rel (%p1364) target = $region104
        $region103: #{tpu_custom_call.1} parent=71 // pred_region
          %s1368 = ssub.s32 128, 128
          %1369 = vsyncadd %s1360, %s1368
          %s1370 = smul.addr %s35, 128
          %s1371 = scalar_lea.hbm %s13, %s1370
          %s1373 = sshll.u32 %s1363, 4
          %s1374 = int_to_ptr.vmem [resolvable:$true] %s1373
          %1376 = dma.vmem_to_hbm [thread:$0]  %s1374, 128, %s1371, %s1360
        $region104: #{tpu_custom_call.1} parent=71 // pred_fallthru
          _
      $region72: #{tpu_custom_call.1} parent=5 // pred_fallthru
        _
      %p1377 = scmp.le.s32.totalorder 2, %s30
      // Predicated region
      $region105: #{tpu_custom_call.1} parent=5 // pred_check
        %p1378 = pneg %p1377
      $region106: #{tpu_custom_call.1} parent=5 // pred_check_branch
        %1380 = sbr.rel (%p1378) target = $region108
      $region107: #{tpu_custom_call.1} parent=5 // pred_region
        %s1381 = ssub.s32 %s30, 2
        // Predicated region
        $region109: #{tpu_custom_call.1} parent=107 // pred_check
          %p1382 = pneg %p342
        $region110: #{tpu_custom_call.1} parent=107 // pred_check_branch
          %1384 = sbr.rel (%p1382) target = $region112
        $region111: #{tpu_custom_call.1} parent=107 // pred_region
          %s1385 = sand.u32 %s327, 1
          %s1386 = scalar_lea.sflag [#allocation4], %s1385
          %s1387 = sand.u32 %s327, 1
          %s1388 = smul.addr %s1387, 8
          %s1389 = scalar_lea.vmem [#allocation14], %s1388
          %1390 = dma.done %s1386, 128
        $region112: #{tpu_custom_call.1} parent=107 // pred_fallthru
          _
      $region108: #{tpu_custom_call.1} parent=5 // pred_fallthru
        _
    $region6: #{tpu_custom_call.1} parent=1 // loop_footer
      %s34 = sadd.s32 1, %s30
    $region7: #{tpu_custom_call.1} parent=1 // loop_footer_branch
      %29 = sbr.rel target = $region3
    $region8: #{tpu_custom_call.1} parent=1 // loop_exit
      _
    %1391 = vsyncpa [#allocation3], 1
    %s1392 = scalar_lea.sflag [#allocation3], 1
    %1393 = vsyncpa %s1392, 1
    %1394 = vsyncpa [#allocation6], 1
    %s1395 = scalar_lea.sflag [#allocation6], 1
    %1396 = vsyncpa %s1395, 1
    %1397 = vsyncpa [#allocation9], 1
    %1398 = vsyncpa [#allocation12], 1
    %1399 = vsyncpa [#allocation4], 1
    %s1400 = scalar_lea.sflag [#allocation4], 1
    %1401 = vsyncpa %s1400, 1

</llo_original>
